<compile_context>
chip_gen: v7x
topology: tpu7x:2x2x1
jax: 0.10.0
libtpu: 0.0.40
codegen_flags: <defaults>
</compile_context>

<pallas_src>
import jax
import jax.numpy as jnp
from jax.experimental import pallas as pl
from jax.experimental.pallas import tpu as pltpu

IN_CH = 1
FEAT = 16
NUM_BLOCKS = 6
EPS = 1e-5


# ----------------------------------------------------------------------------
# fused kernel: init conv -> 6 x (conv + InstanceNorm + PReLU) -> head + tanh
# ----------------------------------------------------------------------------
def _make_fused_kernel(H, W, cin, feat, cout, n_blocks):
    HW = H * W

    def lane_roll(t, shift):
        # jnp.roll semantics on the flat spatial (lane) axis; normalize the
        # shift so it is always a non-negative static int.
        return pltpu.roll(t, shift % HW, axis=1)

    def kernel(x_ref, w0_ref, b0_ref, wb_ref, g_ref, be_ref,
               wh_ref, bh_ref, alpha_ref, o_ref):
        # ---- lane-position masks for reflect edge fix-ups (built once) ------
        p = jax.lax.broadcasted_iota(jnp.int32, (1, HW), 1)
        col = p % W
        col_first = col == 0
        col_last = col == (W - 1)
        row_first = p < W
        row_last = p >= (H - 1) * W

        def taps9(t):
            # t: (C, HW).  Returns the 9 reflect-padded 3x3 tap images; tap
            # index ki*3+kj corresponds to spatial offset (ki-1, kj-1).
            # Built from XLU lane rolls + VPU selects (no padded-tensor copy).
            r_mW = lane_roll(t, -W)                      # out[p] = t[p + W]
            r_pW = lane_roll(t, +W)                      # out[p] = t[p - W]
            y_m = jnp.where(row_first, r_mW, r_pW)       # row y-1 (reflect y=0)
            y_p = jnp.where(row_last, r_pW, r_mW)        # row y+1 (reflect y=H-1)
            taps = []
            for r in (y_m, t, y_p):
                r_m1 = lane_roll(r, -1)
                r_p1 = lane_roll(r, +1)
                x_m = jnp.where(col_first, r_m1, r_p1)   # col x-1
                x_p = jnp.where(col_last, r_p1, r_m1)    # col x+1
                taps += [x_m, r, x_p]
            return taps

        def conv3x3(t, w_st):
            # t: (C_in=feat, HW), w_st: (C_out, 9*C_in) -> (C_out, HW) f32.
            # Taps stacked along K (clean sublane concat of (feat, HW) slabs):
            # one K=9*feat GEMM with a lane-dense MXU result.
            col_mat = jnp.concatenate(taps9(t), axis=0)  # (9*C_in, HW)
            return jnp.dot(w_st, col_mat, preferred_element_type=jnp.float32)

        x = x_ref[...]                                   # (cin, HW)

        # ---- initialization: conv(cin->feat) + bias + PReLU ------------------
        x_taps = taps9(x)
        if cin == 1:
            w0 = w0_ref[...]                             # (feat, 9)
            h = w0[:, 0:1] * x_taps[0]                   # (feat,1)*(1,HW) bcast
            for k in range(1, 9):
                h = h + w0[:, k:k + 1] * x_taps[k]
        else:
            col_mat = jnp.concatenate(x_taps, axis=0)    # (9*cin, HW)
            h = jnp.dot(w0_ref[...], col_mat, preferred_element_type=jnp.float32)
        h = h + b0_ref[...]                              # (feat, 1) bcast
        a0 = alpha_ref[0, 0]
        h = jnp.where(h >= 0, h, a0 * h)

        # ---- 6 x [conv (no bias) + InstanceNorm2d(affine) + PReLU] -----------
        for i in range(n_blocks):                        # statically unrolled
            c = conv3x3(h, wb_ref[i])                    # (feat, HW)
            # single-pass per-image, per-channel stats over the HW lane axis
            mean = jnp.mean(c, axis=1, keepdims=True)    # (feat, 1)
            msq = jnp.mean(c * c, axis=1, keepdims=True) # (feat, 1)
            var = msq - mean * mean                      # biased variance
            scale = g_ref[i] * jax.lax.rsqrt(var + EPS)  # (feat, 1)
            shift = be_ref[i] - mean * scale
            y = c * scale + shift                        # one FMA per element
            a_i = alpha_ref[0, 1 + i]
            h = jnp.where(y >= 0, y, a_i * y)

        # ---- head: conv(feat->cout) + bias + residual(x) + tanh --------------
        head = conv3x3(h, wh_ref[...]) + bh_ref[...] + x
        o_ref[...] = jnp.tanh(head)                      # (cout, HW), lane-dense

    return kernel


# ----------------------------------------------------------------------------
# wrapper: NCHW in / NCHW out, single pallas_call
# ----------------------------------------------------------------------------
def dncnn_forward_pallas(x_nchw, p):
    N, cin, H, W = x_nchw.shape
    feat = p["w0"].shape[-1]
    cout = p["wh"].shape[-1]
    HW = H * W

    # NCHW -> (N, cin, H*W): flat spatial on the lane axis, no transpose needed.
    x_flat = x_nchw.reshape(N, cin, HW).astype(jnp.float32)

    # Stack taps along K: W_st[o, t*cin + c] = w[ki, kj, c, o], t = ki*3 + kj.
    w0 = jnp.transpose(p["w0"].reshape(9, cin, feat), (2, 0, 1)) \
            .reshape(feat, 9 * cin).astype(jnp.float32)
    wb = jnp.transpose(p["wb"].reshape(NUM_BLOCKS, 9, feat, feat), (0, 3, 1, 2)) \
            .reshape(NUM_BLOCKS, feat, 9 * feat).astype(jnp.float32)
    wh = jnp.transpose(p["wh"].reshape(9, feat, cout), (2, 0, 1)) \
            .reshape(cout, 9 * feat).astype(jnp.float32)
    b0 = p["b0"].reshape(feat, 1).astype(jnp.float32)
    bh = p["bh"].reshape(cout, 1).astype(jnp.float32)
    gam = p["g"].reshape(NUM_BLOCKS, feat, 1).astype(jnp.float32)
    bet = p["be"].reshape(NUM_BLOCKS, feat, 1).astype(jnp.float32)
    alphas = jnp.concatenate(
        [jnp.reshape(p["a0"], (1,)), jnp.reshape(p["ab"], (NUM_BLOCKS,))]
    ).astype(jnp.float32).reshape(1, 1 + NUM_BLOCKS)          # (1, 7) in SMEM

    kernel = _make_fused_kernel(H, W, cin, feat, cout, NUM_BLOCKS)

    flops = 2 * N * HW * 9 * (cin * feat + NUM_BLOCKS * feat * feat + feat * cout)
    trans = N * (HW * cout + NUM_BLOCKS * feat)               # tanh + rsqrt
    bytes_acc = 4 * (int(x_flat.size) + N * cout * HW
                     + int(w0.size) + int(wb.size) + int(wh.size)
                     + int(b0.size) + int(bh.size) + int(gam.size) + int(bet.size))
    cost = pl.CostEstimate(flops=int(flops), transcendentals=int(trans),
                           bytes_accessed=int(bytes_acc))

    grid_spec = pltpu.PrefetchScalarGridSpec(
        num_scalar_prefetch=0,
        grid=(N,),
        in_specs=[
            pl.BlockSpec((None, cin, HW), lambda n: (n, 0, 0)),                 # x
            pl.BlockSpec((feat, 9 * cin), lambda n: (0, 0)),                    # w0
            pl.BlockSpec((feat, 1), lambda n: (0, 0)),                          # b0
            pl.BlockSpec((NUM_BLOCKS, feat, 9 * feat), lambda n: (0, 0, 0)),    # wb
            pl.BlockSpec((NUM_BLOCKS, feat, 1), lambda n: (0, 0, 0)),           # gamma
            pl.BlockSpec((NUM_BLOCKS, feat, 1), lambda n: (0, 0, 0)),           # beta
            pl.BlockSpec((cout, 9 * feat), lambda n: (0, 0)),                   # wh
            pl.BlockSpec((cout, 1), lambda n: (0, 0)),                          # bh
            pl.BlockSpec(memory_space=pltpu.MemorySpace.SMEM),                  # alphas
        ],
        out_specs=pl.BlockSpec((None, cout, HW), lambda n: (n, 0, 0)),
    )

    out = pl.pallas_call(
        kernel,
        out_shape=jax.ShapeDtypeStruct((N, cout, HW), jnp.float32),
        grid_spec=grid_spec,
        compiler_params=pltpu.CompilerParams(
            dimension_semantics=("parallel",)),
        cost_estimate=cost,
    )(x_flat, w0, b0, wb, gam, bet, wh, bh, alphas)

    # (N, cout, HW) is already NCHW-flattened: plain reshape, no transpose.
    return out.reshape(N, cout, H, W)


# ----------------------------------------------------------------------------
# pure-JAX reference
# ----------------------------------------------------------------------------
def _reflect_pad_jax(x_nhwc):
    return jnp.pad(x_nhwc, ((0, 0), (1, 1), (1, 1), (0, 0)), mode="reflect")


def _conv3x3_ref(x, w):
    N, H, W, _ = x.shape
    xp = _reflect_pad_jax(x)
    out = jnp.zeros((N, H, W, w.shape[-1]), jnp.float32)
    for dy in range(3):
        for dx in range(3):
            out = out + jnp.einsum(
                "nhwc,co->nhwo", xp[:, dy:dy + H, dx:dx + W, :], w[dy, dx],
                precision=jax.lax.Precision.HIGHEST)
    return out


def _prelu(x, a):
    return jnp.where(x >= 0, x, a * x)


def dncnn_forward_ref(x_nchw, p):
    x = jnp.transpose(x_nchw, (0, 2, 3, 1)).astype(jnp.float32)
    out = _prelu(_conv3x3_ref(x, p["w0"]) + p["b0"][None, None, None, :], p["a0"])
    for i in range(NUM_BLOCKS):
        c = _conv3x3_ref(out, p["wb"][i])
        mean = jnp.mean(c, axis=(1, 2), keepdims=True)
        var = jnp.mean((c - mean) ** 2, axis=(1, 2), keepdims=True)
        c = (c - mean) * jax.lax.rsqrt(var + EPS)
        c = c * p["g"][i][None, None, None, :] + p["be"][i][None, None, None, :]
        out = _prelu(c, p["ab"][i])
    head = _conv3x3_ref(out, p["wh"]) + p["bh"][None, None, None, :] + x
    return jnp.transpose(jnp.tanh(head), (0, 3, 1, 2))


def make_params(key):
    ks = jax.random.split(key, 8)
    p = {}
    # conv weights stored as (kH, kW, Cin, Cout)
    p["w0"] = jax.random.normal(ks[0], (3, 3, IN_CH, FEAT), jnp.float32) / (9 * IN_CH) ** 0.5
    p["b0"] = 0.1 * jax.random.normal(ks[1], (FEAT,), jnp.float32)
    p["a0"] = jnp.float32(0.25)
    p["wb"] = jax.random.normal(ks[2], (NUM_BLOCKS, 3, 3, FEAT, FEAT), jnp.float32) / (9 * FEAT) ** 0.5
    p["g"] = 1.0 + 0.1 * jax.random.normal(ks[3], (NUM_BLOCKS, FEAT), jnp.float32)
    p["be"] = 0.1 * jax.random.normal(ks[4], (NUM_BLOCKS, FEAT), jnp.float32)
    p["ab"] = jnp.full((NUM_BLOCKS,), 0.25, jnp.float32)
    p["wh"] = jax.random.normal(ks[5], (3, 3, FEAT, IN_CH), jnp.float32) / (9 * FEAT) ** 0.5
    p["bh"] = 0.1 * jax.random.normal(ks[6], (IN_CH,), jnp.float32)
    return p


if __name__ == "__main__":
    key = jax.random.PRNGKey(0)
    pkey, xkey = jax.random.split(key)
    params = make_params(pkey)

    # small input consistent with DnCNN_v0(in_channels=1): NCHW (2, 1, 16, 16)
    x = jax.random.normal(xkey, (2, IN_CH, 16, 16), jnp.float32)

    out = jax.block_until_ready(dncnn_forward_pallas(x, params))
    ref = jax.block_until_ready(dncnn_forward_ref(x, params))

    assert out.shape == x.shape and out.dtype == jnp.float32
    assert bool(jnp.all(jnp.isfinite(out))), "non-finite output"
    max_diff = float(jnp.max(jnp.abs(out - ref)))
    assert max_diff < 5e-2, f"mismatch vs reference: {max_diff}"
    print("KERNEL_OK")
</pallas_src>

<mosaic_0001>
module attributes {stable_mosaic.version = 11 : i64} {
  func.func @kernel(%arg0: i32, %arg1: memref<1x1x256xf32, #tpu.memory_space<vmem>>, %arg2: memref<16x9xf32, #tpu.memory_space<vmem>>, %arg3: memref<16x1xf32, #tpu.memory_space<vmem>>, %arg4: memref<6x16x144xf32, #tpu.memory_space<vmem>>, %arg5: memref<6x16x1xf32, #tpu.memory_space<vmem>>, %arg6: memref<6x16x1xf32, #tpu.memory_space<vmem>>, %arg7: memref<1x144xf32, #tpu.memory_space<vmem>>, %arg8: memref<1x1xf32, #tpu.memory_space<vmem>>, %arg9: memref<1x7xf32, #tpu.memory_space<smem>>, %arg10: memref<1x1x256xf32, #tpu.memory_space<vmem>>) attributes {dimension_semantics = [#tpu.dimension_semantics<parallel>], iteration_bounds = array<i64: 2>, scalar_prefetch = 0 : i64, scratch_operands = 0 : i64, tpu.core_type = #tpu.core_type<tc>, window_params = [{transform_indices = @transform_0, window_bounds = array<i64: 1, 1, 256>}, {pipeline_mode = #tpu.pipeline_mode<synchronous>, transform_indices = @transform_1, window_bounds = array<i64: 16, 9>}, {pipeline_mode = #tpu.pipeline_mode<synchronous>, transform_indices = @transform_2, window_bounds = array<i64: 16, 1>}, {pipeline_mode = #tpu.pipeline_mode<synchronous>, transform_indices = @transform_3, window_bounds = array<i64: 6, 16, 144>}, {pipeline_mode = #tpu.pipeline_mode<synchronous>, transform_indices = @transform_4, window_bounds = array<i64: 6, 16, 1>}, {pipeline_mode = #tpu.pipeline_mode<synchronous>, transform_indices = @transform_5, window_bounds = array<i64: 6, 16, 1>}, {pipeline_mode = #tpu.pipeline_mode<synchronous>, transform_indices = @transform_6, window_bounds = array<i64: 1, 144>}, {pipeline_mode = #tpu.pipeline_mode<synchronous>, transform_indices = @transform_7, window_bounds = array<i64: 1, 1>}, {transform_indices = @transform_8, window_bounds = array<i64: 1, 7>}, {transform_indices = @transform_9, window_bounds = array<i64: 1, 1, 256>}]} {
    %0 = tpu.iota {dimensions = array<i32: 1>} : vector<1x256xi32>
    %c16_i32 = arith.constant 16 : i32
    %c0_i32 = arith.constant 0 : i32
    %1 = arith.cmpi eq, %c16_i32, %c0_i32 : i32
    %c1_i32 = arith.constant 1 : i32
    %2 = arith.select %1, %c1_i32, %c16_i32 : i32
    %3 = vector.broadcast %2 : i32 to vector<1x256xi32>
    %4 = arith.remsi %0, %3 : vector<1x256xi32>
    %c0_i32_0 = arith.constant 0 : i32
    %5 = vector.broadcast %c0_i32_0 : i32 to vector<1x256xi32>
    %6 = arith.cmpi ne, %4, %5 : vector<1x256xi32>
    %c0_i32_1 = arith.constant 0 : i32
    %7 = vector.broadcast %c0_i32_1 : i32 to vector<1x256xi32>
    %8 = arith.cmpi slt, %4, %7 : vector<1x256xi32>
    %c0_i32_2 = arith.constant 0 : i32
    %9 = arith.cmpi slt, %2, %c0_i32_2 : i32
    %10 = vector.broadcast %9 : i1 to vector<1x256xi1>
    %11 = vector.broadcast %10 : vector<1x256xi1> to vector<1x256xi1>
    %12 = arith.xori %8, %11 : vector<1x256xi1>
    %13 = arith.andi %12, %6 : vector<1x256xi1>
    %14 = vector.broadcast %2 : i32 to vector<1x256xi32>
    %15 = arith.addi %4, %14 : vector<1x256xi32>
    %16 = arith.select %13, %15, %4 : vector<1x256xi1>, vector<1x256xi32>
    %c0_i32_3 = arith.constant 0 : i32
    %17 = vector.broadcast %c0_i32_3 : i32 to vector<1x256xi32>
    %18 = arith.cmpi eq, %16, %17 : vector<1x256xi32>
    %c15_i32 = arith.constant 15 : i32
    %19 = vector.broadcast %c15_i32 : i32 to vector<1x256xi32>
    %20 = arith.cmpi eq, %16, %19 : vector<1x256xi32>
    %c16_i32_4 = arith.constant 16 : i32
    %21 = vector.broadcast %c16_i32_4 : i32 to vector<1x256xi32>
    %22 = arith.cmpi slt, %0, %21 : vector<1x256xi32>
    %c240_i32 = arith.constant 240 : i32
    %23 = vector.broadcast %c240_i32 : i32 to vector<1x256xi32>
    %24 = arith.cmpi sge, %0, %23 : vector<1x256xi32>
    %c0 = arith.constant 0 : index
    %c0_5 = arith.constant 0 : index
    %c0_6 = arith.constant 0 : index
    %25 = vector.load %arg1[%c0, %c0_5, %c0_6] : memref<1x1x256xf32, #tpu.memory_space<vmem>>, vector<1x1x256xf32>
    %26 = vector.shape_cast %25 : vector<1x1x256xf32> to vector<1x256xf32>
    %c240_i32_7 = arith.constant 240 : i32
    %27 = tpu.dynamic_rotate %26 by %c240_i32_7 dim 1 : vector<1x256xf32>, i32 -> vector<1x256xf32>
    %c16_i32_8 = arith.constant 16 : i32
    %28 = tpu.dynamic_rotate %26 by %c16_i32_8 dim 1 : vector<1x256xf32>, i32 -> vector<1x256xf32>
    %29 = arith.select %22, %27, %28 : vector<1x256xi1>, vector<1x256xf32>
    %30 = arith.select %24, %28, %27 : vector<1x256xi1>, vector<1x256xf32>
    %c255_i32 = arith.constant 255 : i32
    %31 = tpu.dynamic_rotate %29 by %c255_i32 dim 1 : vector<1x256xf32>, i32 -> vector<1x256xf32>
    %c1_i32_9 = arith.constant 1 : i32
    %32 = tpu.dynamic_rotate %29 by %c1_i32_9 dim 1 : vector<1x256xf32>, i32 -> vector<1x256xf32>
    %33 = arith.select %18, %31, %32 : vector<1x256xi1>, vector<1x256xf32>
    %34 = arith.select %20, %32, %31 : vector<1x256xi1>, vector<1x256xf32>
    %c255_i32_10 = arith.constant 255 : i32
    %35 = tpu.dynamic_rotate %26 by %c255_i32_10 dim 1 : vector<1x256xf32>, i32 -> vector<1x256xf32>
    %c1_i32_11 = arith.constant 1 : i32
    %36 = tpu.dynamic_rotate %26 by %c1_i32_11 dim 1 : vector<1x256xf32>, i32 -> vector<1x256xf32>
    %37 = arith.select %18, %35, %36 : vector<1x256xi1>, vector<1x256xf32>
    %38 = arith.select %20, %36, %35 : vector<1x256xi1>, vector<1x256xf32>
    %c255_i32_12 = arith.constant 255 : i32
    %39 = tpu.dynamic_rotate %30 by %c255_i32_12 dim 1 : vector<1x256xf32>, i32 -> vector<1x256xf32>
    %c1_i32_13 = arith.constant 1 : i32
    %40 = tpu.dynamic_rotate %30 by %c1_i32_13 dim 1 : vector<1x256xf32>, i32 -> vector<1x256xf32>
    %41 = arith.select %18, %39, %40 : vector<1x256xi1>, vector<1x256xf32>
    %42 = arith.select %20, %40, %39 : vector<1x256xi1>, vector<1x256xf32>
    %c0_14 = arith.constant 0 : index
    %c0_15 = arith.constant 0 : index
    %43 = vector.load %arg2[%c0_14, %c0_15] : memref<16x9xf32, #tpu.memory_space<vmem>>, vector<16x9xf32>
    %44 = vector.extract_strided_slice %43 {offsets = [0, 0], sizes = [16, 1], strides = [1, 1]} : vector<16x9xf32> to vector<16x1xf32>
    %45 = vector.broadcast %44 : vector<16x1xf32> to vector<16x256xf32>
    %46 = vector.broadcast %33 : vector<1x256xf32> to vector<16x256xf32>
    %47 = arith.mulf %45, %46 : vector<16x256xf32>
    %48 = vector.extract_strided_slice %43 {offsets = [0, 1], sizes = [16, 1], strides = [1, 1]} : vector<16x9xf32> to vector<16x1xf32>
    %49 = vector.broadcast %48 : vector<16x1xf32> to vector<16x256xf32>
    %50 = vector.broadcast %29 : vector<1x256xf32> to vector<16x256xf32>
    %51 = arith.mulf %49, %50 : vector<16x256xf32>
    %52 = arith.addf %47, %51 : vector<16x256xf32>
    %53 = vector.extract_strided_slice %43 {offsets = [0, 2], sizes = [16, 1], strides = [1, 1]} : vector<16x9xf32> to vector<16x1xf32>
    %54 = vector.broadcast %53 : vector<16x1xf32> to vector<16x256xf32>
    %55 = vector.broadcast %34 : vector<1x256xf32> to vector<16x256xf32>
    %56 = arith.mulf %54, %55 : vector<16x256xf32>
    %57 = arith.addf %52, %56 : vector<16x256xf32>
    %58 = vector.extract_strided_slice %43 {offsets = [0, 3], sizes = [16, 1], strides = [1, 1]} : vector<16x9xf32> to vector<16x1xf32>
    %59 = vector.broadcast %58 : vector<16x1xf32> to vector<16x256xf32>
    %60 = vector.broadcast %37 : vector<1x256xf32> to vector<16x256xf32>
    %61 = arith.mulf %59, %60 : vector<16x256xf32>
    %62 = arith.addf %57, %61 : vector<16x256xf32>
    %63 = vector.extract_strided_slice %43 {offsets = [0, 4], sizes = [16, 1], strides = [1, 1]} : vector<16x9xf32> to vector<16x1xf32>
    %64 = vector.broadcast %63 : vector<16x1xf32> to vector<16x256xf32>
    %65 = vector.broadcast %26 : vector<1x256xf32> to vector<16x256xf32>
    %66 = arith.mulf %64, %65 : vector<16x256xf32>
    %67 = arith.addf %62, %66 : vector<16x256xf32>
    %68 = vector.extract_strided_slice %43 {offsets = [0, 5], sizes = [16, 1], strides = [1, 1]} : vector<16x9xf32> to vector<16x1xf32>
    %69 = vector.broadcast %68 : vector<16x1xf32> to vector<16x256xf32>
    %70 = vector.broadcast %38 : vector<1x256xf32> to vector<16x256xf32>
    %71 = arith.mulf %69, %70 : vector<16x256xf32>
    %72 = arith.addf %67, %71 : vector<16x256xf32>
    %73 = vector.extract_strided_slice %43 {offsets = [0, 6], sizes = [16, 1], strides = [1, 1]} : vector<16x9xf32> to vector<16x1xf32>
    %74 = vector.broadcast %73 : vector<16x1xf32> to vector<16x256xf32>
    %75 = vector.broadcast %41 : vector<1x256xf32> to vector<16x256xf32>
    %76 = arith.mulf %74, %75 : vector<16x256xf32>
    %77 = arith.addf %72, %76 : vector<16x256xf32>
    %78 = vector.extract_strided_slice %43 {offsets = [0, 7], sizes = [16, 1], strides = [1, 1]} : vector<16x9xf32> to vector<16x1xf32>
    %79 = vector.broadcast %78 : vector<16x1xf32> to vector<16x256xf32>
    %80 = vector.broadcast %30 : vector<1x256xf32> to vector<16x256xf32>
    %81 = arith.mulf %79, %80 : vector<16x256xf32>
    %82 = arith.addf %77, %81 : vector<16x256xf32>
    %83 = vector.extract_strided_slice %43 {offsets = [0, 8], sizes = [16, 1], strides = [1, 1]} : vector<16x9xf32> to vector<16x1xf32>
    %84 = vector.broadcast %83 : vector<16x1xf32> to vector<16x256xf32>
    %85 = vector.broadcast %42 : vector<1x256xf32> to vector<16x256xf32>
    %86 = arith.mulf %84, %85 : vector<16x256xf32>
    %87 = arith.addf %82, %86 : vector<16x256xf32>
    %c0_16 = arith.constant 0 : index
    %c0_17 = arith.constant 0 : index
    %88 = vector.load %arg3[%c0_16, %c0_17] : memref<16x1xf32, #tpu.memory_space<vmem>>, vector<16x1xf32>
    %89 = vector.broadcast %88 : vector<16x1xf32> to vector<16x256xf32>
    %90 = arith.addf %87, %89 : vector<16x256xf32>
    %c0_18 = arith.constant 0 : index
    %c0_19 = arith.constant 0 : index
    %91 = memref.load %arg9[%c0_18, %c0_19] : memref<1x7xf32, #tpu.memory_space<smem>>
    %cst = arith.constant 0.000000e+00 : f32
    %92 = vector.broadcast %cst : f32 to vector<16x256xf32>
    %93 = arith.cmpf oge, %90, %92 : vector<16x256xf32>
    %94 = vector.broadcast %91 : f32 to vector<16x256xf32>
    %95 = arith.mulf %94, %90 : vector<16x256xf32>
    %96 = arith.select %93, %90, %95 : vector<16x256xi1>, vector<16x256xf32>
    %c0_20 = arith.constant 0 : index
    %c0_21 = arith.constant 0 : index
    %c0_22 = arith.constant 0 : index
    %97 = vector.load %arg4[%c0_20, %c0_21, %c0_22] : memref<6x16x144xf32, #tpu.memory_space<vmem>>, vector<1x16x144xf32>
    %98 = vector.shape_cast %97 : vector<1x16x144xf32> to vector<16x144xf32>
    %c240_i32_23 = arith.constant 240 : i32
    %99 = tpu.dynamic_rotate %96 by %c240_i32_23 dim 1 : vector<16x256xf32>, i32 -> vector<16x256xf32>
    %c16_i32_24 = arith.constant 16 : i32
    %100 = tpu.dynamic_rotate %96 by %c16_i32_24 dim 1 : vector<16x256xf32>, i32 -> vector<16x256xf32>
    %101 = vector.shape_cast %22 : vector<1x256xi1> to vector<1x256xi1>
    %102 = vector.broadcast %101 : vector<1x256xi1> to vector<16x256xi1>
    %103 = arith.select %102, %99, %100 : vector<16x256xi1>, vector<16x256xf32>
    %104 = vector.shape_cast %24 : vector<1x256xi1> to vector<1x256xi1>
    %105 = vector.broadcast %104 : vector<1x256xi1> to vector<16x256xi1>
    %106 = arith.select %105, %100, %99 : vector<16x256xi1>, vector<16x256xf32>
    %c255_i32_25 = arith.constant 255 : i32
    %107 = tpu.dynamic_rotate %103 by %c255_i32_25 dim 1 : vector<16x256xf32>, i32 -> vector<16x256xf32>
    %c1_i32_26 = arith.constant 1 : i32
    %108 = tpu.dynamic_rotate %103 by %c1_i32_26 dim 1 : vector<16x256xf32>, i32 -> vector<16x256xf32>
    %109 = vector.shape_cast %18 : vector<1x256xi1> to vector<1x256xi1>
    %110 = vector.broadcast %109 : vector<1x256xi1> to vector<16x256xi1>
    %111 = arith.select %110, %107, %108 : vector<16x256xi1>, vector<16x256xf32>
    %112 = vector.shape_cast %20 : vector<1x256xi1> to vector<1x256xi1>
    %113 = vector.broadcast %112 : vector<1x256xi1> to vector<16x256xi1>
    %114 = arith.select %113, %108, %107 : vector<16x256xi1>, vector<16x256xf32>
    %c255_i32_27 = arith.constant 255 : i32
    %115 = tpu.dynamic_rotate %96 by %c255_i32_27 dim 1 : vector<16x256xf32>, i32 -> vector<16x256xf32>
    %c1_i32_28 = arith.constant 1 : i32
    %116 = tpu.dynamic_rotate %96 by %c1_i32_28 dim 1 : vector<16x256xf32>, i32 -> vector<16x256xf32>
    %117 = vector.shape_cast %18 : vector<1x256xi1> to vector<1x256xi1>
    %118 = vector.broadcast %117 : vector<1x256xi1> to vector<16x256xi1>
    %119 = arith.select %118, %115, %116 : vector<16x256xi1>, vector<16x256xf32>
    %120 = vector.shape_cast %20 : vector<1x256xi1> to vector<1x256xi1>
    %121 = vector.broadcast %120 : vector<1x256xi1> to vector<16x256xi1>
    %122 = arith.select %121, %116, %115 : vector<16x256xi1>, vector<16x256xf32>
    %c255_i32_29 = arith.constant 255 : i32
    %123 = tpu.dynamic_rotate %106 by %c255_i32_29 dim 1 : vector<16x256xf32>, i32 -> vector<16x256xf32>
    %c1_i32_30 = arith.constant 1 : i32
    %124 = tpu.dynamic_rotate %106 by %c1_i32_30 dim 1 : vector<16x256xf32>, i32 -> vector<16x256xf32>
    %125 = vector.shape_cast %18 : vector<1x256xi1> to vector<1x256xi1>
    %126 = vector.broadcast %125 : vector<1x256xi1> to vector<16x256xi1>
    %127 = arith.select %126, %123, %124 : vector<16x256xi1>, vector<16x256xf32>
    %128 = vector.shape_cast %20 : vector<1x256xi1> to vector<1x256xi1>
    %129 = vector.broadcast %128 : vector<1x256xi1> to vector<16x256xi1>
    %130 = arith.select %129, %124, %123 : vector<16x256xi1>, vector<16x256xf32>
    %131 = tpu.concatenate %111, %103, %114, %119, %96, %122, %127, %106, %130 in 0 : vector<16x256xf32>, vector<16x256xf32>, vector<16x256xf32>, vector<16x256xf32>, vector<16x256xf32>, vector<16x256xf32>, vector<16x256xf32>, vector<16x256xf32>, vector<16x256xf32> -> vector<144x256xf32>
    %cst_31 = arith.constant dense<0.000000e+00> : vector<16x256xf32>
    %132 = tpu.matmul %98, %131, %cst_31 {dimension_numbers = #tpu.dot_dimension_numbers<[1], [0], [0], [1], [0, 0, 1, 1], [], []>} : vector<16x144xf32>, vector<144x256xf32>, vector<16x256xf32> -> vector<16x256xf32>
    %cst_32 = arith.constant dense<0.000000e+00> : vector<16xf32>
    %133 = vector.multi_reduction <add>, %132, %cst_32 [1] : vector<16x256xf32> to vector<16xf32>
    %134 = vector.shape_cast %133 : vector<16xf32> to vector<16x1xf32>
    %cst_33 = arith.constant 2.560000e+02 : f32
    %135 = vector.broadcast %cst_33 : f32 to vector<16x1xf32>
    %136 = arith.divf %134, %135 : vector<16x1xf32>
    %137 = arith.mulf %132, %132 : vector<16x256xf32>
    %cst_34 = arith.constant dense<0.000000e+00> : vector<16xf32>
    %138 = vector.multi_reduction <add>, %137, %cst_34 [1] : vector<16x256xf32> to vector<16xf32>
    %139 = vector.shape_cast %138 : vector<16xf32> to vector<16x1xf32>
    %cst_35 = arith.constant 2.560000e+02 : f32
    %140 = vector.broadcast %cst_35 : f32 to vector<16x1xf32>
    %141 = arith.divf %139, %140 : vector<16x1xf32>
    %142 = arith.mulf %136, %136 : vector<16x1xf32>
    %143 = arith.subf %141, %142 : vector<16x1xf32>
    %c0_36 = arith.constant 0 : index
    %c0_37 = arith.constant 0 : index
    %c0_38 = arith.constant 0 : index
    %144 = vector.load %arg5[%c0_36, %c0_37, %c0_38] : memref<6x16x1xf32, #tpu.memory_space<vmem>>, vector<1x16x1xf32>
    %145 = vector.shape_cast %144 : vector<1x16x1xf32> to vector<16x1xf32>
    %cst_39 = arith.constant 9.99999974E-6 : f32
    %146 = vector.broadcast %cst_39 : f32 to vector<16x1xf32>
    %147 = arith.addf %143, %146 : vector<16x1xf32>
    %148 = math.rsqrt %147 : vector<16x1xf32>
    %149 = arith.mulf %145, %148 : vector<16x1xf32>
    %c0_40 = arith.constant 0 : index
    %c0_41 = arith.constant 0 : index
    %c0_42 = arith.constant 0 : index
    %150 = vector.load %arg6[%c0_40, %c0_41, %c0_42] : memref<6x16x1xf32, #tpu.memory_space<vmem>>, vector<1x16x1xf32>
    %151 = vector.shape_cast %150 : vector<1x16x1xf32> to vector<16x1xf32>
    %152 = arith.mulf %136, %149 : vector<16x1xf32>
    %153 = arith.subf %151, %152 : vector<16x1xf32>
    %154 = vector.broadcast %149 : vector<16x1xf32> to vector<16x256xf32>
    %155 = arith.mulf %132, %154 : vector<16x256xf32>
    %156 = vector.broadcast %153 : vector<16x1xf32> to vector<16x256xf32>
    %157 = arith.addf %155, %156 : vector<16x256xf32>
    %c0_43 = arith.constant 0 : index
    %c1 = arith.constant 1 : index
    %158 = memref.load %arg9[%c0_43, %c1] : memref<1x7xf32, #tpu.memory_space<smem>>
    %cst_44 = arith.constant 0.000000e+00 : f32
    %159 = vector.broadcast %cst_44 : f32 to vector<16x256xf32>
    %160 = arith.cmpf oge, %157, %159 : vector<16x256xf32>
    %161 = vector.broadcast %158 : f32 to vector<16x256xf32>
    %162 = arith.mulf %161, %157 : vector<16x256xf32>
    %163 = arith.select %160, %157, %162 : vector<16x256xi1>, vector<16x256xf32>
    %c1_45 = arith.constant 1 : index
    %c0_46 = arith.constant 0 : index
    %c0_47 = arith.constant 0 : index
    %164 = vector.load %arg4[%c1_45, %c0_46, %c0_47] : memref<6x16x144xf32, #tpu.memory_space<vmem>>, vector<1x16x144xf32>
    %165 = vector.shape_cast %164 : vector<1x16x144xf32> to vector<16x144xf32>
    %c240_i32_48 = arith.constant 240 : i32
    %166 = tpu.dynamic_rotate %163 by %c240_i32_48 dim 1 : vector<16x256xf32>, i32 -> vector<16x256xf32>
    %c16_i32_49 = arith.constant 16 : i32
    %167 = tpu.dynamic_rotate %163 by %c16_i32_49 dim 1 : vector<16x256xf32>, i32 -> vector<16x256xf32>
    %168 = vector.shape_cast %22 : vector<1x256xi1> to vector<1x256xi1>
    %169 = vector.broadcast %168 : vector<1x256xi1> to vector<16x256xi1>
    %170 = arith.select %169, %166, %167 : vector<16x256xi1>, vector<16x256xf32>
    %171 = vector.shape_cast %24 : vector<1x256xi1> to vector<1x256xi1>
    %172 = vector.broadcast %171 : vector<1x256xi1> to vector<16x256xi1>
    %173 = arith.select %172, %167, %166 : vector<16x256xi1>, vector<16x256xf32>
    %c255_i32_50 = arith.constant 255 : i32
    %174 = tpu.dynamic_rotate %170 by %c255_i32_50 dim 1 : vector<16x256xf32>, i32 -> vector<16x256xf32>
    %c1_i32_51 = arith.constant 1 : i32
    %175 = tpu.dynamic_rotate %170 by %c1_i32_51 dim 1 : vector<16x256xf32>, i32 -> vector<16x256xf32>
    %176 = vector.shape_cast %18 : vector<1x256xi1> to vector<1x256xi1>
    %177 = vector.broadcast %176 : vector<1x256xi1> to vector<16x256xi1>
    %178 = arith.select %177, %174, %175 : vector<16x256xi1>, vector<16x256xf32>
    %179 = vector.shape_cast %20 : vector<1x256xi1> to vector<1x256xi1>
    %180 = vector.broadcast %179 : vector<1x256xi1> to vector<16x256xi1>
    %181 = arith.select %180, %175, %174 : vector<16x256xi1>, vector<16x256xf32>
    %c255_i32_52 = arith.constant 255 : i32
    %182 = tpu.dynamic_rotate %163 by %c255_i32_52 dim 1 : vector<16x256xf32>, i32 -> vector<16x256xf32>
    %c1_i32_53 = arith.constant 1 : i32
    %183 = tpu.dynamic_rotate %163 by %c1_i32_53 dim 1 : vector<16x256xf32>, i32 -> vector<16x256xf32>
    %184 = vector.shape_cast %18 : vector<1x256xi1> to vector<1x256xi1>
    %185 = vector.broadcast %184 : vector<1x256xi1> to vector<16x256xi1>
    %186 = arith.select %185, %182, %183 : vector<16x256xi1>, vector<16x256xf32>
    %187 = vector.shape_cast %20 : vector<1x256xi1> to vector<1x256xi1>
    %188 = vector.broadcast %187 : vector<1x256xi1> to vector<16x256xi1>
    %189 = arith.select %188, %183, %182 : vector<16x256xi1>, vector<16x256xf32>
    %c255_i32_54 = arith.constant 255 : i32
    %190 = tpu.dynamic_rotate %173 by %c255_i32_54 dim 1 : vector<16x256xf32>, i32 -> vector<16x256xf32>
    %c1_i32_55 = arith.constant 1 : i32
    %191 = tpu.dynamic_rotate %173 by %c1_i32_55 dim 1 : vector<16x256xf32>, i32 -> vector<16x256xf32>
    %192 = vector.shape_cast %18 : vector<1x256xi1> to vector<1x256xi1>
    %193 = vector.broadcast %192 : vector<1x256xi1> to vector<16x256xi1>
    %194 = arith.select %193, %190, %191 : vector<16x256xi1>, vector<16x256xf32>
    %195 = vector.shape_cast %20 : vector<1x256xi1> to vector<1x256xi1>
    %196 = vector.broadcast %195 : vector<1x256xi1> to vector<16x256xi1>
    %197 = arith.select %196, %191, %190 : vector<16x256xi1>, vector<16x256xf32>
    %198 = tpu.concatenate %178, %170, %181, %186, %163, %189, %194, %173, %197 in 0 : vector<16x256xf32>, vector<16x256xf32>, vector<16x256xf32>, vector<16x256xf32>, vector<16x256xf32>, vector<16x256xf32>, vector<16x256xf32>, vector<16x256xf32>, vector<16x256xf32> -> vector<144x256xf32>
    %cst_56 = arith.constant dense<0.000000e+00> : vector<16x256xf32>
    %199 = tpu.matmul %165, %198, %cst_56 {dimension_numbers = #tpu.dot_dimension_numbers<[1], [0], [0], [1], [0, 0, 1, 1], [], []>} : vector<16x144xf32>, vector<144x256xf32>, vector<16x256xf32> -> vector<16x256xf32>
    %cst_57 = arith.constant dense<0.000000e+00> : vector<16xf32>
    %200 = vector.multi_reduction <add>, %199, %cst_57 [1] : vector<16x256xf32> to vector<16xf32>
    %201 = vector.shape_cast %200 : vector<16xf32> to vector<16x1xf32>
    %cst_58 = arith.constant 2.560000e+02 : f32
    %202 = vector.broadcast %cst_58 : f32 to vector<16x1xf32>
    %203 = arith.divf %201, %202 : vector<16x1xf32>
    %204 = arith.mulf %199, %199 : vector<16x256xf32>
    %cst_59 = arith.constant dense<0.000000e+00> : vector<16xf32>
    %205 = vector.multi_reduction <add>, %204, %cst_59 [1] : vector<16x256xf32> to vector<16xf32>
    %206 = vector.shape_cast %205 : vector<16xf32> to vector<16x1xf32>
    %cst_60 = arith.constant 2.560000e+02 : f32
    %207 = vector.broadcast %cst_60 : f32 to vector<16x1xf32>
    %208 = arith.divf %206, %207 : vector<16x1xf32>
    %209 = arith.mulf %203, %203 : vector<16x1xf32>
    %210 = arith.subf %208, %209 : vector<16x1xf32>
    %c1_61 = arith.constant 1 : index
    %c0_62 = arith.constant 0 : index
    %c0_63 = arith.constant 0 : index
    %211 = vector.load %arg5[%c1_61, %c0_62, %c0_63] : memref<6x16x1xf32, #tpu.memory_space<vmem>>, vector<1x16x1xf32>
    %212 = vector.shape_cast %211 : vector<1x16x1xf32> to vector<16x1xf32>
    %cst_64 = arith.constant 9.99999974E-6 : f32
    %213 = vector.broadcast %cst_64 : f32 to vector<16x1xf32>
    %214 = arith.addf %210, %213 : vector<16x1xf32>
    %215 = math.rsqrt %214 : vector<16x1xf32>
    %216 = arith.mulf %212, %215 : vector<16x1xf32>
    %c1_65 = arith.constant 1 : index
    %c0_66 = arith.constant 0 : index
    %c0_67 = arith.constant 0 : index
    %217 = vector.load %arg6[%c1_65, %c0_66, %c0_67] : memref<6x16x1xf32, #tpu.memory_space<vmem>>, vector<1x16x1xf32>
    %218 = vector.shape_cast %217 : vector<1x16x1xf32> to vector<16x1xf32>
    %219 = arith.mulf %203, %216 : vector<16x1xf32>
    %220 = arith.subf %218, %219 : vector<16x1xf32>
    %221 = vector.broadcast %216 : vector<16x1xf32> to vector<16x256xf32>
    %222 = arith.mulf %199, %221 : vector<16x256xf32>
    %223 = vector.broadcast %220 : vector<16x1xf32> to vector<16x256xf32>
    %224 = arith.addf %222, %223 : vector<16x256xf32>
    %c0_68 = arith.constant 0 : index
    %c2 = arith.constant 2 : index
    %225 = memref.load %arg9[%c0_68, %c2] : memref<1x7xf32, #tpu.memory_space<smem>>
    %cst_69 = arith.constant 0.000000e+00 : f32
    %226 = vector.broadcast %cst_69 : f32 to vector<16x256xf32>
    %227 = arith.cmpf oge, %224, %226 : vector<16x256xf32>
    %228 = vector.broadcast %225 : f32 to vector<16x256xf32>
    %229 = arith.mulf %228, %224 : vector<16x256xf32>
    %230 = arith.select %227, %224, %229 : vector<16x256xi1>, vector<16x256xf32>
    %c2_70 = arith.constant 2 : index
    %c0_71 = arith.constant 0 : index
    %c0_72 = arith.constant 0 : index
    %231 = vector.load %arg4[%c2_70, %c0_71, %c0_72] : memref<6x16x144xf32, #tpu.memory_space<vmem>>, vector<1x16x144xf32>
    %232 = vector.shape_cast %231 : vector<1x16x144xf32> to vector<16x144xf32>
    %c240_i32_73 = arith.constant 240 : i32
    %233 = tpu.dynamic_rotate %230 by %c240_i32_73 dim 1 : vector<16x256xf32>, i32 -> vector<16x256xf32>
    %c16_i32_74 = arith.constant 16 : i32
    %234 = tpu.dynamic_rotate %230 by %c16_i32_74 dim 1 : vector<16x256xf32>, i32 -> vector<16x256xf32>
    %235 = vector.shape_cast %22 : vector<1x256xi1> to vector<1x256xi1>
    %236 = vector.broadcast %235 : vector<1x256xi1> to vector<16x256xi1>
    %237 = arith.select %236, %233, %234 : vector<16x256xi1>, vector<16x256xf32>
    %238 = vector.shape_cast %24 : vector<1x256xi1> to vector<1x256xi1>
    %239 = vector.broadcast %238 : vector<1x256xi1> to vector<16x256xi1>
    %240 = arith.select %239, %234, %233 : vector<16x256xi1>, vector<16x256xf32>
    %c255_i32_75 = arith.constant 255 : i32
    %241 = tpu.dynamic_rotate %237 by %c255_i32_75 dim 1 : vector<16x256xf32>, i32 -> vector<16x256xf32>
    %c1_i32_76 = arith.constant 1 : i32
    %242 = tpu.dynamic_rotate %237 by %c1_i32_76 dim 1 : vector<16x256xf32>, i32 -> vector<16x256xf32>
    %243 = vector.shape_cast %18 : vector<1x256xi1> to vector<1x256xi1>
    %244 = vector.broadcast %243 : vector<1x256xi1> to vector<16x256xi1>
    %245 = arith.select %244, %241, %242 : vector<16x256xi1>, vector<16x256xf32>
    %246 = vector.shape_cast %20 : vector<1x256xi1> to vector<1x256xi1>
    %247 = vector.broadcast %246 : vector<1x256xi1> to vector<16x256xi1>
    %248 = arith.select %247, %242, %241 : vector<16x256xi1>, vector<16x256xf32>
    %c255_i32_77 = arith.constant 255 : i32
    %249 = tpu.dynamic_rotate %230 by %c255_i32_77 dim 1 : vector<16x256xf32>, i32 -> vector<16x256xf32>
    %c1_i32_78 = arith.constant 1 : i32
    %250 = tpu.dynamic_rotate %230 by %c1_i32_78 dim 1 : vector<16x256xf32>, i32 -> vector<16x256xf32>
    %251 = vector.shape_cast %18 : vector<1x256xi1> to vector<1x256xi1>
    %252 = vector.broadcast %251 : vector<1x256xi1> to vector<16x256xi1>
    %253 = arith.select %252, %249, %250 : vector<16x256xi1>, vector<16x256xf32>
    %254 = vector.shape_cast %20 : vector<1x256xi1> to vector<1x256xi1>
    %255 = vector.broadcast %254 : vector<1x256xi1> to vector<16x256xi1>
    %256 = arith.select %255, %250, %249 : vector<16x256xi1>, vector<16x256xf32>
    %c255_i32_79 = arith.constant 255 : i32
    %257 = tpu.dynamic_rotate %240 by %c255_i32_79 dim 1 : vector<16x256xf32>, i32 -> vector<16x256xf32>
    %c1_i32_80 = arith.constant 1 : i32
    %258 = tpu.dynamic_rotate %240 by %c1_i32_80 dim 1 : vector<16x256xf32>, i32 -> vector<16x256xf32>
    %259 = vector.shape_cast %18 : vector<1x256xi1> to vector<1x256xi1>
    %260 = vector.broadcast %259 : vector<1x256xi1> to vector<16x256xi1>
    %261 = arith.select %260, %257, %258 : vector<16x256xi1>, vector<16x256xf32>
    %262 = vector.shape_cast %20 : vector<1x256xi1> to vector<1x256xi1>
    %263 = vector.broadcast %262 : vector<1x256xi1> to vector<16x256xi1>
    %264 = arith.select %263, %258, %257 : vector<16x256xi1>, vector<16x256xf32>
    %265 = tpu.concatenate %245, %237, %248, %253, %230, %256, %261, %240, %264 in 0 : vector<16x256xf32>, vector<16x256xf32>, vector<16x256xf32>, vector<16x256xf32>, vector<16x256xf32>, vector<16x256xf32>, vector<16x256xf32>, vector<16x256xf32>, vector<16x256xf32> -> vector<144x256xf32>
    %cst_81 = arith.constant dense<0.000000e+00> : vector<16x256xf32>
    %266 = tpu.matmul %232, %265, %cst_81 {dimension_numbers = #tpu.dot_dimension_numbers<[1], [0], [0], [1], [0, 0, 1, 1], [], []>} : vector<16x144xf32>, vector<144x256xf32>, vector<16x256xf32> -> vector<16x256xf32>
    %cst_82 = arith.constant dense<0.000000e+00> : vector<16xf32>
    %267 = vector.multi_reduction <add>, %266, %cst_82 [1] : vector<16x256xf32> to vector<16xf32>
    %268 = vector.shape_cast %267 : vector<16xf32> to vector<16x1xf32>
    %cst_83 = arith.constant 2.560000e+02 : f32
    %269 = vector.broadcast %cst_83 : f32 to vector<16x1xf32>
    %270 = arith.divf %268, %269 : vector<16x1xf32>
    %271 = arith.mulf %266, %266 : vector<16x256xf32>
    %cst_84 = arith.constant dense<0.000000e+00> : vector<16xf32>
    %272 = vector.multi_reduction <add>, %271, %cst_84 [1] : vector<16x256xf32> to vector<16xf32>
    %273 = vector.shape_cast %272 : vector<16xf32> to vector<16x1xf32>
    %cst_85 = arith.constant 2.560000e+02 : f32
    %274 = vector.broadcast %cst_85 : f32 to vector<16x1xf32>
    %275 = arith.divf %273, %274 : vector<16x1xf32>
    %276 = arith.mulf %270, %270 : vector<16x1xf32>
    %277 = arith.subf %275, %276 : vector<16x1xf32>
    %c2_86 = arith.constant 2 : index
    %c0_87 = arith.constant 0 : index
    %c0_88 = arith.constant 0 : index
    %278 = vector.load %arg5[%c2_86, %c0_87, %c0_88] : memref<6x16x1xf32, #tpu.memory_space<vmem>>, vector<1x16x1xf32>
    %279 = vector.shape_cast %278 : vector<1x16x1xf32> to vector<16x1xf32>
    %cst_89 = arith.constant 9.99999974E-6 : f32
    %280 = vector.broadcast %cst_89 : f32 to vector<16x1xf32>
    %281 = arith.addf %277, %280 : vector<16x1xf32>
    %282 = math.rsqrt %281 : vector<16x1xf32>
    %283 = arith.mulf %279, %282 : vector<16x1xf32>
    %c2_90 = arith.constant 2 : index
    %c0_91 = arith.constant 0 : index
    %c0_92 = arith.constant 0 : index
    %284 = vector.load %arg6[%c2_90, %c0_91, %c0_92] : memref<6x16x1xf32, #tpu.memory_space<vmem>>, vector<1x16x1xf32>
    %285 = vector.shape_cast %284 : vector<1x16x1xf32> to vector<16x1xf32>
    %286 = arith.mulf %270, %283 : vector<16x1xf32>
    %287 = arith.subf %285, %286 : vector<16x1xf32>
    %288 = vector.broadcast %283 : vector<16x1xf32> to vector<16x256xf32>
    %289 = arith.mulf %266, %288 : vector<16x256xf32>
    %290 = vector.broadcast %287 : vector<16x1xf32> to vector<16x256xf32>
    %291 = arith.addf %289, %290 : vector<16x256xf32>
    %c0_93 = arith.constant 0 : index
    %c3 = arith.constant 3 : index
    %292 = memref.load %arg9[%c0_93, %c3] : memref<1x7xf32, #tpu.memory_space<smem>>
    %cst_94 = arith.constant 0.000000e+00 : f32
    %293 = vector.broadcast %cst_94 : f32 to vector<16x256xf32>
    %294 = arith.cmpf oge, %291, %293 : vector<16x256xf32>
    %295 = vector.broadcast %292 : f32 to vector<16x256xf32>
    %296 = arith.mulf %295, %291 : vector<16x256xf32>
    %297 = arith.select %294, %291, %296 : vector<16x256xi1>, vector<16x256xf32>
    %c3_95 = arith.constant 3 : index
    %c0_96 = arith.constant 0 : index
    %c0_97 = arith.constant 0 : index
    %298 = vector.load %arg4[%c3_95, %c0_96, %c0_97] : memref<6x16x144xf32, #tpu.memory_space<vmem>>, vector<1x16x144xf32>
    %299 = vector.shape_cast %298 : vector<1x16x144xf32> to vector<16x144xf32>
    %c240_i32_98 = arith.constant 240 : i32
    %300 = tpu.dynamic_rotate %297 by %c240_i32_98 dim 1 : vector<16x256xf32>, i32 -> vector<16x256xf32>
    %c16_i32_99 = arith.constant 16 : i32
    %301 = tpu.dynamic_rotate %297 by %c16_i32_99 dim 1 : vector<16x256xf32>, i32 -> vector<16x256xf32>
    %302 = vector.shape_cast %22 : vector<1x256xi1> to vector<1x256xi1>
    %303 = vector.broadcast %302 : vector<1x256xi1> to vector<16x256xi1>
    %304 = arith.select %303, %300, %301 : vector<16x256xi1>, vector<16x256xf32>
    %305 = vector.shape_cast %24 : vector<1x256xi1> to vector<1x256xi1>
    %306 = vector.broadcast %305 : vector<1x256xi1> to vector<16x256xi1>
    %307 = arith.select %306, %301, %300 : vector<16x256xi1>, vector<16x256xf32>
    %c255_i32_100 = arith.constant 255 : i32
    %308 = tpu.dynamic_rotate %304 by %c255_i32_100 dim 1 : vector<16x256xf32>, i32 -> vector<16x256xf32>
    %c1_i32_101 = arith.constant 1 : i32
    %309 = tpu.dynamic_rotate %304 by %c1_i32_101 dim 1 : vector<16x256xf32>, i32 -> vector<16x256xf32>
    %310 = vector.shape_cast %18 : vector<1x256xi1> to vector<1x256xi1>
    %311 = vector.broadcast %310 : vector<1x256xi1> to vector<16x256xi1>
    %312 = arith.select %311, %308, %309 : vector<16x256xi1>, vector<16x256xf32>
    %313 = vector.shape_cast %20 : vector<1x256xi1> to vector<1x256xi1>
    %314 = vector.broadcast %313 : vector<1x256xi1> to vector<16x256xi1>
    %315 = arith.select %314, %309, %308 : vector<16x256xi1>, vector<16x256xf32>
    %c255_i32_102 = arith.constant 255 : i32
    %316 = tpu.dynamic_rotate %297 by %c255_i32_102 dim 1 : vector<16x256xf32>, i32 -> vector<16x256xf32>
    %c1_i32_103 = arith.constant 1 : i32
    %317 = tpu.dynamic_rotate %297 by %c1_i32_103 dim 1 : vector<16x256xf32>, i32 -> vector<16x256xf32>
    %318 = vector.shape_cast %18 : vector<1x256xi1> to vector<1x256xi1>
    %319 = vector.broadcast %318 : vector<1x256xi1> to vector<16x256xi1>
    %320 = arith.select %319, %316, %317 : vector<16x256xi1>, vector<16x256xf32>
    %321 = vector.shape_cast %20 : vector<1x256xi1> to vector<1x256xi1>
    %322 = vector.broadcast %321 : vector<1x256xi1> to vector<16x256xi1>
    %323 = arith.select %322, %317, %316 : vector<16x256xi1>, vector<16x256xf32>
    %c255_i32_104 = arith.constant 255 : i32
    %324 = tpu.dynamic_rotate %307 by %c255_i32_104 dim 1 : vector<16x256xf32>, i32 -> vector<16x256xf32>
    %c1_i32_105 = arith.constant 1 : i32
    %325 = tpu.dynamic_rotate %307 by %c1_i32_105 dim 1 : vector<16x256xf32>, i32 -> vector<16x256xf32>
    %326 = vector.shape_cast %18 : vector<1x256xi1> to vector<1x256xi1>
    %327 = vector.broadcast %326 : vector<1x256xi1> to vector<16x256xi1>
    %328 = arith.select %327, %324, %325 : vector<16x256xi1>, vector<16x256xf32>
    %329 = vector.shape_cast %20 : vector<1x256xi1> to vector<1x256xi1>
    %330 = vector.broadcast %329 : vector<1x256xi1> to vector<16x256xi1>
    %331 = arith.select %330, %325, %324 : vector<16x256xi1>, vector<16x256xf32>
    %332 = tpu.concatenate %312, %304, %315, %320, %297, %323, %328, %307, %331 in 0 : vector<16x256xf32>, vector<16x256xf32>, vector<16x256xf32>, vector<16x256xf32>, vector<16x256xf32>, vector<16x256xf32>, vector<16x256xf32>, vector<16x256xf32>, vector<16x256xf32> -> vector<144x256xf32>
    %cst_106 = arith.constant dense<0.000000e+00> : vector<16x256xf32>
    %333 = tpu.matmul %299, %332, %cst_106 {dimension_numbers = #tpu.dot_dimension_numbers<[1], [0], [0], [1], [0, 0, 1, 1], [], []>} : vector<16x144xf32>, vector<144x256xf32>, vector<16x256xf32> -> vector<16x256xf32>
    %cst_107 = arith.constant dense<0.000000e+00> : vector<16xf32>
    %334 = vector.multi_reduction <add>, %333, %cst_107 [1] : vector<16x256xf32> to vector<16xf32>
    %335 = vector.shape_cast %334 : vector<16xf32> to vector<16x1xf32>
    %cst_108 = arith.constant 2.560000e+02 : f32
    %336 = vector.broadcast %cst_108 : f32 to vector<16x1xf32>
    %337 = arith.divf %335, %336 : vector<16x1xf32>
    %338 = arith.mulf %333, %333 : vector<16x256xf32>
    %cst_109 = arith.constant dense<0.000000e+00> : vector<16xf32>
    %339 = vector.multi_reduction <add>, %338, %cst_109 [1] : vector<16x256xf32> to vector<16xf32>
    %340 = vector.shape_cast %339 : vector<16xf32> to vector<16x1xf32>
    %cst_110 = arith.constant 2.560000e+02 : f32
    %341 = vector.broadcast %cst_110 : f32 to vector<16x1xf32>
    %342 = arith.divf %340, %341 : vector<16x1xf32>
    %343 = arith.mulf %337, %337 : vector<16x1xf32>
    %344 = arith.subf %342, %343 : vector<16x1xf32>
    %c3_111 = arith.constant 3 : index
    %c0_112 = arith.constant 0 : index
    %c0_113 = arith.constant 0 : index
    %345 = vector.load %arg5[%c3_111, %c0_112, %c0_113] : memref<6x16x1xf32, #tpu.memory_space<vmem>>, vector<1x16x1xf32>
    %346 = vector.shape_cast %345 : vector<1x16x1xf32> to vector<16x1xf32>
    %cst_114 = arith.constant 9.99999974E-6 : f32
    %347 = vector.broadcast %cst_114 : f32 to vector<16x1xf32>
    %348 = arith.addf %344, %347 : vector<16x1xf32>
    %349 = math.rsqrt %348 : vector<16x1xf32>
    %350 = arith.mulf %346, %349 : vector<16x1xf32>
    %c3_115 = arith.constant 3 : index
    %c0_116 = arith.constant 0 : index
    %c0_117 = arith.constant 0 : index
    %351 = vector.load %arg6[%c3_115, %c0_116, %c0_117] : memref<6x16x1xf32, #tpu.memory_space<vmem>>, vector<1x16x1xf32>
    %352 = vector.shape_cast %351 : vector<1x16x1xf32> to vector<16x1xf32>
    %353 = arith.mulf %337, %350 : vector<16x1xf32>
    %354 = arith.subf %352, %353 : vector<16x1xf32>
    %355 = vector.broadcast %350 : vector<16x1xf32> to vector<16x256xf32>
    %356 = arith.mulf %333, %355 : vector<16x256xf32>
    %357 = vector.broadcast %354 : vector<16x1xf32> to vector<16x256xf32>
    %358 = arith.addf %356, %357 : vector<16x256xf32>
    %c0_118 = arith.constant 0 : index
    %c4 = arith.constant 4 : index
    %359 = memref.load %arg9[%c0_118, %c4] : memref<1x7xf32, #tpu.memory_space<smem>>
    %cst_119 = arith.constant 0.000000e+00 : f32
    %360 = vector.broadcast %cst_119 : f32 to vector<16x256xf32>
    %361 = arith.cmpf oge, %358, %360 : vector<16x256xf32>
    %362 = vector.broadcast %359 : f32 to vector<16x256xf32>
    %363 = arith.mulf %362, %358 : vector<16x256xf32>
    %364 = arith.select %361, %358, %363 : vector<16x256xi1>, vector<16x256xf32>
    %c4_120 = arith.constant 4 : index
    %c0_121 = arith.constant 0 : index
    %c0_122 = arith.constant 0 : index
    %365 = vector.load %arg4[%c4_120, %c0_121, %c0_122] : memref<6x16x144xf32, #tpu.memory_space<vmem>>, vector<1x16x144xf32>
    %366 = vector.shape_cast %365 : vector<1x16x144xf32> to vector<16x144xf32>
    %c240_i32_123 = arith.constant 240 : i32
    %367 = tpu.dynamic_rotate %364 by %c240_i32_123 dim 1 : vector<16x256xf32>, i32 -> vector<16x256xf32>
    %c16_i32_124 = arith.constant 16 : i32
    %368 = tpu.dynamic_rotate %364 by %c16_i32_124 dim 1 : vector<16x256xf32>, i32 -> vector<16x256xf32>
    %369 = vector.shape_cast %22 : vector<1x256xi1> to vector<1x256xi1>
    %370 = vector.broadcast %369 : vector<1x256xi1> to vector<16x256xi1>
    %371 = arith.select %370, %367, %368 : vector<16x256xi1>, vector<16x256xf32>
    %372 = vector.shape_cast %24 : vector<1x256xi1> to vector<1x256xi1>
    %373 = vector.broadcast %372 : vector<1x256xi1> to vector<16x256xi1>
    %374 = arith.select %373, %368, %367 : vector<16x256xi1>, vector<16x256xf32>
    %c255_i32_125 = arith.constant 255 : i32
    %375 = tpu.dynamic_rotate %371 by %c255_i32_125 dim 1 : vector<16x256xf32>, i32 -> vector<16x256xf32>
    %c1_i32_126 = arith.constant 1 : i32
    %376 = tpu.dynamic_rotate %371 by %c1_i32_126 dim 1 : vector<16x256xf32>, i32 -> vector<16x256xf32>
    %377 = vector.shape_cast %18 : vector<1x256xi1> to vector<1x256xi1>
    %378 = vector.broadcast %377 : vector<1x256xi1> to vector<16x256xi1>
    %379 = arith.select %378, %375, %376 : vector<16x256xi1>, vector<16x256xf32>
    %380 = vector.shape_cast %20 : vector<1x256xi1> to vector<1x256xi1>
    %381 = vector.broadcast %380 : vector<1x256xi1> to vector<16x256xi1>
    %382 = arith.select %381, %376, %375 : vector<16x256xi1>, vector<16x256xf32>
    %c255_i32_127 = arith.constant 255 : i32
    %383 = tpu.dynamic_rotate %364 by %c255_i32_127 dim 1 : vector<16x256xf32>, i32 -> vector<16x256xf32>
    %c1_i32_128 = arith.constant 1 : i32
    %384 = tpu.dynamic_rotate %364 by %c1_i32_128 dim 1 : vector<16x256xf32>, i32 -> vector<16x256xf32>
    %385 = vector.shape_cast %18 : vector<1x256xi1> to vector<1x256xi1>
    %386 = vector.broadcast %385 : vector<1x256xi1> to vector<16x256xi1>
    %387 = arith.select %386, %383, %384 : vector<16x256xi1>, vector<16x256xf32>
    %388 = vector.shape_cast %20 : vector<1x256xi1> to vector<1x256xi1>
    %389 = vector.broadcast %388 : vector<1x256xi1> to vector<16x256xi1>
    %390 = arith.select %389, %384, %383 : vector<16x256xi1>, vector<16x256xf32>
    %c255_i32_129 = arith.constant 255 : i32
    %391 = tpu.dynamic_rotate %374 by %c255_i32_129 dim 1 : vector<16x256xf32>, i32 -> vector<16x256xf32>
    %c1_i32_130 = arith.constant 1 : i32
    %392 = tpu.dynamic_rotate %374 by %c1_i32_130 dim 1 : vector<16x256xf32>, i32 -> vector<16x256xf32>
    %393 = vector.shape_cast %18 : vector<1x256xi1> to vector<1x256xi1>
    %394 = vector.broadcast %393 : vector<1x256xi1> to vector<16x256xi1>
    %395 = arith.select %394, %391, %392 : vector<16x256xi1>, vector<16x256xf32>
    %396 = vector.shape_cast %20 : vector<1x256xi1> to vector<1x256xi1>
    %397 = vector.broadcast %396 : vector<1x256xi1> to vector<16x256xi1>
    %398 = arith.select %397, %392, %391 : vector<16x256xi1>, vector<16x256xf32>
    %399 = tpu.concatenate %379, %371, %382, %387, %364, %390, %395, %374, %398 in 0 : vector<16x256xf32>, vector<16x256xf32>, vector<16x256xf32>, vector<16x256xf32>, vector<16x256xf32>, vector<16x256xf32>, vector<16x256xf32>, vector<16x256xf32>, vector<16x256xf32> -> vector<144x256xf32>
    %cst_131 = arith.constant dense<0.000000e+00> : vector<16x256xf32>
    %400 = tpu.matmul %366, %399, %cst_131 {dimension_numbers = #tpu.dot_dimension_numbers<[1], [0], [0], [1], [0, 0, 1, 1], [], []>} : vector<16x144xf32>, vector<144x256xf32>, vector<16x256xf32> -> vector<16x256xf32>
    %cst_132 = arith.constant dense<0.000000e+00> : vector<16xf32>
    %401 = vector.multi_reduction <add>, %400, %cst_132 [1] : vector<16x256xf32> to vector<16xf32>
    %402 = vector.shape_cast %401 : vector<16xf32> to vector<16x1xf32>
    %cst_133 = arith.constant 2.560000e+02 : f32
    %403 = vector.broadcast %cst_133 : f32 to vector<16x1xf32>
    %404 = arith.divf %402, %403 : vector<16x1xf32>
    %405 = arith.mulf %400, %400 : vector<16x256xf32>
    %cst_134 = arith.constant dense<0.000000e+00> : vector<16xf32>
    %406 = vector.multi_reduction <add>, %405, %cst_134 [1] : vector<16x256xf32> to vector<16xf32>
    %407 = vector.shape_cast %406 : vector<16xf32> to vector<16x1xf32>
    %cst_135 = arith.constant 2.560000e+02 : f32
    %408 = vector.broadcast %cst_135 : f32 to vector<16x1xf32>
    %409 = arith.divf %407, %408 : vector<16x1xf32>
    %410 = arith.mulf %404, %404 : vector<16x1xf32>
    %411 = arith.subf %409, %410 : vector<16x1xf32>
    %c4_136 = arith.constant 4 : index
    %c0_137 = arith.constant 0 : index
    %c0_138 = arith.constant 0 : index
    %412 = vector.load %arg5[%c4_136, %c0_137, %c0_138] : memref<6x16x1xf32, #tpu.memory_space<vmem>>, vector<1x16x1xf32>
    %413 = vector.shape_cast %412 : vector<1x16x1xf32> to vector<16x1xf32>
    %cst_139 = arith.constant 9.99999974E-6 : f32
    %414 = vector.broadcast %cst_139 : f32 to vector<16x1xf32>
    %415 = arith.addf %411, %414 : vector<16x1xf32>
    %416 = math.rsqrt %415 : vector<16x1xf32>
    %417 = arith.mulf %413, %416 : vector<16x1xf32>
    %c4_140 = arith.constant 4 : index
    %c0_141 = arith.constant 0 : index
    %c0_142 = arith.constant 0 : index
    %418 = vector.load %arg6[%c4_140, %c0_141, %c0_142] : memref<6x16x1xf32, #tpu.memory_space<vmem>>, vector<1x16x1xf32>
    %419 = vector.shape_cast %418 : vector<1x16x1xf32> to vector<16x1xf32>
    %420 = arith.mulf %404, %417 : vector<16x1xf32>
    %421 = arith.subf %419, %420 : vector<16x1xf32>
    %422 = vector.broadcast %417 : vector<16x1xf32> to vector<16x256xf32>
    %423 = arith.mulf %400, %422 : vector<16x256xf32>
    %424 = vector.broadcast %421 : vector<16x1xf32> to vector<16x256xf32>
    %425 = arith.addf %423, %424 : vector<16x256xf32>
    %c0_143 = arith.constant 0 : index
    %c5 = arith.constant 5 : index
    %426 = memref.load %arg9[%c0_143, %c5] : memref<1x7xf32, #tpu.memory_space<smem>>
    %cst_144 = arith.constant 0.000000e+00 : f32
    %427 = vector.broadcast %cst_144 : f32 to vector<16x256xf32>
    %428 = arith.cmpf oge, %425, %427 : vector<16x256xf32>
    %429 = vector.broadcast %426 : f32 to vector<16x256xf32>
    %430 = arith.mulf %429, %425 : vector<16x256xf32>
    %431 = arith.select %428, %425, %430 : vector<16x256xi1>, vector<16x256xf32>
    %c5_145 = arith.constant 5 : index
    %c0_146 = arith.constant 0 : index
    %c0_147 = arith.constant 0 : index
    %432 = vector.load %arg4[%c5_145, %c0_146, %c0_147] : memref<6x16x144xf32, #tpu.memory_space<vmem>>, vector<1x16x144xf32>
    %433 = vector.shape_cast %432 : vector<1x16x144xf32> to vector<16x144xf32>
    %c240_i32_148 = arith.constant 240 : i32
    %434 = tpu.dynamic_rotate %431 by %c240_i32_148 dim 1 : vector<16x256xf32>, i32 -> vector<16x256xf32>
    %c16_i32_149 = arith.constant 16 : i32
    %435 = tpu.dynamic_rotate %431 by %c16_i32_149 dim 1 : vector<16x256xf32>, i32 -> vector<16x256xf32>
    %436 = vector.shape_cast %22 : vector<1x256xi1> to vector<1x256xi1>
    %437 = vector.broadcast %436 : vector<1x256xi1> to vector<16x256xi1>
    %438 = arith.select %437, %434, %435 : vector<16x256xi1>, vector<16x256xf32>
    %439 = vector.shape_cast %24 : vector<1x256xi1> to vector<1x256xi1>
    %440 = vector.broadcast %439 : vector<1x256xi1> to vector<16x256xi1>
    %441 = arith.select %440, %435, %434 : vector<16x256xi1>, vector<16x256xf32>
    %c255_i32_150 = arith.constant 255 : i32
    %442 = tpu.dynamic_rotate %438 by %c255_i32_150 dim 1 : vector<16x256xf32>, i32 -> vector<16x256xf32>
    %c1_i32_151 = arith.constant 1 : i32
    %443 = tpu.dynamic_rotate %438 by %c1_i32_151 dim 1 : vector<16x256xf32>, i32 -> vector<16x256xf32>
    %444 = vector.shape_cast %18 : vector<1x256xi1> to vector<1x256xi1>
    %445 = vector.broadcast %444 : vector<1x256xi1> to vector<16x256xi1>
    %446 = arith.select %445, %442, %443 : vector<16x256xi1>, vector<16x256xf32>
    %447 = vector.shape_cast %20 : vector<1x256xi1> to vector<1x256xi1>
    %448 = vector.broadcast %447 : vector<1x256xi1> to vector<16x256xi1>
    %449 = arith.select %448, %443, %442 : vector<16x256xi1>, vector<16x256xf32>
    %c255_i32_152 = arith.constant 255 : i32
    %450 = tpu.dynamic_rotate %431 by %c255_i32_152 dim 1 : vector<16x256xf32>, i32 -> vector<16x256xf32>
    %c1_i32_153 = arith.constant 1 : i32
    %451 = tpu.dynamic_rotate %431 by %c1_i32_153 dim 1 : vector<16x256xf32>, i32 -> vector<16x256xf32>
    %452 = vector.shape_cast %18 : vector<1x256xi1> to vector<1x256xi1>
    %453 = vector.broadcast %452 : vector<1x256xi1> to vector<16x256xi1>
    %454 = arith.select %453, %450, %451 : vector<16x256xi1>, vector<16x256xf32>
    %455 = vector.shape_cast %20 : vector<1x256xi1> to vector<1x256xi1>
    %456 = vector.broadcast %455 : vector<1x256xi1> to vector<16x256xi1>
    %457 = arith.select %456, %451, %450 : vector<16x256xi1>, vector<16x256xf32>
    %c255_i32_154 = arith.constant 255 : i32
    %458 = tpu.dynamic_rotate %441 by %c255_i32_154 dim 1 : vector<16x256xf32>, i32 -> vector<16x256xf32>
    %c1_i32_155 = arith.constant 1 : i32
    %459 = tpu.dynamic_rotate %441 by %c1_i32_155 dim 1 : vector<16x256xf32>, i32 -> vector<16x256xf32>
    %460 = vector.shape_cast %18 : vector<1x256xi1> to vector<1x256xi1>
    %461 = vector.broadcast %460 : vector<1x256xi1> to vector<16x256xi1>
    %462 = arith.select %461, %458, %459 : vector<16x256xi1>, vector<16x256xf32>
    %463 = vector.shape_cast %20 : vector<1x256xi1> to vector<1x256xi1>
    %464 = vector.broadcast %463 : vector<1x256xi1> to vector<16x256xi1>
    %465 = arith.select %464, %459, %458 : vector<16x256xi1>, vector<16x256xf32>
    %466 = tpu.concatenate %446, %438, %449, %454, %431, %457, %462, %441, %465 in 0 : vector<16x256xf32>, vector<16x256xf32>, vector<16x256xf32>, vector<16x256xf32>, vector<16x256xf32>, vector<16x256xf32>, vector<16x256xf32>, vector<16x256xf32>, vector<16x256xf32> -> vector<144x256xf32>
    %cst_156 = arith.constant dense<0.000000e+00> : vector<16x256xf32>
    %467 = tpu.matmul %433, %466, %cst_156 {dimension_numbers = #tpu.dot_dimension_numbers<[1], [0], [0], [1], [0, 0, 1, 1], [], []>} : vector<16x144xf32>, vector<144x256xf32>, vector<16x256xf32> -> vector<16x256xf32>
    %cst_157 = arith.constant dense<0.000000e+00> : vector<16xf32>
    %468 = vector.multi_reduction <add>, %467, %cst_157 [1] : vector<16x256xf32> to vector<16xf32>
    %469 = vector.shape_cast %468 : vector<16xf32> to vector<16x1xf32>
    %cst_158 = arith.constant 2.560000e+02 : f32
    %470 = vector.broadcast %cst_158 : f32 to vector<16x1xf32>
    %471 = arith.divf %469, %470 : vector<16x1xf32>
    %472 = arith.mulf %467, %467 : vector<16x256xf32>
    %cst_159 = arith.constant dense<0.000000e+00> : vector<16xf32>
    %473 = vector.multi_reduction <add>, %472, %cst_159 [1] : vector<16x256xf32> to vector<16xf32>
    %474 = vector.shape_cast %473 : vector<16xf32> to vector<16x1xf32>
    %cst_160 = arith.constant 2.560000e+02 : f32
    %475 = vector.broadcast %cst_160 : f32 to vector<16x1xf32>
    %476 = arith.divf %474, %475 : vector<16x1xf32>
    %477 = arith.mulf %471, %471 : vector<16x1xf32>
    %478 = arith.subf %476, %477 : vector<16x1xf32>
    %c5_161 = arith.constant 5 : index
    %c0_162 = arith.constant 0 : index
    %c0_163 = arith.constant 0 : index
    %479 = vector.load %arg5[%c5_161, %c0_162, %c0_163] : memref<6x16x1xf32, #tpu.memory_space<vmem>>, vector<1x16x1xf32>
    %480 = vector.shape_cast %479 : vector<1x16x1xf32> to vector<16x1xf32>
    %cst_164 = arith.constant 9.99999974E-6 : f32
    %481 = vector.broadcast %cst_164 : f32 to vector<16x1xf32>
    %482 = arith.addf %478, %481 : vector<16x1xf32>
    %483 = math.rsqrt %482 : vector<16x1xf32>
    %484 = arith.mulf %480, %483 : vector<16x1xf32>
    %c5_165 = arith.constant 5 : index
    %c0_166 = arith.constant 0 : index
    %c0_167 = arith.constant 0 : index
    %485 = vector.load %arg6[%c5_165, %c0_166, %c0_167] : memref<6x16x1xf32, #tpu.memory_space<vmem>>, vector<1x16x1xf32>
    %486 = vector.shape_cast %485 : vector<1x16x1xf32> to vector<16x1xf32>
    %487 = arith.mulf %471, %484 : vector<16x1xf32>
    %488 = arith.subf %486, %487 : vector<16x1xf32>
    %489 = vector.broadcast %484 : vector<16x1xf32> to vector<16x256xf32>
    %490 = arith.mulf %467, %489 : vector<16x256xf32>
    %491 = vector.broadcast %488 : vector<16x1xf32> to vector<16x256xf32>
    %492 = arith.addf %490, %491 : vector<16x256xf32>
    %c0_168 = arith.constant 0 : index
    %c6 = arith.constant 6 : index
    %493 = memref.load %arg9[%c0_168, %c6] : memref<1x7xf32, #tpu.memory_space<smem>>
    %cst_169 = arith.constant 0.000000e+00 : f32
    %494 = vector.broadcast %cst_169 : f32 to vector<16x256xf32>
    %495 = arith.cmpf oge, %492, %494 : vector<16x256xf32>
    %496 = vector.broadcast %493 : f32 to vector<16x256xf32>
    %497 = arith.mulf %496, %492 : vector<16x256xf32>
    %498 = arith.select %495, %492, %497 : vector<16x256xi1>, vector<16x256xf32>
    %c0_170 = arith.constant 0 : index
    %c0_171 = arith.constant 0 : index
    %499 = vector.load %arg7[%c0_170, %c0_171] : memref<1x144xf32, #tpu.memory_space<vmem>>, vector<1x144xf32>
    %c240_i32_172 = arith.constant 240 : i32
    %500 = tpu.dynamic_rotate %498 by %c240_i32_172 dim 1 : vector<16x256xf32>, i32 -> vector<16x256xf32>
    %c16_i32_173 = arith.constant 16 : i32
    %501 = tpu.dynamic_rotate %498 by %c16_i32_173 dim 1 : vector<16x256xf32>, i32 -> vector<16x256xf32>
    %502 = vector.shape_cast %22 : vector<1x256xi1> to vector<1x256xi1>
    %503 = vector.broadcast %502 : vector<1x256xi1> to vector<16x256xi1>
    %504 = arith.select %503, %500, %501 : vector<16x256xi1>, vector<16x256xf32>
    %505 = vector.shape_cast %24 : vector<1x256xi1> to vector<1x256xi1>
    %506 = vector.broadcast %505 : vector<1x256xi1> to vector<16x256xi1>
    %507 = arith.select %506, %501, %500 : vector<16x256xi1>, vector<16x256xf32>
    %c255_i32_174 = arith.constant 255 : i32
    %508 = tpu.dynamic_rotate %504 by %c255_i32_174 dim 1 : vector<16x256xf32>, i32 -> vector<16x256xf32>
    %c1_i32_175 = arith.constant 1 : i32
    %509 = tpu.dynamic_rotate %504 by %c1_i32_175 dim 1 : vector<16x256xf32>, i32 -> vector<16x256xf32>
    %510 = vector.shape_cast %18 : vector<1x256xi1> to vector<1x256xi1>
    %511 = vector.broadcast %510 : vector<1x256xi1> to vector<16x256xi1>
    %512 = arith.select %511, %508, %509 : vector<16x256xi1>, vector<16x256xf32>
    %513 = vector.shape_cast %20 : vector<1x256xi1> to vector<1x256xi1>
    %514 = vector.broadcast %513 : vector<1x256xi1> to vector<16x256xi1>
    %515 = arith.select %514, %509, %508 : vector<16x256xi1>, vector<16x256xf32>
    %c255_i32_176 = arith.constant 255 : i32
    %516 = tpu.dynamic_rotate %498 by %c255_i32_176 dim 1 : vector<16x256xf32>, i32 -> vector<16x256xf32>
    %c1_i32_177 = arith.constant 1 : i32
    %517 = tpu.dynamic_rotate %498 by %c1_i32_177 dim 1 : vector<16x256xf32>, i32 -> vector<16x256xf32>
    %518 = vector.shape_cast %18 : vector<1x256xi1> to vector<1x256xi1>
    %519 = vector.broadcast %518 : vector<1x256xi1> to vector<16x256xi1>
    %520 = arith.select %519, %516, %517 : vector<16x256xi1>, vector<16x256xf32>
    %521 = vector.shape_cast %20 : vector<1x256xi1> to vector<1x256xi1>
    %522 = vector.broadcast %521 : vector<1x256xi1> to vector<16x256xi1>
    %523 = arith.select %522, %517, %516 : vector<16x256xi1>, vector<16x256xf32>
    %c255_i32_178 = arith.constant 255 : i32
    %524 = tpu.dynamic_rotate %507 by %c255_i32_178 dim 1 : vector<16x256xf32>, i32 -> vector<16x256xf32>
    %c1_i32_179 = arith.constant 1 : i32
    %525 = tpu.dynamic_rotate %507 by %c1_i32_179 dim 1 : vector<16x256xf32>, i32 -> vector<16x256xf32>
    %526 = vector.shape_cast %18 : vector<1x256xi1> to vector<1x256xi1>
    %527 = vector.broadcast %526 : vector<1x256xi1> to vector<16x256xi1>
    %528 = arith.select %527, %524, %525 : vector<16x256xi1>, vector<16x256xf32>
    %529 = vector.shape_cast %20 : vector<1x256xi1> to vector<1x256xi1>
    %530 = vector.broadcast %529 : vector<1x256xi1> to vector<16x256xi1>
    %531 = arith.select %530, %525, %524 : vector<16x256xi1>, vector<16x256xf32>
    %532 = tpu.concatenate %512, %504, %515, %520, %498, %523, %528, %507, %531 in 0 : vector<16x256xf32>, vector<16x256xf32>, vector<16x256xf32>, vector<16x256xf32>, vector<16x256xf32>, vector<16x256xf32>, vector<16x256xf32>, vector<16x256xf32>, vector<16x256xf32> -> vector<144x256xf32>
    %cst_180 = arith.constant dense<0.000000e+00> : vector<1x256xf32>
    %533 = tpu.matmul %499, %532, %cst_180 {dimension_numbers = #tpu.dot_dimension_numbers<[1], [0], [0], [1], [0, 0, 1, 1], [], []>} : vector<1x144xf32>, vector<144x256xf32>, vector<1x256xf32> -> vector<1x256xf32>
    %c0_181 = arith.constant 0 : index
    %c0_182 = arith.constant 0 : index
    %534 = vector.load %arg8[%c0_181, %c0_182] : memref<1x1xf32, #tpu.memory_space<vmem>>, vector<1x1xf32>
    %535 = vector.broadcast %534 : vector<1x1xf32> to vector<1x256xf32>
    %536 = arith.addf %533, %535 : vector<1x256xf32>
    %537 = arith.addf %536, %26 : vector<1x256xf32>
    %538 = math.tanh %537 : vector<1x256xf32>
    %c0_183 = arith.constant 0 : index
    %c0_184 = arith.constant 0 : index
    %c0_185 = arith.constant 0 : index
    %539 = vector.load %arg10[%c0_183, %c0_184, %c0_185] : memref<1x1x256xf32, #tpu.memory_space<vmem>>, vector<1x1x256xf32>
    %540 = vector.shape_cast %539 : vector<1x1x256xf32> to vector<1x256xf32>
    %541 = vector.shape_cast %538 : vector<1x256xf32> to vector<1x1x256xf32>
    tpu.vector_store %arg10[%c0_183, %c0_184, %c0_185], %541 {strides = array<i32>} : memref<1x1x256xf32, #tpu.memory_space<vmem>>, vector<1x1x256xf32>,
    return
  }
  func.func @transform_0(%arg0: i32) -> (i32, i32, i32) {
    %c0_i32 = arith.constant 0 : i32
    %c0_i32_0 = arith.constant 0 : i32
    %c0_i32_1 = arith.constant 0 : i32
    return %arg0, %c0_i32, %c0_i32_0 : i32, i32, i32
  }
  func.func @transform_1(%arg0: i32) -> (i32, i32) {
    %c0_i32 = arith.constant 0 : i32
    %c0_i32_0 = arith.constant 0 : i32
    %c0_i32_1 = arith.constant 0 : i32
    return %c0_i32, %c0_i32_0 : i32, i32
  }
  func.func @transform_2(%arg0: i32) -> (i32, i32) {
    %c0_i32 = arith.constant 0 : i32
    %c0_i32_0 = arith.constant 0 : i32
    %c0_i32_1 = arith.constant 0 : i32
    return %c0_i32, %c0_i32_0 : i32, i32
  }
  func.func @transform_3(%arg0: i32) -> (i32, i32, i32) {
    %c0_i32 = arith.constant 0 : i32
    %c0_i32_0 = arith.constant 0 : i32
    %c0_i32_1 = arith.constant 0 : i32
    %c0_i32_2 = arith.constant 0 : i32
    return %c0_i32, %c0_i32_0, %c0_i32_1 : i32, i32, i32
  }
  func.func @transform_4(%arg0: i32) -> (i32, i32, i32) {
    %c0_i32 = arith.constant 0 : i32
    %c0_i32_0 = arith.constant 0 : i32
    %c0_i32_1 = arith.constant 0 : i32
    %c0_i32_2 = arith.constant 0 : i32
    return %c0_i32, %c0_i32_0, %c0_i32_1 : i32, i32, i32
  }
  func.func @transform_5(%arg0: i32) -> (i32, i32, i32) {
    %c0_i32 = arith.constant 0 : i32
    %c0_i32_0 = arith.constant 0 : i32
    %c0_i32_1 = arith.constant 0 : i32
    %c0_i32_2 = arith.constant 0 : i32
    return %c0_i32, %c0_i32_0, %c0_i32_1 : i32, i32, i32
  }
  func.func @transform_6(%arg0: i32) -> (i32, i32) {
    %c0_i32 = arith.constant 0 : i32
    %c0_i32_0 = arith.constant 0 : i32
    %c0_i32_1 = arith.constant 0 : i32
    return %c0_i32, %c0_i32_0 : i32, i32
  }
  func.func @transform_7(%arg0: i32) -> (i32, i32) {
    %c0_i32 = arith.constant 0 : i32
    %c0_i32_0 = arith.constant 0 : i32
    %c0_i32_1 = arith.constant 0 : i32
    return %c0_i32, %c0_i32_0 : i32, i32
  }
  func.func @transform_8(%arg0: i32) -> (i32, i32) {
    %c0_i32 = arith.constant 0 : i32
    %c0_i32_0 = arith.constant 0 : i32
    %c0_i32_1 = arith.constant 0 : i32
    return %c0_i32, %c0_i32_0 : i32, i32
  }
  func.func @transform_9(%arg0: i32) -> (i32, i32, i32) {
    %c0_i32 = arith.constant 0 : i32
    %c0_i32_0 = arith.constant 0 : i32
    %c0_i32_1 = arith.constant 0 : i32
    return %arg0, %c0_i32, %c0_i32_0 : i32, i32, i32
  }
}

</mosaic_0001>

<llo_original>
// kernel: tpu_custom_call.1
$region0: #{tpu_custom_call.1}
  #allocation0 [shape = 'u32[]', space=smem, size = 0x4, offset = 0x4, fixed_abs, tag = 'smem constant byte address 0x4 - core index']
  #allocation1 [shape = 'u32[144,128]{1,0:T(1,128)}', space=vmem, size = 0x12000, scoped, tag = 'internal scratch']
  #allocation2 [shape = 'f32[1,1]{1,0:T(1,128)S(1)}', space=vmem, size = 0x200, scoped, tag = 'scoped memory for tpu_custom_call.1']
  %s0 = inlined_call_operand.vmem [shape: f32[2,1,256], index: 0, kind: input, shape index: {}]
  %s1 = inlined_call_operand.vmem [shape: f32[16,9], index: 1, kind: input, shape index: {}]
  %s2 = inlined_call_operand.vmem [shape: f32[16,1], index: 2, kind: input, shape index: {}]
  %s3 = inlined_call_operand.vmem [shape: f32[6,16,144], index: 3, kind: input, shape index: {}]
  %s4 = inlined_call_operand.vmem [shape: f32[6,16,1], index: 4, kind: input, shape index: {}]
  %s5 = inlined_call_operand.vmem [shape: f32[6,16,1], index: 5, kind: input, shape index: {}]
  %s6 = inlined_call_operand.vmem [shape: f32[1,144], index: 6, kind: input, shape index: {}]
  %s7 = inlined_call_operand.<no memory space> [shape: f32[1,1], index: 7, kind: input, shape index: {}]
  %s8 = inlined_call_operand.vmem [shape: f32[1,7], index: 8, kind: input, shape index: {}]
  %s9 = inlined_call_operand.hbm [shape: f32[2,1,256], index: 9, kind: output, shape index: {}]
  %s10 = sld [smem:[#allocation0]]
  $region73: #{tpu_custom_call.1} parent=0
    _
  %s12 = ssub.s32 1, %s10
  %s13 = scalar_select 0, %s12, %s10
  %v14 = vstv %s7
  %15 = vst [vmem:[#allocation2] sm:$0x1] %v14
  $region1: #{tpu_custom_call.1} parent=0
    #allocation3 [shape = 'u8[512]{0}', space=smem, size = 0x200, scoped, tag = 'input window, operand 8, single buffered']
    #allocation4 [shape = 's32[2]{0}', space=sflag, size = 0x8, scoped, tag = 'scoped memory for tpu_custom_call.1']
    #allocation5 [shape = 's32[2]{0}', space=sflag, size = 0x8, scoped, tag = 'scoped memory for tpu_custom_call.1']
    #allocation6 [shape = 'u8[2048]{0}', space=vmem, size = 0x800, scoped, tag = 'output window, operand 0']
    %16 = vsyncpa [#allocation5], 0
    %17 = vsyncpa [#allocation4], 0
    %s18 = scalar_lea.sflag [#allocation4], 1
    %19 = vsyncpa %s18, 0
    loop: start=0, step=1, limit=4
    $region2: #{tpu_custom_call.1} parent=1 // loop_pre_header
      _
    $region3: #{tpu_custom_call.1} parent=1 // loop_header
      %s21 = sphi 0, %s25
      %p22 = scmp.ge.s32.totalorder %s21, 4
      %s31 = sphi 0, %s33
      %s34 = sphi 0, %s31
      %s35 = sphi 0, %s34
      %s51 = sphi 0, %s35
      %s55 = sphi 0, %s55
      %s57 = sphi 0, %s55
      %s58 = sphi 0, %s57
      %s72 = sphi 0, %s58
      %s76 = sphi 0, %s76
      %s78 = sphi 0, %s76
      %s79 = sphi 0, %s78
      %s93 = sphi 0, %s79
      %s97 = sphi 0, %s97
      %s99 = sphi 0, %s97
      %s100 = sphi 0, %s99
      %s114 = sphi 0, %s100
      %s118 = sphi 0, %s118
      %s120 = sphi 0, %s118
      %s121 = sphi 0, %s120
      %s135 = sphi 0, %s121
      %s139 = sphi 0, %s139
      %s141 = sphi 0, %s139
      %s142 = sphi 0, %s141
      %s156 = sphi 0, %s142
      %s160 = sphi 0, %s160
      %s162 = sphi 0, %s160
      %s163 = sphi 0, %s162
      %s177 = sphi 0, %s163
      %s181 = sphi 0, %s181
      %s183 = sphi 0, %s181
      %s184 = sphi 0, %s183
      %s198 = sphi 0, %s184
      %s202 = sphi 0, %s202
      %s204 = sphi 0, %s202
      %s205 = sphi 0, %s204
      %s219 = sphi 0, %s205
      %s225 = sphi 0, %s227
      %s228 = sphi 0, %s225
      %s229 = sphi 0, %s228
      %s245 = sphi 0, %s229
    $region4: #{tpu_custom_call.1} parent=1 // loop_header_branch
      %24 = sbr.rel (%p22) target = $region8
    $region5: #{tpu_custom_call.1} parent=1 // loop_body
      %s26 = ssub.s32 %s21, 1
      %s27 = ssub.s32 %s21, 2
      %s28 = sadd.s32 %s21, 1
      %s29 = ssub.s32 %s21, %s28
      %p30 = scmp.eq.s32.totalorder %s29, 0
      %s32 = sadd.s32 %s31, 1
      %s33 = scalar_select %p30, %s31, %s32
      %p36 = pneg %p30
      %p37 = scmp.eq.s32.totalorder %s21, 1
      %p38 = por %p36, %p37
      %p39 = scmp.ne.s32.totalorder %s31, %s34
      %p40 = scmp.eq.s32.totalorder %s21, 0
      %p41 = por %p39, %p40
      %p42 = scmp.ne.s32.totalorder %s31, %s34
      %p43 = scmp.eq.s32.totalorder %s26, 1
      %p44 = por %p42, %p43
      %p45 = scmp.ne.s32.totalorder %s34, %s35
      %p46 = scmp.eq.s32.totalorder %s26, 0
      %p47 = por %p45, %p46
      %p48 = scmp.ne.s32.totalorder %s34, %s35
      %p49 = scmp.eq.s32.totalorder %s27, 1
      %p50 = por %p48, %p49
      %p52 = scmp.ne.s32.totalorder %s35, %s51
      %p53 = scmp.eq.s32.totalorder %s27, 0
      %p54 = por %p52, %p53
      %s56 = sadd.s32 %s55, 1
      %p59 = scmp.eq.s32.totalorder %s21, 1
      %p60 = scmp.ne.s32.totalorder %s55, %s57
      %p61 = scmp.eq.s32.totalorder %s21, 0
      %p62 = por %p60, %p61
      %p63 = scmp.ne.s32.totalorder %s55, %s57
      %p64 = scmp.eq.s32.totalorder %s26, 1
      %p65 = por %p63, %p64
      %p66 = scmp.ne.s32.totalorder %s57, %s58
      %p67 = scmp.eq.s32.totalorder %s26, 0
      %p68 = por %p66, %p67
      %p69 = scmp.ne.s32.totalorder %s57, %s58
      %p70 = scmp.eq.s32.totalorder %s27, 1
      %p71 = por %p69, %p70
      %p73 = scmp.ne.s32.totalorder %s58, %s72
      %p74 = scmp.eq.s32.totalorder %s27, 0
      %p75 = por %p73, %p74
      %s77 = sadd.s32 %s76, 1
      %p80 = scmp.eq.s32.totalorder %s21, 1
      %p81 = scmp.ne.s32.totalorder %s76, %s78
      %p82 = scmp.eq.s32.totalorder %s21, 0
      %p83 = por %p81, %p82
      %p84 = scmp.ne.s32.totalorder %s76, %s78
      %p85 = scmp.eq.s32.totalorder %s26, 1
      %p86 = por %p84, %p85
      %p87 = scmp.ne.s32.totalorder %s78, %s79
      %p88 = scmp.eq.s32.totalorder %s26, 0
      %p89 = por %p87, %p88
      %p90 = scmp.ne.s32.totalorder %s78, %s79
      %p91 = scmp.eq.s32.totalorder %s27, 1
      %p92 = por %p90, %p91
      %p94 = scmp.ne.s32.totalorder %s79, %s93
      %p95 = scmp.eq.s32.totalorder %s27, 0
      %p96 = por %p94, %p95
      %s98 = sadd.s32 %s97, 1
      %p101 = scmp.eq.s32.totalorder %s21, 1
      %p102 = scmp.ne.s32.totalorder %s97, %s99
      %p103 = scmp.eq.s32.totalorder %s21, 0
      %p104 = por %p102, %p103
      %p105 = scmp.ne.s32.totalorder %s97, %s99
      %p106 = scmp.eq.s32.totalorder %s26, 1
      %p107 = por %p105, %p106
      %p108 = scmp.ne.s32.totalorder %s99, %s100
      %p109 = scmp.eq.s32.totalorder %s26, 0
      %p110 = por %p108, %p109
      %p111 = scmp.ne.s32.totalorder %s99, %s100
      %p112 = scmp.eq.s32.totalorder %s27, 1
      %p113 = por %p111, %p112
      %p115 = scmp.ne.s32.totalorder %s100, %s114
      %p116 = scmp.eq.s32.totalorder %s27, 0
      %p117 = por %p115, %p116
      %s119 = sadd.s32 %s118, 1
      %p122 = scmp.eq.s32.totalorder %s21, 1
      %p123 = scmp.ne.s32.totalorder %s118, %s120
      %p124 = scmp.eq.s32.totalorder %s21, 0
      %p125 = por %p123, %p124
      %p126 = scmp.ne.s32.totalorder %s118, %s120
      %p127 = scmp.eq.s32.totalorder %s26, 1
      %p128 = por %p126, %p127
      %p129 = scmp.ne.s32.totalorder %s120, %s121
      %p130 = scmp.eq.s32.totalorder %s26, 0
      %p131 = por %p129, %p130
      %p132 = scmp.ne.s32.totalorder %s120, %s121
      %p133 = scmp.eq.s32.totalorder %s27, 1
      %p134 = por %p132, %p133
      %p136 = scmp.ne.s32.totalorder %s121, %s135
      %p137 = scmp.eq.s32.totalorder %s27, 0
      %p138 = por %p136, %p137
      %s140 = sadd.s32 %s139, 1
      %p143 = scmp.eq.s32.totalorder %s21, 1
      %p144 = scmp.ne.s32.totalorder %s139, %s141
      %p145 = scmp.eq.s32.totalorder %s21, 0
      %p146 = por %p144, %p145
      %p147 = scmp.ne.s32.totalorder %s139, %s141
      %p148 = scmp.eq.s32.totalorder %s26, 1
      %p149 = por %p147, %p148
      %p150 = scmp.ne.s32.totalorder %s141, %s142
      %p151 = scmp.eq.s32.totalorder %s26, 0
      %p152 = por %p150, %p151
      %p153 = scmp.ne.s32.totalorder %s141, %s142
      %p154 = scmp.eq.s32.totalorder %s27, 1
      %p155 = por %p153, %p154
      %p157 = scmp.ne.s32.totalorder %s142, %s156
      %p158 = scmp.eq.s32.totalorder %s27, 0
      %p159 = por %p157, %p158
      %s161 = sadd.s32 %s160, 1
      %p164 = scmp.eq.s32.totalorder %s21, 1
      %p165 = scmp.ne.s32.totalorder %s160, %s162
      %p166 = scmp.eq.s32.totalorder %s21, 0
      %p167 = por %p165, %p166
      %p168 = scmp.ne.s32.totalorder %s160, %s162
      %p169 = scmp.eq.s32.totalorder %s26, 1
      %p170 = por %p168, %p169
      %p171 = scmp.ne.s32.totalorder %s162, %s163
      %p172 = scmp.eq.s32.totalorder %s26, 0
      %p173 = por %p171, %p172
      %p174 = scmp.ne.s32.totalorder %s162, %s163
      %p175 = scmp.eq.s32.totalorder %s27, 1
      %p176 = por %p174, %p175
      %p178 = scmp.ne.s32.totalorder %s163, %s177
      %p179 = scmp.eq.s32.totalorder %s27, 0
      %p180 = por %p178, %p179
      %s182 = sadd.s32 %s181, 1
      %p185 = scmp.eq.s32.totalorder %s21, 1
      %p186 = scmp.ne.s32.totalorder %s181, %s183
      %p187 = scmp.eq.s32.totalorder %s21, 0
      %p188 = por %p186, %p187
      %p189 = scmp.ne.s32.totalorder %s181, %s183
      %p190 = scmp.eq.s32.totalorder %s26, 1
      %p191 = por %p189, %p190
      %p192 = scmp.ne.s32.totalorder %s183, %s184
      %p193 = scmp.eq.s32.totalorder %s26, 0
      %p194 = por %p192, %p193
      %p195 = scmp.ne.s32.totalorder %s183, %s184
      %p196 = scmp.eq.s32.totalorder %s27, 1
      %p197 = por %p195, %p196
      %p199 = scmp.ne.s32.totalorder %s184, %s198
      %p200 = scmp.eq.s32.totalorder %s27, 0
      %p201 = por %p199, %p200
      %s203 = sadd.s32 %s202, 1
      %p206 = scmp.eq.s32.totalorder %s21, 1
      %p207 = scmp.ne.s32.totalorder %s202, %s204
      %p208 = scmp.eq.s32.totalorder %s21, 0
      %p209 = por %p207, %p208
      %p210 = scmp.ne.s32.totalorder %s202, %s204
      %p211 = scmp.eq.s32.totalorder %s26, 1
      %p212 = por %p210, %p211
      %p213 = scmp.ne.s32.totalorder %s204, %s205
      %p214 = scmp.eq.s32.totalorder %s26, 0
      %p215 = por %p213, %p214
      %p216 = scmp.ne.s32.totalorder %s204, %s205
      %p217 = scmp.eq.s32.totalorder %s27, 1
      %p218 = por %p216, %p217
      %p220 = scmp.ne.s32.totalorder %s205, %s219
      %p221 = scmp.eq.s32.totalorder %s27, 0
      %p222 = por %p220, %p221
      %s223 = ssub.s32 %s21, %s28
      %p224 = scmp.eq.s32.totalorder %s223, 0
      %s226 = sadd.s32 %s225, 1
      %s227 = scalar_select %p224, %s225, %s226
      %p230 = pneg %p224
      %p231 = scmp.eq.s32.totalorder %s21, 1
      %p232 = por %p230, %p231
      %p233 = scmp.ne.s32.totalorder %s225, %s228
      %p234 = scmp.eq.s32.totalorder %s21, 0
      %p235 = por %p233, %p234
      %p236 = scmp.ne.s32.totalorder %s225, %s228
      %p237 = scmp.eq.s32.totalorder %s26, 1
      %p238 = por %p236, %p237
      %p239 = scmp.ne.s32.totalorder %s228, %s229
      %p240 = scmp.eq.s32.totalorder %s26, 0
      %p241 = por %p239, %p240
      %p242 = scmp.ne.s32.totalorder %s228, %s229
      %p243 = scmp.eq.s32.totalorder %s27, 1
      %p244 = por %p242, %p243
      %p246 = scmp.ne.s32.totalorder %s229, %s245
      %p247 = scmp.eq.s32.totalorder %s27, 0
      %p248 = por %p246, %p247
      %p249 = scmp.le.s32.totalorder 1, %s21
      %p250 = scmp.lt.s32.totalorder %s21, 3
      %p251 = pnand %p249, %p250
      %p252 = pneg %p251
      // Predicated region
      $region9: #{tpu_custom_call.1} parent=5 // pred_check
        _
      $region10: #{tpu_custom_call.1} parent=5 // pred_check_branch
        %254 = sbr.rel (%p251) target = $region12
      $region11: #{tpu_custom_call.1} parent=5 // pred_region
        %s255 = ssub.s32 %s21, 1
        // Predicated region
        $region13: #{tpu_custom_call.1} parent=11 // pred_check
          %p256 = pneg %p68
        $region14: #{tpu_custom_call.1} parent=11 // pred_check_branch
          %258 = sbr.rel (%p256) target = $region16
        $region15: #{tpu_custom_call.1} parent=11 // pred_region
          _
        $region16: #{tpu_custom_call.1} parent=11 // pred_fallthru
          _
        // Predicated region
        $region17: #{tpu_custom_call.1} parent=11 // pred_check
          %p259 = pneg %p89
        $region18: #{tpu_custom_call.1} parent=11 // pred_check_branch
          %261 = sbr.rel (%p259) target = $region20
        $region19: #{tpu_custom_call.1} parent=11 // pred_region
          _
        $region20: #{tpu_custom_call.1} parent=11 // pred_fallthru
          _
        // Predicated region
        $region21: #{tpu_custom_call.1} parent=11 // pred_check
          %p262 = pneg %p110
        $region22: #{tpu_custom_call.1} parent=11 // pred_check_branch
          %264 = sbr.rel (%p262) target = $region24
        $region23: #{tpu_custom_call.1} parent=11 // pred_region
          _
        $region24: #{tpu_custom_call.1} parent=11 // pred_fallthru
          _
        // Predicated region
        $region25: #{tpu_custom_call.1} parent=11 // pred_check
          %p265 = pneg %p131
        $region26: #{tpu_custom_call.1} parent=11 // pred_check_branch
          %267 = sbr.rel (%p265) target = $region28
        $region27: #{tpu_custom_call.1} parent=11 // pred_region
          _
        $region28: #{tpu_custom_call.1} parent=11 // pred_fallthru
          _
        // Predicated region
        $region29: #{tpu_custom_call.1} parent=11 // pred_check
          %p268 = pneg %p152
        $region30: #{tpu_custom_call.1} parent=11 // pred_check_branch
          %270 = sbr.rel (%p268) target = $region32
        $region31: #{tpu_custom_call.1} parent=11 // pred_region
          _
        $region32: #{tpu_custom_call.1} parent=11 // pred_fallthru
          _
        // Predicated region
        $region33: #{tpu_custom_call.1} parent=11 // pred_check
          %p271 = pneg %p173
        $region34: #{tpu_custom_call.1} parent=11 // pred_check_branch
          %273 = sbr.rel (%p271) target = $region36
        $region35: #{tpu_custom_call.1} parent=11 // pred_region
          _
        $region36: #{tpu_custom_call.1} parent=11 // pred_fallthru
          _
        // Predicated region
        $region37: #{tpu_custom_call.1} parent=11 // pred_check
          %p274 = pneg %p194
        $region38: #{tpu_custom_call.1} parent=11 // pred_check_branch
          %276 = sbr.rel (%p274) target = $region40
        $region39: #{tpu_custom_call.1} parent=11 // pred_region
          _
        $region40: #{tpu_custom_call.1} parent=11 // pred_fallthru
          _
        // Predicated region
        $region41: #{tpu_custom_call.1} parent=11 // pred_check
          %p277 = pneg %p215
        $region42: #{tpu_custom_call.1} parent=11 // pred_check_branch
          %279 = sbr.rel (%p277) target = $region44
        $region43: #{tpu_custom_call.1} parent=11 // pred_region
          %s281 = ssub.s32 16, 16
          %282 = vsyncadd [#allocation5], %s281
          %s284 = sshll.u32 %s8, 4
          %s285 = int_to_ptr.vmem [resolvable:$true] %s284
          %287 = dma.vmem_to_smem %s285, 16, [#allocation3], [#allocation5]
        $region44: #{tpu_custom_call.1} parent=11 // pred_fallthru
          _
      $region12: #{tpu_custom_call.1} parent=5 // pred_fallthru
        _
      %p288 = scmp.lt.s32.totalorder %s21, 2
      // Predicated region
      $region45: #{tpu_custom_call.1} parent=5 // pred_check
        %p289 = pneg %p288
      $region46: #{tpu_custom_call.1} parent=5 // pred_check_branch
        %291 = sbr.rel (%p289) target = $region48
      $region47: #{tpu_custom_call.1} parent=5 // pred_region
        // Predicated region
        $region49: #{tpu_custom_call.1} parent=47 // pred_check
          %p292 = pneg %p41
        $region50: #{tpu_custom_call.1} parent=47 // pred_check_branch
          %294 = sbr.rel (%p292) target = $region52
        $region51: #{tpu_custom_call.1} parent=47 // pred_region
          %p295 = scmp.lt.s32.totalorder %s21, 1
          %s296 = scalar_select %p295, %s21, 1
          %s297 = smul.addr %s296, 2
          %s298 = scalar_lea.vmem %s0, %s297
        $region52: #{tpu_custom_call.1} parent=47 // pred_fallthru
          _
      $region48: #{tpu_custom_call.1} parent=5 // pred_fallthru
        _
      %p299 = scmp.le.s32.totalorder 1, %s21
      %p300 = scmp.lt.s32.totalorder %s21, 3
      %p301 = pnand %p299, %p300
      %p302 = pneg %p301
      // Predicated region
      $region53: #{tpu_custom_call.1} parent=5 // pred_check
        _
      $region54: #{tpu_custom_call.1} parent=5 // pred_check_branch
        %304 = sbr.rel (%p301) target = $region56
      $region55: #{tpu_custom_call.1} parent=5 // pred_region
        %s305 = ssub.s32 %s21, 1
        // Predicated region
        $region57: #{tpu_custom_call.1} parent=55 // pred_check
          %p306 = pneg %p215
        $region58: #{tpu_custom_call.1} parent=55 // pred_check_branch
          %308 = sbr.rel (%p306) target = $region60
        $region59: #{tpu_custom_call.1} parent=55 // pred_region
          %309 = dma.done [#allocation5], 16
        $region60: #{tpu_custom_call.1} parent=55 // pred_fallthru
          _
        %310 = sfence
        %p311 = scmp.lt.s32.totalorder %s26, 1
        %s312 = scalar_select %p311, %s26, 1
        %s313 = smul.addr %s312, 2
        %s314 = scalar_lea.vmem %s0, %s313
        %p315 = pneg %p47
        %p316 = pneg %p44
        %p317 = pneg %p68
        %p318 = pneg %p65
        %p319 = pneg %p89
        %p320 = pneg %p86
        %p321 = pneg %p110
        %p322 = pneg %p107
        %p323 = pneg %p131
        %p324 = pneg %p128
        %p325 = pneg %p152
        %p326 = pneg %p149
        %p327 = pneg %p173
        %p328 = pneg %p170
        %p329 = pneg %p194
        %p330 = pneg %p191
        %p331 = pneg %p215
        %p332 = pneg %p212
        %p333 = pneg %p241
        %p334 = pneg %p238
        %s335 = sand.u32 %s228, 1
        %s336 = scalar_lea.sflag [#allocation4], %s335
        %s337 = sand.u32 %s228, 1
        %s338 = smul.addr %s337, 2
        %s339 = scalar_lea.vmem [#allocation6], %s338
        %p340 = scmp.lt.s32.totalorder %s26, 1
        %s341 = scalar_select %p340, %s26, 1
        %s342 = smul.addr %s341, 2
        %s343 = scalar_lea.vmem %s0, %s342
        %v344 = vlaneseq
        %v345 = vand.u32 %v344, 127
        %v346 = vadd.s32 %v345, 128
        %vm347 = vcmp.lt.s32.totalorder %v345, 0
        %v348 = vsub.s32 0, %v345
        %v349 = vsel %vm347, %v348, %v345
        %v350 = vshrl.u32 %v349, 4
        %v351 = vand.u32 %v349, 15
        %v352 = vsub.s32 0, %v351
        %v353 = vsel %vm347, %v352, %v351
        %vm354 = vcmp.lt.s32.totalorder %v346, 0
        %v355 = vsub.s32 0, %v346
        %v356 = vsel %vm354, %v355, %v346
        %v357 = vshrl.u32 %v356, 4
        %v358 = vand.u32 %v356, 15
        %v359 = vsub.s32 0, %v358
        %v360 = vsel %vm354, %v359, %v358
        %vm361 = vcmp.ne.s32.totalorder %v353, 0
        %vm362 = vcmp.ne.s32.totalorder %v360, 0
        %vm363 = vcmp.lt.s32.totalorder %v353, 0
        %vm364 = vcmp.lt.s32.totalorder %v360, 0
        %vm365 = vmand %vm363, %vm361
        %vm366 = vmand %vm364, %vm362
        %v367 = vadd.s32 %v353, 16
        %v368 = vadd.s32 %v360, 16
        %v369 = vsel %vm365, %v367, %v353
        %v370 = vsel %vm366, %v368, %v360
        %vm371 = vcmp.eq.s32.totalorder %v369, 0
        %vm372 = vcmp.eq.s32.totalorder %v370, 0
        %vm373 = vcmp.eq.s32.totalorder %v369, 15
        %vm374 = vcmp.eq.s32.totalorder %v370, 15
        %vm375 = vcmp.lt.s32.totalorder %v345, 16
        %vm376 = vcmp.lt.s32.totalorder %v346, 16
        %vm377 = vcmp.ge.s32.totalorder %v345, 240
        %vm378 = vcmp.ge.s32.totalorder %v346, 240
        %v379 = vld [vmem:[%s343] sm:$0x3]
        %v381 = vlaneseq
        %v382 = vshrl.u32 %v381, 7
        %v383 = vsub.s32 0, %v382
        %v384 = vrot.slane %v379, %v383
        %v385 = vlaneseq
        %v386 = vshrl.u32 %v385, 7
        %v387 = vsub.s32 1, %v386
        %v388 = vrot.slane %v379, %v387
        %391 = vrot.lane.b32.xlu0 %v384, 112
        %v392 = vpop.permute.xlu0 %391
        %393 = vrot.lane.b32.xlu0 %v388, 112
        %v394 = vpop.permute.xlu0 %393
        %vm395 = vcmp.lt.s32.totalorder %v345, 112
        %v396 = vsel %vm395, %v392, %v394
        %v397 = vsel %vm395, %v394, %v392
        %398 = vrot.lane.b32.xlu0 %v384, 16
        %v399 = vpop.permute.xlu0 %398
        %400 = vrot.lane.b32.xlu0 %v388, 16
        %v401 = vpop.permute.xlu0 %400
        %v402 = vsel %vm375, %v399, %v401
        %v403 = vsel %vm375, %v401, %v399
        %v404 = vsel %vm375, %v396, %v403
        %v405 = vsel %vm376, %v397, %v402
        %v406 = vsel %vm377, %v403, %v396
        %v407 = vsel %vm378, %v402, %v397
        %408 = vrot.lane.b32.xlu0 %v404, 127
        %v409 = vpop.permute.xlu0 %408
        %410 = vrot.lane.b32.xlu0 %v405, 127
        %v411 = vpop.permute.xlu0 %410
        %vm412 = vcmp.lt.s32.totalorder %v345, 127
        %v413 = vsel %vm412, %v409, %v411
        %v414 = vsel %vm412, %v411, %v409
        %415 = vrot.lane.b32.xlu0 %v404, 1
        %v416 = vpop.permute.xlu0 %415
        %417 = vrot.lane.b32.xlu0 %v405, 1
        %v418 = vpop.permute.xlu0 %417
        %vm419 = vcmp.lt.s32.totalorder %v345, 1
        %v420 = vsel %vm419, %v416, %v418
        %v421 = vsel %vm419, %v418, %v416
        %v422 = vsel %vm371, %v413, %v421
        %v423 = vsel %vm372, %v414, %v420
        %v424 = vsel %vm373, %v421, %v413
        %v425 = vsel %vm374, %v420, %v414
        %426 = vrot.lane.b32.xlu0 %v384, 127
        %v427 = vpop.permute.xlu0 %426
        %428 = vrot.lane.b32.xlu0 %v388, 127
        %v429 = vpop.permute.xlu0 %428
        %v430 = vsel %vm412, %v427, %v429
        %v431 = vsel %vm412, %v429, %v427
        %432 = vrot.lane.b32.xlu0 %v384, 1
        %v433 = vpop.permute.xlu0 %432
        %434 = vrot.lane.b32.xlu0 %v388, 1
        %v435 = vpop.permute.xlu0 %434
        %v436 = vsel %vm419, %v433, %v435
        %v437 = vsel %vm419, %v435, %v433
        %v438 = vsel %vm371, %v430, %v437
        %v439 = vsel %vm372, %v431, %v436
        %v440 = vsel %vm373, %v437, %v430
        %v441 = vsel %vm374, %v436, %v431
        %442 = vrot.lane.b32.xlu0 %v406, 127
        %v443 = vpop.permute.xlu0 %442
        %444 = vrot.lane.b32.xlu0 %v407, 127
        %v445 = vpop.permute.xlu0 %444
        %v446 = vsel %vm412, %v443, %v445
        %v447 = vsel %vm412, %v445, %v443
        %448 = vrot.lane.b32.xlu0 %v406, 1
        %v449 = vpop.permute.xlu0 %448
        %450 = vrot.lane.b32.xlu0 %v407, 1
        %v451 = vpop.permute.xlu0 %450
        %v452 = vsel %vm419, %v449, %v451
        %v453 = vsel %vm419, %v451, %v449
        %v454 = vsel %vm371, %v446, %v453
        %v455 = vsel %vm372, %v447, %v452
        %v456 = vsel %vm373, %v453, %v446
        %v457 = vsel %vm374, %v452, %v447
        %v458 = vld [vmem:[%s1] sm:$0xff]
        %v459 = vld [vmem:[%s1 + $0x8] sm:$0xff]
        %461 = vset.pattern.permute.xlu0 0
        %462 = vperm.xlu0 %461, %v458
        %v463 = vpop.permute.xlu0 %462
        %466 = vset.pattern.permute.xlu0 0
        %467 = vperm.xlu0 %466, %v459
        %v468 = vpop.permute.xlu0 %467
        %v470 = vlaneseq
        %v471 = vshrl.u32 %v470, 7
        %v472 = vsub.s32 0, %v471
        %v473 = vrot.slane %v422, %v472
        %v474 = vlaneseq
        %v475 = vshrl.u32 %v474, 7
        %v476 = vsub.s32 0, %v475
        %v477 = vrot.slane %v423, %v476
        %v478 = vmul.f32 %v463, %v473
        %v479 = vmul.f32 %v463, %v477
        %v480 = vmul.f32 %v468, %v473
        %v481 = vmul.f32 %v468, %v477
        %482 = vset.pattern.permute.xlu0 1
        %483 = vperm.xlu0 %482, %v458
        %v484 = vpop.permute.xlu0 %483
        %486 = vset.pattern.permute.xlu0 1
        %487 = vperm.xlu0 %486, %v459
        %v488 = vpop.permute.xlu0 %487
        %v490 = vlaneseq
        %v491 = vshrl.u32 %v490, 7
        %v492 = vsub.s32 0, %v491
        %v493 = vrot.slane %v404, %v492
        %v494 = vlaneseq
        %v495 = vshrl.u32 %v494, 7
        %v496 = vsub.s32 0, %v495
        %v497 = vrot.slane %v405, %v496
        %v498 = vmul.f32 %v484, %v493
        %v499 = vmul.f32 %v484, %v497
        %v500 = vmul.f32 %v488, %v493
        %v501 = vmul.f32 %v488, %v497
        %v502 = vadd.f32 %v478, %v498
        %v503 = vadd.f32 %v479, %v499
        %v504 = vadd.f32 %v480, %v500
        %v505 = vadd.f32 %v481, %v501
        %506 = vset.pattern.permute.xlu0 2
        %507 = vperm.xlu0 %506, %v458
        %v508 = vpop.permute.xlu0 %507
        %510 = vset.pattern.permute.xlu0 2
        %511 = vperm.xlu0 %510, %v459
        %v512 = vpop.permute.xlu0 %511
        %v514 = vlaneseq
        %v515 = vshrl.u32 %v514, 7
        %v516 = vsub.s32 0, %v515
        %v517 = vrot.slane %v424, %v516
        %v518 = vlaneseq
        %v519 = vshrl.u32 %v518, 7
        %v520 = vsub.s32 0, %v519
        %v521 = vrot.slane %v425, %v520
        %v522 = vmul.f32 %v508, %v517
        %v523 = vmul.f32 %v508, %v521
        %v524 = vmul.f32 %v512, %v517
        %v525 = vmul.f32 %v512, %v521
        %v526 = vadd.f32 %v502, %v522
        %v527 = vadd.f32 %v503, %v523
        %v528 = vadd.f32 %v504, %v524
        %v529 = vadd.f32 %v505, %v525
        %530 = vset.pattern.permute.xlu0 3
        %531 = vperm.xlu0 %530, %v458
        %v532 = vpop.permute.xlu0 %531
        %534 = vset.pattern.permute.xlu0 3
        %535 = vperm.xlu0 %534, %v459
        %v536 = vpop.permute.xlu0 %535
        %v538 = vlaneseq
        %v539 = vshrl.u32 %v538, 7
        %v540 = vsub.s32 0, %v539
        %v541 = vrot.slane %v438, %v540
        %v542 = vlaneseq
        %v543 = vshrl.u32 %v542, 7
        %v544 = vsub.s32 0, %v543
        %v545 = vrot.slane %v439, %v544
        %v546 = vmul.f32 %v532, %v541
        %v547 = vmul.f32 %v532, %v545
        %v548 = vmul.f32 %v536, %v541
        %v549 = vmul.f32 %v536, %v545
        %v550 = vadd.f32 %v526, %v546
        %v551 = vadd.f32 %v527, %v547
        %v552 = vadd.f32 %v528, %v548
        %v553 = vadd.f32 %v529, %v549
        %554 = vset.pattern.permute.xlu0 4
        %555 = vperm.xlu0 %554, %v458
        %v556 = vpop.permute.xlu0 %555
        %558 = vset.pattern.permute.xlu0 4
        %559 = vperm.xlu0 %558, %v459
        %v560 = vpop.permute.xlu0 %559
        %v562 = vmul.f32 %v556, %v384
        %v563 = vmul.f32 %v556, %v388
        %v564 = vmul.f32 %v560, %v384
        %v565 = vmul.f32 %v560, %v388
        %v566 = vadd.f32 %v550, %v562
        %v567 = vadd.f32 %v551, %v563
        %v568 = vadd.f32 %v552, %v564
        %v569 = vadd.f32 %v553, %v565
        %570 = vset.pattern.permute.xlu0 5
        %571 = vperm.xlu0 %570, %v458
        %v572 = vpop.permute.xlu0 %571
        %574 = vset.pattern.permute.xlu0 5
        %575 = vperm.xlu0 %574, %v459
        %v576 = vpop.permute.xlu0 %575
        %v578 = vlaneseq
        %v579 = vshrl.u32 %v578, 7
        %v580 = vsub.s32 0, %v579
        %v581 = vrot.slane %v440, %v580
        %v582 = vlaneseq
        %v583 = vshrl.u32 %v582, 7
        %v584 = vsub.s32 0, %v583
        %v585 = vrot.slane %v441, %v584
        %v586 = vmul.f32 %v572, %v581
        %v587 = vmul.f32 %v572, %v585
        %v588 = vmul.f32 %v576, %v581
        %v589 = vmul.f32 %v576, %v585
        %v590 = vadd.f32 %v566, %v586
        %v591 = vadd.f32 %v567, %v587
        %v592 = vadd.f32 %v568, %v588
        %v593 = vadd.f32 %v569, %v589
        %594 = vset.pattern.permute.xlu0 6
        %595 = vperm.xlu0 %594, %v458
        %v596 = vpop.permute.xlu0 %595
        %598 = vset.pattern.permute.xlu0 6
        %599 = vperm.xlu0 %598, %v459
        %v600 = vpop.permute.xlu0 %599
        %v602 = vlaneseq
        %v603 = vshrl.u32 %v602, 7
        %v604 = vsub.s32 0, %v603
        %v605 = vrot.slane %v454, %v604
        %v606 = vlaneseq
        %v607 = vshrl.u32 %v606, 7
        %v608 = vsub.s32 0, %v607
        %v609 = vrot.slane %v455, %v608
        %v610 = vmul.f32 %v596, %v605
        %v611 = vmul.f32 %v596, %v609
        %v612 = vmul.f32 %v600, %v605
        %v613 = vmul.f32 %v600, %v609
        %v614 = vadd.f32 %v590, %v610
        %v615 = vadd.f32 %v591, %v611
        %v616 = vadd.f32 %v592, %v612
        %v617 = vadd.f32 %v593, %v613
        %618 = vset.pattern.permute.xlu0 7
        %619 = vperm.xlu0 %618, %v458
        %v620 = vpop.permute.xlu0 %619
        %622 = vset.pattern.permute.xlu0 7
        %623 = vperm.xlu0 %622, %v459
        %v624 = vpop.permute.xlu0 %623
        %v626 = vlaneseq
        %v627 = vshrl.u32 %v626, 7
        %v628 = vsub.s32 0, %v627
        %v629 = vrot.slane %v406, %v628
        %v630 = vlaneseq
        %v631 = vshrl.u32 %v630, 7
        %v632 = vsub.s32 0, %v631
        %v633 = vrot.slane %v407, %v632
        %v634 = vmul.f32 %v620, %v629
        %v635 = vmul.f32 %v620, %v633
        %v636 = vmul.f32 %v624, %v629
        %v637 = vmul.f32 %v624, %v633
        %v638 = vadd.f32 %v614, %v634
        %v639 = vadd.f32 %v615, %v635
        %v640 = vadd.f32 %v616, %v636
        %v641 = vadd.f32 %v617, %v637
        %642 = vset.pattern.permute.xlu0 8
        %643 = vperm.xlu0 %642, %v458
        %v644 = vpop.permute.xlu0 %643
        %646 = vset.pattern.permute.xlu0 8
        %647 = vperm.xlu0 %646, %v459
        %v648 = vpop.permute.xlu0 %647
        %v650 = vlaneseq
        %v651 = vshrl.u32 %v650, 7
        %v652 = vsub.s32 0, %v651
        %v653 = vrot.slane %v456, %v652
        %v654 = vlaneseq
        %v655 = vshrl.u32 %v654, 7
        %v656 = vsub.s32 0, %v655
        %v657 = vrot.slane %v457, %v656
        %v658 = vmul.f32 %v644, %v653
        %v659 = vmul.f32 %v644, %v657
        %v660 = vmul.f32 %v648, %v653
        %v661 = vmul.f32 %v648, %v657
        %v662 = vadd.f32 %v638, %v658
        %v663 = vadd.f32 %v639, %v659
        %v664 = vadd.f32 %v640, %v660
        %v665 = vadd.f32 %v641, %v661
        %v666 = vld [vmem:[%s2] sm:$0xff]
        %v667 = vld [vmem:[%s2 + $0x8] sm:$0xff]
        %669 = vset.pattern.permute.xlu0 0
        %670 = vperm.xlu0 %669, %v666
        %v671 = vpop.permute.xlu0 %670
        %674 = vset.pattern.permute.xlu0 0
        %675 = vperm.xlu0 %674, %v667
        %v676 = vpop.permute.xlu0 %675
        %v678 = vadd.f32 %v662, %v671
        %v679 = vadd.f32 %v663, %v671
        %v680 = vadd.f32 %v664, %v676
        %v681 = vadd.f32 %v665, %v676
        %s682 = sld [smem:[#allocation3]]
        %vm683 = vcmp.ge.f32.partialorder %v678, 0.0
        %vm684 = vcmp.ge.f32.partialorder %v679, 0.0
        %vm685 = vcmp.ge.f32.partialorder %v680, 0.0
        %vm686 = vcmp.ge.f32.partialorder %v681, 0.0
        %v687 = vstv %s682
        %v688 = vmul.f32 %v687, %v678
        %v689 = vmul.f32 %v687, %v679
        %v690 = vmul.f32 %v687, %v680
        %v691 = vmul.f32 %v687, %v681
        %v692 = vsel %vm683, %v678, %v688
        %v693 = vsel %vm684, %v679, %v689
        %v694 = vsel %vm685, %v680, %v690
        %v695 = vsel %vm686, %v681, %v691
        %v696 = vld [vmem:[%s3] sm:$0xff]
        %v697 = vld [vmem:[%s3 + $0x8] sm:$0xff]
        %v698 = vld [vmem:[%s3 + $0x10] sm:$0xff]
        %v699 = vld [vmem:[%s3 + $0x18] sm:$0xff]
        %700 = vrot.lane.b32.xlu0 %v692, 112
        %v701 = vpop.permute.xlu0 %700
        %702 = vrot.lane.b32.xlu0 %v694, 112
        %v703 = vpop.permute.xlu0 %702
        %704 = vrot.lane.b32.xlu0 %v693, 112
        %v705 = vpop.permute.xlu0 %704
        %706 = vrot.lane.b32.xlu0 %v695, 112
        %v707 = vpop.permute.xlu0 %706
        %v708 = vsel %vm395, %v701, %v705
        %v709 = vsel %vm395, %v703, %v707
        %v710 = vsel %vm395, %v705, %v701
        %v711 = vsel %vm395, %v707, %v703
        %712 = vrot.lane.b32.xlu0 %v692, 16
        %v713 = vpop.permute.xlu0 %712
        %714 = vrot.lane.b32.xlu0 %v694, 16
        %v715 = vpop.permute.xlu0 %714
        %716 = vrot.lane.b32.xlu0 %v693, 16
        %v717 = vpop.permute.xlu0 %716
        %718 = vrot.lane.b32.xlu0 %v695, 16
        %v719 = vpop.permute.xlu0 %718
        %v720 = vsel %vm375, %v713, %v717
        %v721 = vsel %vm375, %v715, %v719
        %v722 = vsel %vm375, %v717, %v713
        %v723 = vsel %vm375, %v719, %v715
        %v724 = vsel %vm375, 1, 0
        %v725 = vsel %vm376, 1, 0
        %vm726 = vcmp.eq.s32.totalorder %v724, 1
        %vm727 = vcmp.eq.s32.totalorder %v725, 1
        %v728 = vsel %vm726, %v708, %v722
        %v729 = vsel %vm727, %v710, %v720
        %v730 = vsel %vm726, %v709, %v723
        %v731 = vsel %vm727, %v711, %v721
        %v732 = vsel %vm377, 1, 0
        %v733 = vsel %vm378, 1, 0
        %vm734 = vcmp.eq.s32.totalorder %v732, 1
        %vm735 = vcmp.eq.s32.totalorder %v733, 1
        %v736 = vsel %vm734, %v722, %v708
        %v737 = vsel %vm735, %v720, %v710
        %v738 = vsel %vm734, %v723, %v709
        %v739 = vsel %vm735, %v721, %v711
        %740 = vrot.lane.b32.xlu0 %v728, 127
        %v741 = vpop.permute.xlu0 %740
        %742 = vrot.lane.b32.xlu0 %v730, 127
        %v743 = vpop.permute.xlu0 %742
        %744 = vrot.lane.b32.xlu0 %v729, 127
        %v745 = vpop.permute.xlu0 %744
        %746 = vrot.lane.b32.xlu0 %v731, 127
        %v747 = vpop.permute.xlu0 %746
        %v748 = vsel %vm412, %v741, %v745
        %v749 = vsel %vm412, %v743, %v747
        %v750 = vsel %vm412, %v745, %v741
        %v751 = vsel %vm412, %v747, %v743
        %752 = vrot.lane.b32.xlu0 %v728, 1
        %v753 = vpop.permute.xlu0 %752
        %754 = vrot.lane.b32.xlu0 %v730, 1
        %v755 = vpop.permute.xlu0 %754
        %756 = vrot.lane.b32.xlu0 %v729, 1
        %v757 = vpop.permute.xlu0 %756
        %758 = vrot.lane.b32.xlu0 %v731, 1
        %v759 = vpop.permute.xlu0 %758
        %v760 = vsel %vm419, %v753, %v757
        %v761 = vsel %vm419, %v755, %v759
        %v762 = vsel %vm419, %v757, %v753
        %v763 = vsel %vm419, %v759, %v755
        %v764 = vsel %vm371, 1, 0
        %v765 = vsel %vm372, 1, 0
        %vm766 = vcmp.eq.s32.totalorder %v764, 1
        %vm767 = vcmp.eq.s32.totalorder %v765, 1
        %v768 = vsel %vm766, %v748, %v762
        %v769 = vsel %vm767, %v750, %v760
        %v770 = vsel %vm766, %v749, %v763
        %v771 = vsel %vm767, %v751, %v761
        %v772 = vsel %vm373, 1, 0
        %v773 = vsel %vm374, 1, 0
        %vm774 = vcmp.eq.s32.totalorder %v772, 1
        %vm775 = vcmp.eq.s32.totalorder %v773, 1
        %v776 = vsel %vm774, %v762, %v748
        %v777 = vsel %vm775, %v760, %v750
        %v778 = vsel %vm774, %v763, %v749
        %v779 = vsel %vm775, %v761, %v751
        %780 = vrot.lane.b32.xlu0 %v692, 127
        %v781 = vpop.permute.xlu0 %780
        %782 = vrot.lane.b32.xlu0 %v694, 127
        %v783 = vpop.permute.xlu0 %782
        %784 = vrot.lane.b32.xlu0 %v693, 127
        %v785 = vpop.permute.xlu0 %784
        %786 = vrot.lane.b32.xlu0 %v695, 127
        %v787 = vpop.permute.xlu0 %786
        %v788 = vsel %vm412, %v781, %v785
        %v789 = vsel %vm412, %v783, %v787
        %v790 = vsel %vm412, %v785, %v781
        %v791 = vsel %vm412, %v787, %v783
        %792 = vrot.lane.b32.xlu0 %v692, 1
        %v793 = vpop.permute.xlu0 %792
        %794 = vrot.lane.b32.xlu0 %v694, 1
        %v795 = vpop.permute.xlu0 %794
        %796 = vrot.lane.b32.xlu0 %v693, 1
        %v797 = vpop.permute.xlu0 %796
        %798 = vrot.lane.b32.xlu0 %v695, 1
        %v799 = vpop.permute.xlu0 %798
        %v800 = vsel %vm419, %v793, %v797
        %v801 = vsel %vm419, %v795, %v799
        %v802 = vsel %vm419, %v797, %v793
        %v803 = vsel %vm419, %v799, %v795
        %v804 = vsel %vm766, %v788, %v802
        %v805 = vsel %vm767, %v790, %v800
        %v806 = vsel %vm766, %v789, %v803
        %v807 = vsel %vm767, %v791, %v801
        %v808 = vsel %vm774, %v802, %v788
        %v809 = vsel %vm775, %v800, %v790
        %v810 = vsel %vm774, %v803, %v789
        %v811 = vsel %vm775, %v801, %v791
        %812 = vrot.lane.b32.xlu0 %v736, 127
        %v813 = vpop.permute.xlu0 %812
        %814 = vrot.lane.b32.xlu0 %v738, 127
        %v815 = vpop.permute.xlu0 %814
        %816 = vrot.lane.b32.xlu0 %v737, 127
        %v817 = vpop.permute.xlu0 %816
        %818 = vrot.lane.b32.xlu0 %v739, 127
        %v819 = vpop.permute.xlu0 %818
        %v820 = vsel %vm412, %v813, %v817
        %v821 = vsel %vm412, %v815, %v819
        %v822 = vsel %vm412, %v817, %v813
        %v823 = vsel %vm412, %v819, %v815
        %824 = vrot.lane.b32.xlu0 %v736, 1
        %v825 = vpop.permute.xlu0 %824
        %826 = vrot.lane.b32.xlu0 %v738, 1
        %v827 = vpop.permute.xlu0 %826
        %828 = vrot.lane.b32.xlu0 %v737, 1
        %v829 = vpop.permute.xlu0 %828
        %830 = vrot.lane.b32.xlu0 %v739, 1
        %v831 = vpop.permute.xlu0 %830
        %v832 = vsel %vm419, %v825, %v829
        %v833 = vsel %vm419, %v827, %v831
        %v834 = vsel %vm419, %v829, %v825
        %v835 = vsel %vm419, %v831, %v827
        %v836 = vsel %vm766, %v820, %v834
        %v837 = vsel %vm767, %v822, %v832
        %v838 = vsel %vm766, %v821, %v835
        %v839 = vsel %vm767, %v823, %v833
        %v840 = vsel %vm774, %v834, %v820
        %v841 = vsel %vm775, %v832, %v822
        %v842 = vsel %vm774, %v835, %v821
        %v843 = vsel %vm775, %v833, %v823
        %vm844 = vcmask 130048
        %v846 = vsel %vm844, %v697, 0
        %v849 = vsel %vm844, %v699, 0
        %851 = vmatprep.subr.mxu0 %v769
        %852 = vmatpush1.msra.mxu0 %v768
        %853 = vmatprep.subr.mxu0 %v771
        %854 = vmatpush1.msra.mxu0 %v770
        %855 = vmatprep.subr.mxu0 %v729
        %856 = vmatpush1.msra.mxu0 %v728
        %857 = vmatprep.subr.mxu0 %v731
        %858 = vmatpush1.msra.mxu0 %v730
        %859 = vmatprep.subr.mxu0 %v777
        %860 = vmatpush1.msra.mxu0 %v776
        %861 = vmatprep.subr.mxu0 %v779
        %862 = vmatpush1.msra.mxu0 %v778
        %863 = vmatprep.subr.mxu0 %v805
        %864 = vmatpush1.msra.mxu0 %v804
        %865 = vmatprep.subr.mxu0 %v807
        %866 = vmatpush1.msra.mxu0 %v806
        %867 = vmatprep.subr.mxu0 %v693
        %868 = vmatpush1.msra.mxu0 %v692
        %869 = vmatprep.subr.mxu0 %v695
        %870 = vmatpush1.msra.mxu0 %v694
        %871 = vmatprep.subr.mxu0 %v809
        %872 = vmatpush1.msra.mxu0 %v808
        %873 = vmatprep.subr.mxu0 %v811
        %874 = vmatpush1.msra.mxu0 %v810
        %875 = vmatprep.subr.mxu0 %v837
        %876 = vmatpush1.msra.mxu0 %v836
        %877 = vmatprep.subr.mxu0 %v839
        %878 = vmatpush1.msra.mxu0 %v838
        %879 = vmatprep.subr.mxu0 %v737
        %880 = vmatpush1.msra.mxu0 %v736
        %881 = vmatprep.subr.mxu0 %v739
        %882 = vmatpush1.msra.mxu0 %v738
        %883 = vmatprep.subr.mxu0 %v841
        %884 = vmatpush1.msra.mxu0 %v840
        %885 = vmatprep.subr.mxu0 %v843
        %886 = vmatpush1.msra.mxu0 %v842
        %887 = vmatprep.subr.mxu0 0.0
        %888 = vmatpush1.msra.mxu0 0.0
        %889 = vmatprep.subr.mxu0 0.0
        %890 = vmatpush1.msra.mxu0 0.0
        %891 = vmatprep.subr.mxu0 0.0
        %892 = vmatpush1.msra.mxu0 0.0
        %893 = vmatprep.subr.mxu0 0.0
        %894 = vmatpush1.msra.mxu0 0.0
        %895 = vmatprep.subr.mxu0 0.0
        %896 = vmatpush1.msra.mxu0 0.0
        %897 = vmatprep.subr.mxu0 0.0
        %898 = vmatpush1.msra.mxu0 0.0
        %899 = vmatprep.subr.mxu0 0.0
        %900 = vmatpush1.msra.mxu0 0.0
        %901 = vmatprep.subr.mxu0 0.0
        %902 = vmatpush1.msra.mxu0 0.0
        %903 = vmatprep.subr.mxu0 0.0
        %904 = vmatpush1.msra.mxu0 0.0
        %905 = vmatprep.subr.mxu0 0.0
        %906 = vmatpush1.msra.mxu0 0.0
        %907 = vmatprep.subr.mxu0 0.0
        %908 = vmatpush1.msra.mxu0 0.0
        %909 = vmatprep.subr.mxu0 0.0
        %910 = vmatpush1.msra.mxu0 0.0
        %911 = vmatprep.subr.mxu0 0.0
        %912 = vmatpush1.msra.mxu0 0.0
        %913 = vmatprep.subr.mxu0 0.0
        %914 = vmatpush1.msra.mxu0 0.0
        %915 = vmatprep.mubr.f32.mxu0 %v846
        %916 = vmatmul.mubr.f32.gmra.mrb[0].mxu0 %v696
        %v917 = vpop.f32.mrb[0].mxu0
        %v918 = vadd.f32 0.0, %v917
        %v919 = vpop.f32.mrb[0].mxu0
        %v920 = vadd.f32 0.0, %v919
        %921 = vmatprep.mubr.f32.mxu0 %v849
        %922 = vmatmul.mubr.f32.gmra.mrb[0].mxu0 %v698
        %v923 = vpop.f32.mrb[0].mxu0
        %v924 = vadd.f32 0.0, %v923
        %v925 = vpop.f32.mrb[0].mxu0
        %v926 = vadd.f32 0.0, %v925
        %927 = vdwg.mxu0
        %v928 = vadd.f32 %v918, %v920
        %929 = vadd.xlane.f32.xlu0 %v928
        %v930 = vpop.xlane.xlu0 %929
        %v931 = vadd.f32 %v924, %v926
        %932 = vadd.xlane.f32.xlu0 %v931
        %v933 = vpop.xlane.xlu0 %932
        %v934 = vrcp.pop 256.0
        %v935 = vmul.f32 %v930, %v934
        %v936 = vmul.f32 %v933, %v934
        %v937 = vmul.f32 %v918, %v918
        %v938 = vmul.f32 %v920, %v920
        %v939 = vmul.f32 %v924, %v924
        %v940 = vmul.f32 %v926, %v926
        %v941 = vadd.f32 %v937, %v938
        %942 = vadd.xlane.f32.xlu0 %v941
        %v943 = vpop.xlane.xlu0 %942
        %v944 = vadd.f32 %v939, %v940
        %945 = vadd.xlane.f32.xlu0 %v944
        %v946 = vpop.xlane.xlu0 %945
        %v947 = vmul.f32 %v943, %v934
        %v948 = vmul.f32 %v946, %v934
        %v949 = vmul.f32 %v935, %v935
        %v950 = vmul.f32 %v936, %v936
        %v951 = vsub.f32 %v947, %v949
        %v952 = vsub.f32 %v948, %v950
        %v953 = vld [vmem:[%s4] sm:$0xff]
        %v954 = vld [vmem:[%s4 + $0x8] sm:$0xff]
        %v955 = vadd.f32 %v951, 1e-05
        %v956 = vadd.f32 %v952, 1e-05
        %v957 = vrsqrt.pop %v955
        %v958 = vrsqrt.pop %v956
        %v959 = vmul.f32 %v953, %v957
        %v960 = vmul.f32 %v954, %v958
        %v961 = vld [vmem:[%s5] sm:$0xff]
        %v962 = vld [vmem:[%s5 + $0x8] sm:$0xff]
        %v963 = vmul.f32 %v935, %v959
        %v964 = vmul.f32 %v936, %v960
        %v965 = vsub.f32 %v961, %v963
        %v966 = vsub.f32 %v962, %v964
        %968 = vset.pattern.permute.xlu0 0
        %969 = vperm.xlu0 %968, %v959
        %v970 = vpop.permute.xlu0 %969
        %973 = vset.pattern.permute.xlu0 0
        %974 = vperm.xlu0 %973, %v960
        %v975 = vpop.permute.xlu0 %974
        %v977 = vmul.f32 %v918, %v970
        %v978 = vmul.f32 %v920, %v970
        %v979 = vmul.f32 %v924, %v975
        %v980 = vmul.f32 %v926, %v975
        %982 = vset.pattern.permute.xlu0 0
        %983 = vperm.xlu0 %982, %v965
        %v984 = vpop.permute.xlu0 %983
        %987 = vset.pattern.permute.xlu0 0
        %988 = vperm.xlu0 %987, %v966
        %v989 = vpop.permute.xlu0 %988
        %v991 = vadd.f32 %v977, %v984
        %v992 = vadd.f32 %v978, %v984
        %v993 = vadd.f32 %v979, %v989
        %v994 = vadd.f32 %v980, %v989
        %s995 = sld [smem:[#allocation3 + $0x1]]
        %vm996 = vcmp.ge.f32.partialorder %v991, 0.0
        %vm997 = vcmp.ge.f32.partialorder %v992, 0.0
        %vm998 = vcmp.ge.f32.partialorder %v993, 0.0
        %vm999 = vcmp.ge.f32.partialorder %v994, 0.0
        %v1000 = vstv %s995
        %v1001 = vmul.f32 %v1000, %v991
        %v1002 = vmul.f32 %v1000, %v992
        %v1003 = vmul.f32 %v1000, %v993
        %v1004 = vmul.f32 %v1000, %v994
        %v1005 = vsel %vm996, %v991, %v1001
        %v1006 = vsel %vm997, %v992, %v1002
        %v1007 = vsel %vm998, %v993, %v1003
        %v1008 = vsel %vm999, %v994, %v1004
        %s1009 = scalar_lea.vmem %s3, 32
        %v1010 = vld [vmem:[%s1009] sm:$0xff]
        %v1011 = vld [vmem:[%s1009 + $0x8] sm:$0xff]
        %v1012 = vld [vmem:[%s1009 + $0x10] sm:$0xff]
        %v1013 = vld [vmem:[%s1009 + $0x18] sm:$0xff]
        %1014 = vrot.lane.b32.xlu0 %v1005, 112
        %v1015 = vpop.permute.xlu0 %1014
        %1016 = vrot.lane.b32.xlu0 %v1007, 112
        %v1017 = vpop.permute.xlu0 %1016
        %1018 = vrot.lane.b32.xlu0 %v1006, 112
        %v1019 = vpop.permute.xlu0 %1018
        %1020 = vrot.lane.b32.xlu0 %v1008, 112
        %v1021 = vpop.permute.xlu0 %1020
        %v1022 = vsel %vm395, %v1015, %v1019
        %v1023 = vsel %vm395, %v1017, %v1021
        %v1024 = vsel %vm395, %v1019, %v1015
        %v1025 = vsel %vm395, %v1021, %v1017
        %1026 = vrot.lane.b32.xlu0 %v1005, 16
        %v1027 = vpop.permute.xlu0 %1026
        %1028 = vrot.lane.b32.xlu0 %v1007, 16
        %v1029 = vpop.permute.xlu0 %1028
        %1030 = vrot.lane.b32.xlu0 %v1006, 16
        %v1031 = vpop.permute.xlu0 %1030
        %1032 = vrot.lane.b32.xlu0 %v1008, 16
        %v1033 = vpop.permute.xlu0 %1032
        %v1034 = vsel %vm375, %v1027, %v1031
        %v1035 = vsel %vm375, %v1029, %v1033
        %v1036 = vsel %vm375, %v1031, %v1027
        %v1037 = vsel %vm375, %v1033, %v1029
        %v1038 = vsel %vm726, %v1022, %v1036
        %v1039 = vsel %vm727, %v1024, %v1034
        %v1040 = vsel %vm726, %v1023, %v1037
        %v1041 = vsel %vm727, %v1025, %v1035
        %v1042 = vsel %vm734, %v1036, %v1022
        %v1043 = vsel %vm735, %v1034, %v1024
        %v1044 = vsel %vm734, %v1037, %v1023
        %v1045 = vsel %vm735, %v1035, %v1025
        %1046 = vrot.lane.b32.xlu0 %v1038, 127
        %v1047 = vpop.permute.xlu0 %1046
        %1048 = vrot.lane.b32.xlu0 %v1040, 127
        %v1049 = vpop.permute.xlu0 %1048
        %1050 = vrot.lane.b32.xlu0 %v1039, 127
        %v1051 = vpop.permute.xlu0 %1050
        %1052 = vrot.lane.b32.xlu0 %v1041, 127
        %v1053 = vpop.permute.xlu0 %1052
        %v1054 = vsel %vm412, %v1047, %v1051
        %v1055 = vsel %vm412, %v1049, %v1053
        %v1056 = vsel %vm412, %v1051, %v1047
        %v1057 = vsel %vm412, %v1053, %v1049
        %1058 = vrot.lane.b32.xlu0 %v1038, 1
        %v1059 = vpop.permute.xlu0 %1058
        %1060 = vrot.lane.b32.xlu0 %v1040, 1
        %v1061 = vpop.permute.xlu0 %1060
        %1062 = vrot.lane.b32.xlu0 %v1039, 1
        %v1063 = vpop.permute.xlu0 %1062
        %1064 = vrot.lane.b32.xlu0 %v1041, 1
        %v1065 = vpop.permute.xlu0 %1064
        %v1066 = vsel %vm419, %v1059, %v1063
        %v1067 = vsel %vm419, %v1061, %v1065
        %v1068 = vsel %vm419, %v1063, %v1059
        %v1069 = vsel %vm419, %v1065, %v1061
        %v1070 = vsel %vm766, %v1054, %v1068
        %v1071 = vsel %vm767, %v1056, %v1066
        %v1072 = vsel %vm766, %v1055, %v1069
        %v1073 = vsel %vm767, %v1057, %v1067
        %v1074 = vsel %vm774, %v1068, %v1054
        %v1075 = vsel %vm775, %v1066, %v1056
        %v1076 = vsel %vm774, %v1069, %v1055
        %v1077 = vsel %vm775, %v1067, %v1057
        %1078 = vrot.lane.b32.xlu0 %v1005, 127
        %v1079 = vpop.permute.xlu0 %1078
        %1080 = vrot.lane.b32.xlu0 %v1007, 127
        %v1081 = vpop.permute.xlu0 %1080
        %1082 = vrot.lane.b32.xlu0 %v1006, 127
        %v1083 = vpop.permute.xlu0 %1082
        %1084 = vrot.lane.b32.xlu0 %v1008, 127
        %v1085 = vpop.permute.xlu0 %1084
        %v1086 = vsel %vm412, %v1079, %v1083
        %v1087 = vsel %vm412, %v1081, %v1085
        %v1088 = vsel %vm412, %v1083, %v1079
        %v1089 = vsel %vm412, %v1085, %v1081
        %1090 = vrot.lane.b32.xlu0 %v1005, 1
        %v1091 = vpop.permute.xlu0 %1090
        %1092 = vrot.lane.b32.xlu0 %v1007, 1
        %v1093 = vpop.permute.xlu0 %1092
        %1094 = vrot.lane.b32.xlu0 %v1006, 1
        %v1095 = vpop.permute.xlu0 %1094
        %1096 = vrot.lane.b32.xlu0 %v1008, 1
        %v1097 = vpop.permute.xlu0 %1096
        %v1098 = vsel %vm419, %v1091, %v1095
        %v1099 = vsel %vm419, %v1093, %v1097
        %v1100 = vsel %vm419, %v1095, %v1091
        %v1101 = vsel %vm419, %v1097, %v1093
        %v1102 = vsel %vm766, %v1086, %v1100
        %v1103 = vsel %vm767, %v1088, %v1098
        %v1104 = vsel %vm766, %v1087, %v1101
        %v1105 = vsel %vm767, %v1089, %v1099
        %v1106 = vsel %vm774, %v1100, %v1086
        %v1107 = vsel %vm775, %v1098, %v1088
        %v1108 = vsel %vm774, %v1101, %v1087
        %v1109 = vsel %vm775, %v1099, %v1089
        %1110 = vrot.lane.b32.xlu0 %v1042, 127
        %v1111 = vpop.permute.xlu0 %1110
        %1112 = vrot.lane.b32.xlu0 %v1044, 127
        %v1113 = vpop.permute.xlu0 %1112
        %1114 = vrot.lane.b32.xlu0 %v1043, 127
        %v1115 = vpop.permute.xlu0 %1114
        %1116 = vrot.lane.b32.xlu0 %v1045, 127
        %v1117 = vpop.permute.xlu0 %1116
        %v1118 = vsel %vm412, %v1111, %v1115
        %v1119 = vsel %vm412, %v1113, %v1117
        %v1120 = vsel %vm412, %v1115, %v1111
        %v1121 = vsel %vm412, %v1117, %v1113
        %1122 = vrot.lane.b32.xlu0 %v1042, 1
        %v1123 = vpop.permute.xlu0 %1122
        %1124 = vrot.lane.b32.xlu0 %v1044, 1
        %v1125 = vpop.permute.xlu0 %1124
        %1126 = vrot.lane.b32.xlu0 %v1043, 1
        %v1127 = vpop.permute.xlu0 %1126
        %1128 = vrot.lane.b32.xlu0 %v1045, 1
        %v1129 = vpop.permute.xlu0 %1128
        %v1130 = vsel %vm419, %v1123, %v1127
        %v1131 = vsel %vm419, %v1125, %v1129
        %v1132 = vsel %vm419, %v1127, %v1123
        %v1133 = vsel %vm419, %v1129, %v1125
        %v1134 = vsel %vm766, %v1118, %v1132
        %v1135 = vsel %vm767, %v1120, %v1130
        %v1136 = vsel %vm766, %v1119, %v1133
        %v1137 = vsel %vm767, %v1121, %v1131
        %v1138 = vsel %vm774, %v1132, %v1118
        %v1139 = vsel %vm775, %v1130, %v1120
        %v1140 = vsel %vm774, %v1133, %v1119
        %v1141 = vsel %vm775, %v1131, %v1121
        %v1143 = vsel %vm844, %v1011, 0
        %v1146 = vsel %vm844, %v1013, 0
        %1148 = vmatprep.subr.mxu0 %v1071
        %1149 = vmatpush1.msra.mxu0 %v1070
        %1150 = vmatprep.subr.mxu0 %v1073
        %1151 = vmatpush1.msra.mxu0 %v1072
        %1152 = vmatprep.subr.mxu0 %v1039
        %1153 = vmatpush1.msra.mxu0 %v1038
        %1154 = vmatprep.subr.mxu0 %v1041
        %1155 = vmatpush1.msra.mxu0 %v1040
        %1156 = vmatprep.subr.mxu0 %v1075
        %1157 = vmatpush1.msra.mxu0 %v1074
        %1158 = vmatprep.subr.mxu0 %v1077
        %1159 = vmatpush1.msra.mxu0 %v1076
        %1160 = vmatprep.subr.mxu0 %v1103
        %1161 = vmatpush1.msra.mxu0 %v1102
        %1162 = vmatprep.subr.mxu0 %v1105
        %1163 = vmatpush1.msra.mxu0 %v1104
        %1164 = vmatprep.subr.mxu0 %v1006
        %1165 = vmatpush1.msra.mxu0 %v1005
        %1166 = vmatprep.subr.mxu0 %v1008
        %1167 = vmatpush1.msra.mxu0 %v1007
        %1168 = vmatprep.subr.mxu0 %v1107
        %1169 = vmatpush1.msra.mxu0 %v1106
        %1170 = vmatprep.subr.mxu0 %v1109
        %1171 = vmatpush1.msra.mxu0 %v1108
        %1172 = vmatprep.subr.mxu0 %v1135
        %1173 = vmatpush1.msra.mxu0 %v1134
        %1174 = vmatprep.subr.mxu0 %v1137
        %1175 = vmatpush1.msra.mxu0 %v1136
        %1176 = vmatprep.subr.mxu0 %v1043
        %1177 = vmatpush1.msra.mxu0 %v1042
        %1178 = vmatprep.subr.mxu0 %v1045
        %1179 = vmatpush1.msra.mxu0 %v1044
        %1180 = vmatprep.subr.mxu0 %v1139
        %1181 = vmatpush1.msra.mxu0 %v1138
        %1182 = vmatprep.subr.mxu0 %v1141
        %1183 = vmatpush1.msra.mxu0 %v1140
        %1184 = vmatprep.subr.mxu0 0.0
        %1185 = vmatpush1.msra.mxu0 0.0
        %1186 = vmatprep.subr.mxu0 0.0
        %1187 = vmatpush1.msra.mxu0 0.0
        %1188 = vmatprep.subr.mxu0 0.0
        %1189 = vmatpush1.msra.mxu0 0.0
        %1190 = vmatprep.subr.mxu0 0.0
        %1191 = vmatpush1.msra.mxu0 0.0
        %1192 = vmatprep.subr.mxu0 0.0
        %1193 = vmatpush1.msra.mxu0 0.0
        %1194 = vmatprep.subr.mxu0 0.0
        %1195 = vmatpush1.msra.mxu0 0.0
        %1196 = vmatprep.subr.mxu0 0.0
        %1197 = vmatpush1.msra.mxu0 0.0
        %1198 = vmatprep.subr.mxu0 0.0
        %1199 = vmatpush1.msra.mxu0 0.0
        %1200 = vmatprep.subr.mxu0 0.0
        %1201 = vmatpush1.msra.mxu0 0.0
        %1202 = vmatprep.subr.mxu0 0.0
        %1203 = vmatpush1.msra.mxu0 0.0
        %1204 = vmatprep.subr.mxu0 0.0
        %1205 = vmatpush1.msra.mxu0 0.0
        %1206 = vmatprep.subr.mxu0 0.0
        %1207 = vmatpush1.msra.mxu0 0.0
        %1208 = vmatprep.subr.mxu0 0.0
        %1209 = vmatpush1.msra.mxu0 0.0
        %1210 = vmatprep.subr.mxu0 0.0
        %1211 = vmatpush1.msra.mxu0 0.0
        %1212 = vmatprep.mubr.f32.mxu0 %v1143
        %1213 = vmatmul.mubr.f32.gmra.mrb[0].mxu0 %v1010
        %v1214 = vpop.f32.mrb[0].mxu0
        %v1215 = vadd.f32 0.0, %v1214
        %v1216 = vpop.f32.mrb[0].mxu0
        %v1217 = vadd.f32 0.0, %v1216
        %1218 = vmatprep.mubr.f32.mxu0 %v1146
        %1219 = vmatmul.mubr.f32.gmra.mrb[0].mxu0 %v1012
        %v1220 = vpop.f32.mrb[0].mxu0
        %v1221 = vadd.f32 0.0, %v1220
        %v1222 = vpop.f32.mrb[0].mxu0
        %v1223 = vadd.f32 0.0, %v1222
        %1224 = vdwg.mxu0
        %v1225 = vadd.f32 %v1215, %v1217
        %1226 = vadd.xlane.f32.xlu0 %v1225
        %v1227 = vpop.xlane.xlu0 %1226
        %v1228 = vadd.f32 %v1221, %v1223
        %1229 = vadd.xlane.f32.xlu0 %v1228
        %v1230 = vpop.xlane.xlu0 %1229
        %v1231 = vmul.f32 %v1227, %v934
        %v1232 = vmul.f32 %v1230, %v934
        %v1233 = vmul.f32 %v1215, %v1215
        %v1234 = vmul.f32 %v1217, %v1217
        %v1235 = vmul.f32 %v1221, %v1221
        %v1236 = vmul.f32 %v1223, %v1223
        %v1237 = vadd.f32 %v1233, %v1234
        %1238 = vadd.xlane.f32.xlu0 %v1237
        %v1239 = vpop.xlane.xlu0 %1238
        %v1240 = vadd.f32 %v1235, %v1236
        %1241 = vadd.xlane.f32.xlu0 %v1240
        %v1242 = vpop.xlane.xlu0 %1241
        %v1243 = vmul.f32 %v1239, %v934
        %v1244 = vmul.f32 %v1242, %v934
        %v1245 = vmul.f32 %v1231, %v1231
        %v1246 = vmul.f32 %v1232, %v1232
        %v1247 = vsub.f32 %v1243, %v1245
        %v1248 = vsub.f32 %v1244, %v1246
        %s1249 = scalar_lea.vmem %s4, 16
        %v1250 = vld [vmem:[%s1249] sm:$0xff]
        %v1251 = vld [vmem:[%s1249 + $0x8] sm:$0xff]
        %v1252 = vadd.f32 %v1247, 1e-05
        %v1253 = vadd.f32 %v1248, 1e-05
        %v1254 = vrsqrt.pop %v1252
        %v1255 = vrsqrt.pop %v1253
        %v1256 = vmul.f32 %v1250, %v1254
        %v1257 = vmul.f32 %v1251, %v1255
        %s1258 = scalar_lea.vmem %s5, 16
        %v1259 = vld [vmem:[%s1258] sm:$0xff]
        %v1260 = vld [vmem:[%s1258 + $0x8] sm:$0xff]
        %v1261 = vmul.f32 %v1231, %v1256
        %v1262 = vmul.f32 %v1232, %v1257
        %v1263 = vsub.f32 %v1259, %v1261
        %v1264 = vsub.f32 %v1260, %v1262
        %1266 = vset.pattern.permute.xlu0 0
        %1267 = vperm.xlu0 %1266, %v1256
        %v1268 = vpop.permute.xlu0 %1267
        %1271 = vset.pattern.permute.xlu0 0
        %1272 = vperm.xlu0 %1271, %v1257
        %v1273 = vpop.permute.xlu0 %1272
        %v1275 = vmul.f32 %v1215, %v1268
        %v1276 = vmul.f32 %v1217, %v1268
        %v1277 = vmul.f32 %v1221, %v1273
        %v1278 = vmul.f32 %v1223, %v1273
        %1280 = vset.pattern.permute.xlu0 0
        %1281 = vperm.xlu0 %1280, %v1263
        %v1282 = vpop.permute.xlu0 %1281
        %1285 = vset.pattern.permute.xlu0 0
        %1286 = vperm.xlu0 %1285, %v1264
        %v1287 = vpop.permute.xlu0 %1286
        %v1289 = vadd.f32 %v1275, %v1282
        %v1290 = vadd.f32 %v1276, %v1282
        %v1291 = vadd.f32 %v1277, %v1287
        %v1292 = vadd.f32 %v1278, %v1287
        %s1293 = sld [smem:[#allocation3 + $0x2]]
        %vm1294 = vcmp.ge.f32.partialorder %v1289, 0.0
        %vm1295 = vcmp.ge.f32.partialorder %v1290, 0.0
        %vm1296 = vcmp.ge.f32.partialorder %v1291, 0.0
        %vm1297 = vcmp.ge.f32.partialorder %v1292, 0.0
        %v1298 = vstv %s1293
        %v1299 = vmul.f32 %v1298, %v1289
        %v1300 = vmul.f32 %v1298, %v1290
        %v1301 = vmul.f32 %v1298, %v1291
        %v1302 = vmul.f32 %v1298, %v1292
        %v1303 = vsel %vm1294, %v1289, %v1299
        %v1304 = vsel %vm1295, %v1290, %v1300
        %v1305 = vsel %vm1296, %v1291, %v1301
        %v1306 = vsel %vm1297, %v1292, %v1302
        %s1307 = scalar_lea.vmem %s3, 64
        %v1308 = vld [vmem:[%s1307] sm:$0xff]
        %v1309 = vld [vmem:[%s1307 + $0x8] sm:$0xff]
        %v1310 = vld [vmem:[%s1307 + $0x10] sm:$0xff]
        %v1311 = vld [vmem:[%s1307 + $0x18] sm:$0xff]
        %1312 = vrot.lane.b32.xlu0 %v1303, 112
        %v1313 = vpop.permute.xlu0 %1312
        %1314 = vrot.lane.b32.xlu0 %v1305, 112
        %v1315 = vpop.permute.xlu0 %1314
        %1316 = vrot.lane.b32.xlu0 %v1304, 112
        %v1317 = vpop.permute.xlu0 %1316
        %1318 = vrot.lane.b32.xlu0 %v1306, 112
        %v1319 = vpop.permute.xlu0 %1318
        %v1320 = vsel %vm395, %v1313, %v1317
        %v1321 = vsel %vm395, %v1315, %v1319
        %v1322 = vsel %vm395, %v1317, %v1313
        %v1323 = vsel %vm395, %v1319, %v1315
        %1324 = vrot.lane.b32.xlu0 %v1303, 16
        %v1325 = vpop.permute.xlu0 %1324
        %1326 = vrot.lane.b32.xlu0 %v1305, 16
        %v1327 = vpop.permute.xlu0 %1326
        %1328 = vrot.lane.b32.xlu0 %v1304, 16
        %v1329 = vpop.permute.xlu0 %1328
        %1330 = vrot.lane.b32.xlu0 %v1306, 16
        %v1331 = vpop.permute.xlu0 %1330
        %v1332 = vsel %vm375, %v1325, %v1329
        %v1333 = vsel %vm375, %v1327, %v1331
        %v1334 = vsel %vm375, %v1329, %v1325
        %v1335 = vsel %vm375, %v1331, %v1327
        %v1336 = vsel %vm726, %v1320, %v1334
        %v1337 = vsel %vm727, %v1322, %v1332
        %v1338 = vsel %vm726, %v1321, %v1335
        %v1339 = vsel %vm727, %v1323, %v1333
        %v1340 = vsel %vm734, %v1334, %v1320
        %v1341 = vsel %vm735, %v1332, %v1322
        %v1342 = vsel %vm734, %v1335, %v1321
        %v1343 = vsel %vm735, %v1333, %v1323
        %1344 = vrot.lane.b32.xlu0 %v1336, 127
        %v1345 = vpop.permute.xlu0 %1344
        %1346 = vrot.lane.b32.xlu0 %v1338, 127
        %v1347 = vpop.permute.xlu0 %1346
        %1348 = vrot.lane.b32.xlu0 %v1337, 127
        %v1349 = vpop.permute.xlu0 %1348
        %1350 = vrot.lane.b32.xlu0 %v1339, 127
        %v1351 = vpop.permute.xlu0 %1350
        %v1352 = vsel %vm412, %v1345, %v1349
        %v1353 = vsel %vm412, %v1347, %v1351
        %v1354 = vsel %vm412, %v1349, %v1345
        %v1355 = vsel %vm412, %v1351, %v1347
        %1356 = vrot.lane.b32.xlu0 %v1336, 1
        %v1357 = vpop.permute.xlu0 %1356
        %1358 = vrot.lane.b32.xlu0 %v1338, 1
        %v1359 = vpop.permute.xlu0 %1358
        %1360 = vrot.lane.b32.xlu0 %v1337, 1
        %v1361 = vpop.permute.xlu0 %1360
        %1362 = vrot.lane.b32.xlu0 %v1339, 1
        %v1363 = vpop.permute.xlu0 %1362
        %v1364 = vsel %vm419, %v1357, %v1361
        %v1365 = vsel %vm419, %v1359, %v1363
        %v1366 = vsel %vm419, %v1361, %v1357
        %v1367 = vsel %vm419, %v1363, %v1359
        %v1368 = vsel %vm766, %v1352, %v1366
        %v1369 = vsel %vm767, %v1354, %v1364
        %v1370 = vsel %vm766, %v1353, %v1367
        %v1371 = vsel %vm767, %v1355, %v1365
        %v1372 = vsel %vm774, %v1366, %v1352
        %v1373 = vsel %vm775, %v1364, %v1354
        %v1374 = vsel %vm774, %v1367, %v1353
        %v1375 = vsel %vm775, %v1365, %v1355
        %1376 = vrot.lane.b32.xlu0 %v1303, 127
        %v1377 = vpop.permute.xlu0 %1376
        %1378 = vrot.lane.b32.xlu0 %v1305, 127
        %v1379 = vpop.permute.xlu0 %1378
        %1380 = vrot.lane.b32.xlu0 %v1304, 127
        %v1381 = vpop.permute.xlu0 %1380
        %1382 = vrot.lane.b32.xlu0 %v1306, 127
        %v1383 = vpop.permute.xlu0 %1382
        %v1384 = vsel %vm412, %v1377, %v1381
        %v1385 = vsel %vm412, %v1379, %v1383
        %v1386 = vsel %vm412, %v1381, %v1377
        %v1387 = vsel %vm412, %v1383, %v1379
        %1388 = vrot.lane.b32.xlu0 %v1303, 1
        %v1389 = vpop.permute.xlu0 %1388
        %1390 = vrot.lane.b32.xlu0 %v1305, 1
        %v1391 = vpop.permute.xlu0 %1390
        %1392 = vrot.lane.b32.xlu0 %v1304, 1
        %v1393 = vpop.permute.xlu0 %1392
        %1394 = vrot.lane.b32.xlu0 %v1306, 1
        %v1395 = vpop.permute.xlu0 %1394
        %v1396 = vsel %vm419, %v1389, %v1393
        %v1397 = vsel %vm419, %v1391, %v1395
        %v1398 = vsel %vm419, %v1393, %v1389
        %v1399 = vsel %vm419, %v1395, %v1391
        %v1400 = vsel %vm766, %v1384, %v1398
        %v1401 = vsel %vm767, %v1386, %v1396
        %v1402 = vsel %vm766, %v1385, %v1399
        %v1403 = vsel %vm767, %v1387, %v1397
        %v1404 = vsel %vm774, %v1398, %v1384
        %v1405 = vsel %vm775, %v1396, %v1386
        %v1406 = vsel %vm774, %v1399, %v1385
        %v1407 = vsel %vm775, %v1397, %v1387
        %1408 = vrot.lane.b32.xlu0 %v1340, 127
        %v1409 = vpop.permute.xlu0 %1408
        %1410 = vrot.lane.b32.xlu0 %v1342, 127
        %v1411 = vpop.permute.xlu0 %1410
        %1412 = vrot.lane.b32.xlu0 %v1341, 127
        %v1413 = vpop.permute.xlu0 %1412
        %1414 = vrot.lane.b32.xlu0 %v1343, 127
        %v1415 = vpop.permute.xlu0 %1414
        %v1416 = vsel %vm412, %v1409, %v1413
        %v1417 = vsel %vm412, %v1411, %v1415
        %v1418 = vsel %vm412, %v1413, %v1409
        %v1419 = vsel %vm412, %v1415, %v1411
        %1420 = vrot.lane.b32.xlu0 %v1340, 1
        %v1421 = vpop.permute.xlu0 %1420
        %1422 = vrot.lane.b32.xlu0 %v1342, 1
        %v1423 = vpop.permute.xlu0 %1422
        %1424 = vrot.lane.b32.xlu0 %v1341, 1
        %v1425 = vpop.permute.xlu0 %1424
        %1426 = vrot.lane.b32.xlu0 %v1343, 1
        %v1427 = vpop.permute.xlu0 %1426
        %v1428 = vsel %vm419, %v1421, %v1425
        %v1429 = vsel %vm419, %v1423, %v1427
        %v1430 = vsel %vm419, %v1425, %v1421
        %v1431 = vsel %vm419, %v1427, %v1423
        %v1432 = vsel %vm766, %v1416, %v1430
        %v1433 = vsel %vm767, %v1418, %v1428
        %v1434 = vsel %vm766, %v1417, %v1431
        %v1435 = vsel %vm767, %v1419, %v1429
        %v1436 = vsel %vm774, %v1430, %v1416
        %v1437 = vsel %vm775, %v1428, %v1418
        %v1438 = vsel %vm774, %v1431, %v1417
        %v1439 = vsel %vm775, %v1429, %v1419
        %v1441 = vsel %vm844, %v1309, 0
        %v1444 = vsel %vm844, %v1311, 0
        %1446 = vmatprep.subr.mxu0 %v1369
        %1447 = vmatpush1.msra.mxu0 %v1368
        %1448 = vmatprep.subr.mxu0 %v1371
        %1449 = vmatpush1.msra.mxu0 %v1370
        %1450 = vmatprep.subr.mxu0 %v1337
        %1451 = vmatpush1.msra.mxu0 %v1336
        %1452 = vmatprep.subr.mxu0 %v1339
        %1453 = vmatpush1.msra.mxu0 %v1338
        %1454 = vmatprep.subr.mxu0 %v1373
        %1455 = vmatpush1.msra.mxu0 %v1372
        %1456 = vmatprep.subr.mxu0 %v1375
        %1457 = vmatpush1.msra.mxu0 %v1374
        %1458 = vmatprep.subr.mxu0 %v1401
        %1459 = vmatpush1.msra.mxu0 %v1400
        %1460 = vmatprep.subr.mxu0 %v1403
        %1461 = vmatpush1.msra.mxu0 %v1402
        %1462 = vmatprep.subr.mxu0 %v1304
        %1463 = vmatpush1.msra.mxu0 %v1303
        %1464 = vmatprep.subr.mxu0 %v1306
        %1465 = vmatpush1.msra.mxu0 %v1305
        %1466 = vmatprep.subr.mxu0 %v1405
        %1467 = vmatpush1.msra.mxu0 %v1404
        %1468 = vmatprep.subr.mxu0 %v1407
        %1469 = vmatpush1.msra.mxu0 %v1406
        %1470 = vmatprep.subr.mxu0 %v1433
        %1471 = vmatpush1.msra.mxu0 %v1432
        %1472 = vmatprep.subr.mxu0 %v1435
        %1473 = vmatpush1.msra.mxu0 %v1434
        %1474 = vmatprep.subr.mxu0 %v1341
        %1475 = vmatpush1.msra.mxu0 %v1340
        %1476 = vmatprep.subr.mxu0 %v1343
        %1477 = vmatpush1.msra.mxu0 %v1342
        %1478 = vmatprep.subr.mxu0 %v1437
        %1479 = vmatpush1.msra.mxu0 %v1436
        %1480 = vmatprep.subr.mxu0 %v1439
        %1481 = vmatpush1.msra.mxu0 %v1438
        %1482 = vmatprep.subr.mxu0 0.0
        %1483 = vmatpush1.msra.mxu0 0.0
        %1484 = vmatprep.subr.mxu0 0.0
        %1485 = vmatpush1.msra.mxu0 0.0
        %1486 = vmatprep.subr.mxu0 0.0
        %1487 = vmatpush1.msra.mxu0 0.0
        %1488 = vmatprep.subr.mxu0 0.0
        %1489 = vmatpush1.msra.mxu0 0.0
        %1490 = vmatprep.subr.mxu0 0.0
        %1491 = vmatpush1.msra.mxu0 0.0
        %1492 = vmatprep.subr.mxu0 0.0
        %1493 = vmatpush1.msra.mxu0 0.0
        %1494 = vmatprep.subr.mxu0 0.0
        %1495 = vmatpush1.msra.mxu0 0.0
        %1496 = vmatprep.subr.mxu0 0.0
        %1497 = vmatpush1.msra.mxu0 0.0
        %1498 = vmatprep.subr.mxu0 0.0
        %1499 = vmatpush1.msra.mxu0 0.0
        %1500 = vmatprep.subr.mxu0 0.0
        %1501 = vmatpush1.msra.mxu0 0.0
        %1502 = vmatprep.subr.mxu0 0.0
        %1503 = vmatpush1.msra.mxu0 0.0
        %1504 = vmatprep.subr.mxu0 0.0
        %1505 = vmatpush1.msra.mxu0 0.0
        %1506 = vmatprep.subr.mxu0 0.0
        %1507 = vmatpush1.msra.mxu0 0.0
        %1508 = vmatprep.subr.mxu0 0.0
        %1509 = vmatpush1.msra.mxu0 0.0
        %1510 = vmatprep.mubr.f32.mxu0 %v1441
        %1511 = vmatmul.mubr.f32.gmra.mrb[0].mxu0 %v1308
        %v1512 = vpop.f32.mrb[0].mxu0
        %v1513 = vadd.f32 0.0, %v1512
        %v1514 = vpop.f32.mrb[0].mxu0
        %v1515 = vadd.f32 0.0, %v1514
        %1516 = vmatprep.mubr.f32.mxu0 %v1444
        %1517 = vmatmul.mubr.f32.gmra.mrb[0].mxu0 %v1310
        %v1518 = vpop.f32.mrb[0].mxu0
        %v1519 = vadd.f32 0.0, %v1518
        %v1520 = vpop.f32.mrb[0].mxu0
        %v1521 = vadd.f32 0.0, %v1520
        %1522 = vdwg.mxu0
        %v1523 = vadd.f32 %v1513, %v1515
        %1524 = vadd.xlane.f32.xlu0 %v1523
        %v1525 = vpop.xlane.xlu0 %1524
        %v1526 = vadd.f32 %v1519, %v1521
        %1527 = vadd.xlane.f32.xlu0 %v1526
        %v1528 = vpop.xlane.xlu0 %1527
        %v1529 = vmul.f32 %v1525, %v934
        %v1530 = vmul.f32 %v1528, %v934
        %v1531 = vmul.f32 %v1513, %v1513
        %v1532 = vmul.f32 %v1515, %v1515
        %v1533 = vmul.f32 %v1519, %v1519
        %v1534 = vmul.f32 %v1521, %v1521
        %v1535 = vadd.f32 %v1531, %v1532
        %1536 = vadd.xlane.f32.xlu0 %v1535
        %v1537 = vpop.xlane.xlu0 %1536
        %v1538 = vadd.f32 %v1533, %v1534
        %1539 = vadd.xlane.f32.xlu0 %v1538
        %v1540 = vpop.xlane.xlu0 %1539
        %v1541 = vmul.f32 %v1537, %v934
        %v1542 = vmul.f32 %v1540, %v934
        %v1543 = vmul.f32 %v1529, %v1529
        %v1544 = vmul.f32 %v1530, %v1530
        %v1545 = vsub.f32 %v1541, %v1543
        %v1546 = vsub.f32 %v1542, %v1544
        %s1547 = scalar_lea.vmem %s4, 32
        %v1548 = vld [vmem:[%s1547] sm:$0xff]
        %v1549 = vld [vmem:[%s1547 + $0x8] sm:$0xff]
        %v1550 = vadd.f32 %v1545, 1e-05
        %v1551 = vadd.f32 %v1546, 1e-05
        %v1552 = vrsqrt.pop %v1550
        %v1553 = vrsqrt.pop %v1551
        %v1554 = vmul.f32 %v1548, %v1552
        %v1555 = vmul.f32 %v1549, %v1553
        %s1556 = scalar_lea.vmem %s5, 32
        %v1557 = vld [vmem:[%s1556] sm:$0xff]
        %v1558 = vld [vmem:[%s1556 + $0x8] sm:$0xff]
        %v1559 = vmul.f32 %v1529, %v1554
        %v1560 = vmul.f32 %v1530, %v1555
        %v1561 = vsub.f32 %v1557, %v1559
        %v1562 = vsub.f32 %v1558, %v1560
        %1564 = vset.pattern.permute.xlu0 0
        %1565 = vperm.xlu0 %1564, %v1554
        %v1566 = vpop.permute.xlu0 %1565
        %1569 = vset.pattern.permute.xlu0 0
        %1570 = vperm.xlu0 %1569, %v1555
        %v1571 = vpop.permute.xlu0 %1570
        %v1573 = vmul.f32 %v1513, %v1566
        %v1574 = vmul.f32 %v1515, %v1566
        %v1575 = vmul.f32 %v1519, %v1571
        %v1576 = vmul.f32 %v1521, %v1571
        %1578 = vset.pattern.permute.xlu0 0
        %1579 = vperm.xlu0 %1578, %v1561
        %v1580 = vpop.permute.xlu0 %1579
        %1583 = vset.pattern.permute.xlu0 0
        %1584 = vperm.xlu0 %1583, %v1562
        %v1585 = vpop.permute.xlu0 %1584
        %v1587 = vadd.f32 %v1573, %v1580
        %v1588 = vadd.f32 %v1574, %v1580
        %v1589 = vadd.f32 %v1575, %v1585
        %v1590 = vadd.f32 %v1576, %v1585
        %s1591 = sld [smem:[#allocation3 + $0x3]]
        %vm1592 = vcmp.ge.f32.partialorder %v1587, 0.0
        %vm1593 = vcmp.ge.f32.partialorder %v1588, 0.0
        %vm1594 = vcmp.ge.f32.partialorder %v1589, 0.0
        %vm1595 = vcmp.ge.f32.partialorder %v1590, 0.0
        %v1596 = vstv %s1591
        %v1597 = vmul.f32 %v1596, %v1587
        %v1598 = vmul.f32 %v1596, %v1588
        %v1599 = vmul.f32 %v1596, %v1589
        %v1600 = vmul.f32 %v1596, %v1590
        %v1601 = vsel %vm1592, %v1587, %v1597
        %v1602 = vsel %vm1593, %v1588, %v1598
        %v1603 = vsel %vm1594, %v1589, %v1599
        %v1604 = vsel %vm1595, %v1590, %v1600
        %s1605 = scalar_lea.vmem %s3, 96
        %v1606 = vld [vmem:[%s1605] sm:$0xff]
        %v1607 = vld [vmem:[%s1605 + $0x8] sm:$0xff]
        %v1608 = vld [vmem:[%s1605 + $0x10] sm:$0xff]
        %v1609 = vld [vmem:[%s1605 + $0x18] sm:$0xff]
        %1610 = vrot.lane.b32.xlu0 %v1601, 112
        %v1611 = vpop.permute.xlu0 %1610
        %1612 = vrot.lane.b32.xlu0 %v1603, 112
        %v1613 = vpop.permute.xlu0 %1612
        %1614 = vrot.lane.b32.xlu0 %v1602, 112
        %v1615 = vpop.permute.xlu0 %1614
        %1616 = vrot.lane.b32.xlu0 %v1604, 112
        %v1617 = vpop.permute.xlu0 %1616
        %v1618 = vsel %vm395, %v1611, %v1615
        %v1619 = vsel %vm395, %v1613, %v1617
        %v1620 = vsel %vm395, %v1615, %v1611
        %v1621 = vsel %vm395, %v1617, %v1613
        %1622 = vrot.lane.b32.xlu0 %v1601, 16
        %v1623 = vpop.permute.xlu0 %1622
        %1624 = vrot.lane.b32.xlu0 %v1603, 16
        %v1625 = vpop.permute.xlu0 %1624
        %1626 = vrot.lane.b32.xlu0 %v1602, 16
        %v1627 = vpop.permute.xlu0 %1626
        %1628 = vrot.lane.b32.xlu0 %v1604, 16
        %v1629 = vpop.permute.xlu0 %1628
        %v1630 = vsel %vm375, %v1623, %v1627
        %v1631 = vsel %vm375, %v1625, %v1629
        %v1632 = vsel %vm375, %v1627, %v1623
        %v1633 = vsel %vm375, %v1629, %v1625
        %v1634 = vsel %vm726, %v1618, %v1632
        %v1635 = vsel %vm727, %v1620, %v1630
        %v1636 = vsel %vm726, %v1619, %v1633
        %v1637 = vsel %vm727, %v1621, %v1631
        %v1638 = vsel %vm734, %v1632, %v1618
        %v1639 = vsel %vm735, %v1630, %v1620
        %v1640 = vsel %vm734, %v1633, %v1619
        %v1641 = vsel %vm735, %v1631, %v1621
        %1642 = vrot.lane.b32.xlu0 %v1634, 127
        %v1643 = vpop.permute.xlu0 %1642
        %1644 = vrot.lane.b32.xlu0 %v1636, 127
        %v1645 = vpop.permute.xlu0 %1644
        %1646 = vrot.lane.b32.xlu0 %v1635, 127
        %v1647 = vpop.permute.xlu0 %1646
        %1648 = vrot.lane.b32.xlu0 %v1637, 127
        %v1649 = vpop.permute.xlu0 %1648
        %v1650 = vsel %vm412, %v1643, %v1647
        %v1651 = vsel %vm412, %v1645, %v1649
        %v1652 = vsel %vm412, %v1647, %v1643
        %v1653 = vsel %vm412, %v1649, %v1645
        %1654 = vrot.lane.b32.xlu0 %v1634, 1
        %v1655 = vpop.permute.xlu0 %1654
        %1656 = vrot.lane.b32.xlu0 %v1636, 1
        %v1657 = vpop.permute.xlu0 %1656
        %1658 = vrot.lane.b32.xlu0 %v1635, 1
        %v1659 = vpop.permute.xlu0 %1658
        %1660 = vrot.lane.b32.xlu0 %v1637, 1
        %v1661 = vpop.permute.xlu0 %1660
        %v1662 = vsel %vm419, %v1655, %v1659
        %v1663 = vsel %vm419, %v1657, %v1661
        %v1664 = vsel %vm419, %v1659, %v1655
        %v1665 = vsel %vm419, %v1661, %v1657
        %v1666 = vsel %vm766, %v1650, %v1664
        %v1667 = vsel %vm767, %v1652, %v1662
        %v1668 = vsel %vm766, %v1651, %v1665
        %v1669 = vsel %vm767, %v1653, %v1663
        %v1670 = vsel %vm774, %v1664, %v1650
        %v1671 = vsel %vm775, %v1662, %v1652
        %v1672 = vsel %vm774, %v1665, %v1651
        %v1673 = vsel %vm775, %v1663, %v1653
        %1674 = vrot.lane.b32.xlu0 %v1601, 127
        %v1675 = vpop.permute.xlu0 %1674
        %1676 = vrot.lane.b32.xlu0 %v1603, 127
        %v1677 = vpop.permute.xlu0 %1676
        %1678 = vrot.lane.b32.xlu0 %v1602, 127
        %v1679 = vpop.permute.xlu0 %1678
        %1680 = vrot.lane.b32.xlu0 %v1604, 127
        %v1681 = vpop.permute.xlu0 %1680
        %v1682 = vsel %vm412, %v1675, %v1679
        %v1683 = vsel %vm412, %v1677, %v1681
        %v1684 = vsel %vm412, %v1679, %v1675
        %v1685 = vsel %vm412, %v1681, %v1677
        %1686 = vrot.lane.b32.xlu0 %v1601, 1
        %v1687 = vpop.permute.xlu0 %1686
        %1688 = vrot.lane.b32.xlu0 %v1603, 1
        %v1689 = vpop.permute.xlu0 %1688
        %1690 = vrot.lane.b32.xlu0 %v1602, 1
        %v1691 = vpop.permute.xlu0 %1690
        %1692 = vrot.lane.b32.xlu0 %v1604, 1
        %v1693 = vpop.permute.xlu0 %1692
        %v1694 = vsel %vm419, %v1687, %v1691
        %v1695 = vsel %vm419, %v1689, %v1693
        %v1696 = vsel %vm419, %v1691, %v1687
        %v1697 = vsel %vm419, %v1693, %v1689
        %v1698 = vsel %vm766, %v1682, %v1696
        %v1699 = vsel %vm767, %v1684, %v1694
        %v1700 = vsel %vm766, %v1683, %v1697
        %v1701 = vsel %vm767, %v1685, %v1695
        %v1702 = vsel %vm774, %v1696, %v1682
        %v1703 = vsel %vm775, %v1694, %v1684
        %v1704 = vsel %vm774, %v1697, %v1683
        %v1705 = vsel %vm775, %v1695, %v1685
        %1706 = vrot.lane.b32.xlu0 %v1638, 127
        %v1707 = vpop.permute.xlu0 %1706
        %1708 = vrot.lane.b32.xlu0 %v1640, 127
        %v1709 = vpop.permute.xlu0 %1708
        %1710 = vrot.lane.b32.xlu0 %v1639, 127
        %v1711 = vpop.permute.xlu0 %1710
        %1712 = vrot.lane.b32.xlu0 %v1641, 127
        %v1713 = vpop.permute.xlu0 %1712
        %v1714 = vsel %vm412, %v1707, %v1711
        %v1715 = vsel %vm412, %v1709, %v1713
        %v1716 = vsel %vm412, %v1711, %v1707
        %v1717 = vsel %vm412, %v1713, %v1709
        %1718 = vrot.lane.b32.xlu0 %v1638, 1
        %v1719 = vpop.permute.xlu0 %1718
        %1720 = vrot.lane.b32.xlu0 %v1640, 1
        %v1721 = vpop.permute.xlu0 %1720
        %1722 = vrot.lane.b32.xlu0 %v1639, 1
        %v1723 = vpop.permute.xlu0 %1722
        %1724 = vrot.lane.b32.xlu0 %v1641, 1
        %v1725 = vpop.permute.xlu0 %1724
        %v1726 = vsel %vm419, %v1719, %v1723
        %v1727 = vsel %vm419, %v1721, %v1725
        %v1728 = vsel %vm419, %v1723, %v1719
        %v1729 = vsel %vm419, %v1725, %v1721
        %v1730 = vsel %vm766, %v1714, %v1728
        %v1731 = vsel %vm767, %v1716, %v1726
        %v1732 = vsel %vm766, %v1715, %v1729
        %v1733 = vsel %vm767, %v1717, %v1727
        %v1734 = vsel %vm774, %v1728, %v1714
        %v1735 = vsel %vm775, %v1726, %v1716
        %v1736 = vsel %vm774, %v1729, %v1715
        %v1737 = vsel %vm775, %v1727, %v1717
        %v1739 = vsel %vm844, %v1607, 0
        %v1742 = vsel %vm844, %v1609, 0
        %1744 = vmatprep.subr.mxu0 %v1667
        %1745 = vmatpush1.msra.mxu0 %v1666
        %1746 = vmatprep.subr.mxu0 %v1669
        %1747 = vmatpush1.msra.mxu0 %v1668
        %1748 = vmatprep.subr.mxu0 %v1635
        %1749 = vmatpush1.msra.mxu0 %v1634
        %1750 = vmatprep.subr.mxu0 %v1637
        %1751 = vmatpush1.msra.mxu0 %v1636
        %1752 = vmatprep.subr.mxu0 %v1671
        %1753 = vmatpush1.msra.mxu0 %v1670
        %1754 = vmatprep.subr.mxu0 %v1673
        %1755 = vmatpush1.msra.mxu0 %v1672
        %1756 = vmatprep.subr.mxu0 %v1699
        %1757 = vmatpush1.msra.mxu0 %v1698
        %1758 = vmatprep.subr.mxu0 %v1701
        %1759 = vmatpush1.msra.mxu0 %v1700
        %1760 = vmatprep.subr.mxu0 %v1602
        %1761 = vmatpush1.msra.mxu0 %v1601
        %1762 = vmatprep.subr.mxu0 %v1604
        %1763 = vmatpush1.msra.mxu0 %v1603
        %1764 = vmatprep.subr.mxu0 %v1703
        %1765 = vmatpush1.msra.mxu0 %v1702
        %1766 = vmatprep.subr.mxu0 %v1705
        %1767 = vmatpush1.msra.mxu0 %v1704
        %1768 = vmatprep.subr.mxu0 %v1731
        %1769 = vmatpush1.msra.mxu0 %v1730
        %1770 = vmatprep.subr.mxu0 %v1733
        %1771 = vmatpush1.msra.mxu0 %v1732
        %1772 = vmatprep.subr.mxu0 %v1639
        %1773 = vmatpush1.msra.mxu0 %v1638
        %1774 = vmatprep.subr.mxu0 %v1641
        %1775 = vmatpush1.msra.mxu0 %v1640
        %1776 = vmatprep.subr.mxu0 %v1735
        %1777 = vmatpush1.msra.mxu0 %v1734
        %1778 = vmatprep.subr.mxu0 %v1737
        %1779 = vmatpush1.msra.mxu0 %v1736
        %1780 = vmatprep.subr.mxu0 0.0
        %1781 = vmatpush1.msra.mxu0 0.0
        %1782 = vmatprep.subr.mxu0 0.0
        %1783 = vmatpush1.msra.mxu0 0.0
        %1784 = vmatprep.subr.mxu0 0.0
        %1785 = vmatpush1.msra.mxu0 0.0
        %1786 = vmatprep.subr.mxu0 0.0
        %1787 = vmatpush1.msra.mxu0 0.0
        %1788 = vmatprep.subr.mxu0 0.0
        %1789 = vmatpush1.msra.mxu0 0.0
        %1790 = vmatprep.subr.mxu0 0.0
        %1791 = vmatpush1.msra.mxu0 0.0
        %1792 = vmatprep.subr.mxu0 0.0
        %1793 = vmatpush1.msra.mxu0 0.0
        %1794 = vmatprep.subr.mxu0 0.0
        %1795 = vmatpush1.msra.mxu0 0.0
        %1796 = vmatprep.subr.mxu0 0.0
        %1797 = vmatpush1.msra.mxu0 0.0
        %1798 = vmatprep.subr.mxu0 0.0
        %1799 = vmatpush1.msra.mxu0 0.0
        %1800 = vmatprep.subr.mxu0 0.0
        %1801 = vmatpush1.msra.mxu0 0.0
        %1802 = vmatprep.subr.mxu0 0.0
        %1803 = vmatpush1.msra.mxu0 0.0
        %1804 = vmatprep.subr.mxu0 0.0
        %1805 = vmatpush1.msra.mxu0 0.0
        %1806 = vmatprep.subr.mxu0 0.0
        %1807 = vmatpush1.msra.mxu0 0.0
        %1808 = vmatprep.mubr.f32.mxu0 %v1739
        %1809 = vmatmul.mubr.f32.gmra.mrb[0].mxu0 %v1606
        %v1810 = vpop.f32.mrb[0].mxu0
        %v1811 = vadd.f32 0.0, %v1810
        %v1812 = vpop.f32.mrb[0].mxu0
        %v1813 = vadd.f32 0.0, %v1812
        %1814 = vmatprep.mubr.f32.mxu0 %v1742
        %1815 = vmatmul.mubr.f32.gmra.mrb[0].mxu0 %v1608
        %v1816 = vpop.f32.mrb[0].mxu0
        %v1817 = vadd.f32 0.0, %v1816
        %v1818 = vpop.f32.mrb[0].mxu0
        %v1819 = vadd.f32 0.0, %v1818
        %1820 = vdwg.mxu0
        %v1821 = vadd.f32 %v1811, %v1813
        %1822 = vadd.xlane.f32.xlu0 %v1821
        %v1823 = vpop.xlane.xlu0 %1822
        %v1824 = vadd.f32 %v1817, %v1819
        %1825 = vadd.xlane.f32.xlu0 %v1824
        %v1826 = vpop.xlane.xlu0 %1825
        %v1827 = vmul.f32 %v1823, %v934
        %v1828 = vmul.f32 %v1826, %v934
        %v1829 = vmul.f32 %v1811, %v1811
        %v1830 = vmul.f32 %v1813, %v1813
        %v1831 = vmul.f32 %v1817, %v1817
        %v1832 = vmul.f32 %v1819, %v1819
        %v1833 = vadd.f32 %v1829, %v1830
        %1834 = vadd.xlane.f32.xlu0 %v1833
        %v1835 = vpop.xlane.xlu0 %1834
        %v1836 = vadd.f32 %v1831, %v1832
        %1837 = vadd.xlane.f32.xlu0 %v1836
        %v1838 = vpop.xlane.xlu0 %1837
        %v1839 = vmul.f32 %v1835, %v934
        %v1840 = vmul.f32 %v1838, %v934
        %v1841 = vmul.f32 %v1827, %v1827
        %v1842 = vmul.f32 %v1828, %v1828
        %v1843 = vsub.f32 %v1839, %v1841
        %v1844 = vsub.f32 %v1840, %v1842
        %s1845 = scalar_lea.vmem %s4, 48
        %v1846 = vld [vmem:[%s1845] sm:$0xff]
        %v1847 = vld [vmem:[%s1845 + $0x8] sm:$0xff]
        %v1848 = vadd.f32 %v1843, 1e-05
        %v1849 = vadd.f32 %v1844, 1e-05
        %v1850 = vrsqrt.pop %v1848
        %v1851 = vrsqrt.pop %v1849
        %v1852 = vmul.f32 %v1846, %v1850
        %v1853 = vmul.f32 %v1847, %v1851
        %s1854 = scalar_lea.vmem %s5, 48
        %v1855 = vld [vmem:[%s1854] sm:$0xff]
        %v1856 = vld [vmem:[%s1854 + $0x8] sm:$0xff]
        %v1857 = vmul.f32 %v1827, %v1852
        %v1858 = vmul.f32 %v1828, %v1853
        %v1859 = vsub.f32 %v1855, %v1857
        %v1860 = vsub.f32 %v1856, %v1858
        %1862 = vset.pattern.permute.xlu0 0
        %1863 = vperm.xlu0 %1862, %v1852
        %v1864 = vpop.permute.xlu0 %1863
        %1867 = vset.pattern.permute.xlu0 0
        %1868 = vperm.xlu0 %1867, %v1853
        %v1869 = vpop.permute.xlu0 %1868
        %v1871 = vmul.f32 %v1811, %v1864
        %v1872 = vmul.f32 %v1813, %v1864
        %v1873 = vmul.f32 %v1817, %v1869
        %v1874 = vmul.f32 %v1819, %v1869
        %1876 = vset.pattern.permute.xlu0 0
        %1877 = vperm.xlu0 %1876, %v1859
        %v1878 = vpop.permute.xlu0 %1877
        %1881 = vset.pattern.permute.xlu0 0
        %1882 = vperm.xlu0 %1881, %v1860
        %v1883 = vpop.permute.xlu0 %1882
        %v1885 = vadd.f32 %v1871, %v1878
        %v1886 = vadd.f32 %v1872, %v1878
        %v1887 = vadd.f32 %v1873, %v1883
        %v1888 = vadd.f32 %v1874, %v1883
        %s1889 = sld [smem:[#allocation3 + $0x4]]
        %vm1890 = vcmp.ge.f32.partialorder %v1885, 0.0
        %vm1891 = vcmp.ge.f32.partialorder %v1886, 0.0
        %vm1892 = vcmp.ge.f32.partialorder %v1887, 0.0
        %vm1893 = vcmp.ge.f32.partialorder %v1888, 0.0
        %v1894 = vstv %s1889
        %v1895 = vmul.f32 %v1894, %v1885
        %v1896 = vmul.f32 %v1894, %v1886
        %v1897 = vmul.f32 %v1894, %v1887
        %v1898 = vmul.f32 %v1894, %v1888
        %v1899 = vsel %vm1890, %v1885, %v1895
        %v1900 = vsel %vm1891, %v1886, %v1896
        %v1901 = vsel %vm1892, %v1887, %v1897
        %v1902 = vsel %vm1893, %v1888, %v1898
        %s1903 = scalar_lea.vmem %s3, 128
        %v1904 = vld [vmem:[%s1903] sm:$0xff]
        %v1905 = vld [vmem:[%s1903 + $0x8] sm:$0xff]
        %v1906 = vld [vmem:[%s1903 + $0x10] sm:$0xff]
        %v1907 = vld [vmem:[%s1903 + $0x18] sm:$0xff]
        %1908 = vrot.lane.b32.xlu0 %v1899, 112
        %v1909 = vpop.permute.xlu0 %1908
        %1910 = vrot.lane.b32.xlu0 %v1901, 112
        %v1911 = vpop.permute.xlu0 %1910
        %1912 = vrot.lane.b32.xlu0 %v1900, 112
        %v1913 = vpop.permute.xlu0 %1912
        %1914 = vrot.lane.b32.xlu0 %v1902, 112
        %v1915 = vpop.permute.xlu0 %1914
        %v1916 = vsel %vm395, %v1909, %v1913
        %v1917 = vsel %vm395, %v1911, %v1915
        %v1918 = vsel %vm395, %v1913, %v1909
        %v1919 = vsel %vm395, %v1915, %v1911
        %1920 = vrot.lane.b32.xlu0 %v1899, 16
        %v1921 = vpop.permute.xlu0 %1920
        %1922 = vrot.lane.b32.xlu0 %v1901, 16
        %v1923 = vpop.permute.xlu0 %1922
        %1924 = vrot.lane.b32.xlu0 %v1900, 16
        %v1925 = vpop.permute.xlu0 %1924
        %1926 = vrot.lane.b32.xlu0 %v1902, 16
        %v1927 = vpop.permute.xlu0 %1926
        %v1928 = vsel %vm375, %v1921, %v1925
        %v1929 = vsel %vm375, %v1923, %v1927
        %v1930 = vsel %vm375, %v1925, %v1921
        %v1931 = vsel %vm375, %v1927, %v1923
        %v1932 = vsel %vm726, %v1916, %v1930
        %v1933 = vsel %vm727, %v1918, %v1928
        %v1934 = vsel %vm726, %v1917, %v1931
        %v1935 = vsel %vm727, %v1919, %v1929
        %v1936 = vsel %vm734, %v1930, %v1916
        %v1937 = vsel %vm735, %v1928, %v1918
        %v1938 = vsel %vm734, %v1931, %v1917
        %v1939 = vsel %vm735, %v1929, %v1919
        %1940 = vrot.lane.b32.xlu0 %v1932, 127
        %v1941 = vpop.permute.xlu0 %1940
        %1942 = vrot.lane.b32.xlu0 %v1934, 127
        %v1943 = vpop.permute.xlu0 %1942
        %1944 = vrot.lane.b32.xlu0 %v1933, 127
        %v1945 = vpop.permute.xlu0 %1944
        %1946 = vrot.lane.b32.xlu0 %v1935, 127
        %v1947 = vpop.permute.xlu0 %1946
        %v1948 = vsel %vm412, %v1941, %v1945
        %v1949 = vsel %vm412, %v1943, %v1947
        %v1950 = vsel %vm412, %v1945, %v1941
        %v1951 = vsel %vm412, %v1947, %v1943
        %1952 = vrot.lane.b32.xlu0 %v1932, 1
        %v1953 = vpop.permute.xlu0 %1952
        %1954 = vrot.lane.b32.xlu0 %v1934, 1
        %v1955 = vpop.permute.xlu0 %1954
        %1956 = vrot.lane.b32.xlu0 %v1933, 1
        %v1957 = vpop.permute.xlu0 %1956
        %1958 = vrot.lane.b32.xlu0 %v1935, 1
        %v1959 = vpop.permute.xlu0 %1958
        %v1960 = vsel %vm419, %v1953, %v1957
        %v1961 = vsel %vm419, %v1955, %v1959
        %v1962 = vsel %vm419, %v1957, %v1953
        %v1963 = vsel %vm419, %v1959, %v1955
        %v1964 = vsel %vm766, %v1948, %v1962
        %v1965 = vsel %vm767, %v1950, %v1960
        %v1966 = vsel %vm766, %v1949, %v1963
        %v1967 = vsel %vm767, %v1951, %v1961
        %v1968 = vsel %vm774, %v1962, %v1948
        %v1969 = vsel %vm775, %v1960, %v1950
        %v1970 = vsel %vm774, %v1963, %v1949
        %v1971 = vsel %vm775, %v1961, %v1951
        %1972 = vrot.lane.b32.xlu0 %v1899, 127
        %v1973 = vpop.permute.xlu0 %1972
        %1974 = vrot.lane.b32.xlu0 %v1901, 127
        %v1975 = vpop.permute.xlu0 %1974
        %1976 = vrot.lane.b32.xlu0 %v1900, 127
        %v1977 = vpop.permute.xlu0 %1976
        %1978 = vrot.lane.b32.xlu0 %v1902, 127
        %v1979 = vpop.permute.xlu0 %1978
        %v1980 = vsel %vm412, %v1973, %v1977
        %v1981 = vsel %vm412, %v1975, %v1979
        %v1982 = vsel %vm412, %v1977, %v1973
        %v1983 = vsel %vm412, %v1979, %v1975
        %1984 = vrot.lane.b32.xlu0 %v1899, 1
        %v1985 = vpop.permute.xlu0 %1984
        %1986 = vrot.lane.b32.xlu0 %v1901, 1
        %v1987 = vpop.permute.xlu0 %1986
        %1988 = vrot.lane.b32.xlu0 %v1900, 1
        %v1989 = vpop.permute.xlu0 %1988
        %1990 = vrot.lane.b32.xlu0 %v1902, 1
        %v1991 = vpop.permute.xlu0 %1990
        %v1992 = vsel %vm419, %v1985, %v1989
        %v1993 = vsel %vm419, %v1987, %v1991
        %v1994 = vsel %vm419, %v1989, %v1985
        %v1995 = vsel %vm419, %v1991, %v1987
        %v1996 = vsel %vm766, %v1980, %v1994
        %v1997 = vsel %vm767, %v1982, %v1992
        %v1998 = vsel %vm766, %v1981, %v1995
        %v1999 = vsel %vm767, %v1983, %v1993
        %v2000 = vsel %vm774, %v1994, %v1980
        %v2001 = vsel %vm775, %v1992, %v1982
        %v2002 = vsel %vm774, %v1995, %v1981
        %v2003 = vsel %vm775, %v1993, %v1983
        %2004 = vrot.lane.b32.xlu0 %v1936, 127
        %v2005 = vpop.permute.xlu0 %2004
        %2006 = vrot.lane.b32.xlu0 %v1938, 127
        %v2007 = vpop.permute.xlu0 %2006
        %2008 = vrot.lane.b32.xlu0 %v1937, 127
        %v2009 = vpop.permute.xlu0 %2008
        %2010 = vrot.lane.b32.xlu0 %v1939, 127
        %v2011 = vpop.permute.xlu0 %2010
        %v2012 = vsel %vm412, %v2005, %v2009
        %v2013 = vsel %vm412, %v2007, %v2011
        %v2014 = vsel %vm412, %v2009, %v2005
        %v2015 = vsel %vm412, %v2011, %v2007
        %2016 = vrot.lane.b32.xlu0 %v1936, 1
        %v2017 = vpop.permute.xlu0 %2016
        %2018 = vrot.lane.b32.xlu0 %v1938, 1
        %v2019 = vpop.permute.xlu0 %2018
        %2020 = vrot.lane.b32.xlu0 %v1937, 1
        %v2021 = vpop.permute.xlu0 %2020
        %2022 = vrot.lane.b32.xlu0 %v1939, 1
        %v2023 = vpop.permute.xlu0 %2022
        %v2024 = vsel %vm419, %v2017, %v2021
        %v2025 = vsel %vm419, %v2019, %v2023
        %v2026 = vsel %vm419, %v2021, %v2017
        %v2027 = vsel %vm419, %v2023, %v2019
        %v2028 = vsel %vm766, %v2012, %v2026
        %v2029 = vsel %vm767, %v2014, %v2024
        %v2030 = vsel %vm766, %v2013, %v2027
        %v2031 = vsel %vm767, %v2015, %v2025
        %v2032 = vsel %vm774, %v2026, %v2012
        %v2033 = vsel %vm775, %v2024, %v2014
        %v2034 = vsel %vm774, %v2027, %v2013
        %v2035 = vsel %vm775, %v2025, %v2015
        %v2037 = vsel %vm844, %v1905, 0
        %v2040 = vsel %vm844, %v1907, 0
        %2042 = vmatprep.subr.mxu0 %v1965
        %2043 = vmatpush1.msra.mxu0 %v1964
        %2044 = vmatprep.subr.mxu0 %v1967
        %2045 = vmatpush1.msra.mxu0 %v1966
        %2046 = vmatprep.subr.mxu0 %v1933
        %2047 = vmatpush1.msra.mxu0 %v1932
        %2048 = vmatprep.subr.mxu0 %v1935
        %2049 = vmatpush1.msra.mxu0 %v1934
        %2050 = vmatprep.subr.mxu0 %v1969
        %2051 = vmatpush1.msra.mxu0 %v1968
        %2052 = vmatprep.subr.mxu0 %v1971
        %2053 = vmatpush1.msra.mxu0 %v1970
        %2054 = vmatprep.subr.mxu0 %v1997
        %2055 = vmatpush1.msra.mxu0 %v1996
        %2056 = vmatprep.subr.mxu0 %v1999
        %2057 = vmatpush1.msra.mxu0 %v1998
        %2058 = vmatprep.subr.mxu0 %v1900
        %2059 = vmatpush1.msra.mxu0 %v1899
        %2060 = vmatprep.subr.mxu0 %v1902
        %2061 = vmatpush1.msra.mxu0 %v1901
        %2062 = vmatprep.subr.mxu0 %v2001
        %2063 = vmatpush1.msra.mxu0 %v2000
        %2064 = vmatprep.subr.mxu0 %v2003
        %2065 = vmatpush1.msra.mxu0 %v2002
        %2066 = vmatprep.subr.mxu0 %v2029
        %2067 = vmatpush1.msra.mxu0 %v2028
        %2068 = vmatprep.subr.mxu0 %v2031
        %2069 = vmatpush1.msra.mxu0 %v2030
        %2070 = vmatprep.subr.mxu0 %v1937
        %2071 = vmatpush1.msra.mxu0 %v1936
        %2072 = vmatprep.subr.mxu0 %v1939
        %2073 = vmatpush1.msra.mxu0 %v1938
        %2074 = vmatprep.subr.mxu0 %v2033
        %2075 = vmatpush1.msra.mxu0 %v2032
        %2076 = vmatprep.subr.mxu0 %v2035
        %2077 = vmatpush1.msra.mxu0 %v2034
        %2078 = vmatprep.subr.mxu0 0.0
        %2079 = vmatpush1.msra.mxu0 0.0
        %2080 = vmatprep.subr.mxu0 0.0
        %2081 = vmatpush1.msra.mxu0 0.0
        %2082 = vmatprep.subr.mxu0 0.0
        %2083 = vmatpush1.msra.mxu0 0.0
        %2084 = vmatprep.subr.mxu0 0.0
        %2085 = vmatpush1.msra.mxu0 0.0
        %2086 = vmatprep.subr.mxu0 0.0
        %2087 = vmatpush1.msra.mxu0 0.0
        %2088 = vmatprep.subr.mxu0 0.0
        %2089 = vmatpush1.msra.mxu0 0.0
        %2090 = vmatprep.subr.mxu0 0.0
        %2091 = vmatpush1.msra.mxu0 0.0
        %2092 = vmatprep.subr.mxu0 0.0
        %2093 = vmatpush1.msra.mxu0 0.0
        %2094 = vmatprep.subr.mxu0 0.0
        %2095 = vmatpush1.msra.mxu0 0.0
        %2096 = vmatprep.subr.mxu0 0.0
        %2097 = vmatpush1.msra.mxu0 0.0
        %2098 = vmatprep.subr.mxu0 0.0
        %2099 = vmatpush1.msra.mxu0 0.0
        %2100 = vmatprep.subr.mxu0 0.0
        %2101 = vmatpush1.msra.mxu0 0.0
        %2102 = vmatprep.subr.mxu0 0.0
        %2103 = vmatpush1.msra.mxu0 0.0
        %2104 = vmatprep.subr.mxu0 0.0
        %2105 = vmatpush1.msra.mxu0 0.0
        %2106 = vmatprep.mubr.f32.mxu0 %v2037
        %2107 = vmatmul.mubr.f32.gmra.mrb[0].mxu0 %v1904
        %v2108 = vpop.f32.mrb[0].mxu0
        %v2109 = vadd.f32 0.0, %v2108
        %v2110 = vpop.f32.mrb[0].mxu0
        %v2111 = vadd.f32 0.0, %v2110
        %2112 = vmatprep.mubr.f32.mxu0 %v2040
        %2113 = vmatmul.mubr.f32.gmra.mrb[0].mxu0 %v1906
        %v2114 = vpop.f32.mrb[0].mxu0
        %v2115 = vadd.f32 0.0, %v2114
        %v2116 = vpop.f32.mrb[0].mxu0
        %v2117 = vadd.f32 0.0, %v2116
        %2118 = vdwg.mxu0
        %v2119 = vadd.f32 %v2109, %v2111
        %2120 = vadd.xlane.f32.xlu0 %v2119
        %v2121 = vpop.xlane.xlu0 %2120
        %v2122 = vadd.f32 %v2115, %v2117
        %2123 = vadd.xlane.f32.xlu0 %v2122
        %v2124 = vpop.xlane.xlu0 %2123
        %v2125 = vmul.f32 %v2121, %v934
        %v2126 = vmul.f32 %v2124, %v934
        %v2127 = vmul.f32 %v2109, %v2109
        %v2128 = vmul.f32 %v2111, %v2111
        %v2129 = vmul.f32 %v2115, %v2115
        %v2130 = vmul.f32 %v2117, %v2117
        %v2131 = vadd.f32 %v2127, %v2128
        %2132 = vadd.xlane.f32.xlu0 %v2131
        %v2133 = vpop.xlane.xlu0 %2132
        %v2134 = vadd.f32 %v2129, %v2130
        %2135 = vadd.xlane.f32.xlu0 %v2134
        %v2136 = vpop.xlane.xlu0 %2135
        %v2137 = vmul.f32 %v2133, %v934
        %v2138 = vmul.f32 %v2136, %v934
        %v2139 = vmul.f32 %v2125, %v2125
        %v2140 = vmul.f32 %v2126, %v2126
        %v2141 = vsub.f32 %v2137, %v2139
        %v2142 = vsub.f32 %v2138, %v2140
        %s2143 = scalar_lea.vmem %s4, 64
        %v2144 = vld [vmem:[%s2143] sm:$0xff]
        %v2145 = vld [vmem:[%s2143 + $0x8] sm:$0xff]
        %v2146 = vadd.f32 %v2141, 1e-05
        %v2147 = vadd.f32 %v2142, 1e-05
        %v2148 = vrsqrt.pop %v2146
        %v2149 = vrsqrt.pop %v2147
        %v2150 = vmul.f32 %v2144, %v2148
        %v2151 = vmul.f32 %v2145, %v2149
        %s2152 = scalar_lea.vmem %s5, 64
        %v2153 = vld [vmem:[%s2152] sm:$0xff]
        %v2154 = vld [vmem:[%s2152 + $0x8] sm:$0xff]
        %v2155 = vmul.f32 %v2125, %v2150
        %v2156 = vmul.f32 %v2126, %v2151
        %v2157 = vsub.f32 %v2153, %v2155
        %v2158 = vsub.f32 %v2154, %v2156
        %2160 = vset.pattern.permute.xlu0 0
        %2161 = vperm.xlu0 %2160, %v2150
        %v2162 = vpop.permute.xlu0 %2161
        %2165 = vset.pattern.permute.xlu0 0
        %2166 = vperm.xlu0 %2165, %v2151
        %v2167 = vpop.permute.xlu0 %2166
        %v2169 = vmul.f32 %v2109, %v2162
        %v2170 = vmul.f32 %v2111, %v2162
        %v2171 = vmul.f32 %v2115, %v2167
        %v2172 = vmul.f32 %v2117, %v2167
        %2174 = vset.pattern.permute.xlu0 0
        %2175 = vperm.xlu0 %2174, %v2157
        %v2176 = vpop.permute.xlu0 %2175
        %2179 = vset.pattern.permute.xlu0 0
        %2180 = vperm.xlu0 %2179, %v2158
        %v2181 = vpop.permute.xlu0 %2180
        %v2183 = vadd.f32 %v2169, %v2176
        %v2184 = vadd.f32 %v2170, %v2176
        %v2185 = vadd.f32 %v2171, %v2181
        %v2186 = vadd.f32 %v2172, %v2181
        %s2187 = sld [smem:[#allocation3 + $0x5]]
        %vm2188 = vcmp.ge.f32.partialorder %v2183, 0.0
        %vm2189 = vcmp.ge.f32.partialorder %v2184, 0.0
        %vm2190 = vcmp.ge.f32.partialorder %v2185, 0.0
        %vm2191 = vcmp.ge.f32.partialorder %v2186, 0.0
        %v2192 = vstv %s2187
        %v2193 = vmul.f32 %v2192, %v2183
        %v2194 = vmul.f32 %v2192, %v2184
        %v2195 = vmul.f32 %v2192, %v2185
        %v2196 = vmul.f32 %v2192, %v2186
        %v2197 = vsel %vm2188, %v2183, %v2193
        %v2198 = vsel %vm2189, %v2184, %v2194
        %v2199 = vsel %vm2190, %v2185, %v2195
        %v2200 = vsel %vm2191, %v2186, %v2196
        %s2201 = scalar_lea.vmem %s3, 160
        %v2202 = vld [vmem:[%s2201] sm:$0xff]
        %v2203 = vld [vmem:[%s2201 + $0x8] sm:$0xff]
        %v2204 = vld [vmem:[%s2201 + $0x10] sm:$0xff]
        %v2205 = vld [vmem:[%s2201 + $0x18] sm:$0xff]
        %2206 = vrot.lane.b32.xlu0 %v2197, 112
        %v2207 = vpop.permute.xlu0 %2206
        %2208 = vrot.lane.b32.xlu0 %v2199, 112
        %v2209 = vpop.permute.xlu0 %2208
        %2210 = vrot.lane.b32.xlu0 %v2198, 112
        %v2211 = vpop.permute.xlu0 %2210
        %2212 = vrot.lane.b32.xlu0 %v2200, 112
        %v2213 = vpop.permute.xlu0 %2212
        %v2214 = vsel %vm395, %v2207, %v2211
        %v2215 = vsel %vm395, %v2209, %v2213
        %v2216 = vsel %vm395, %v2211, %v2207
        %v2217 = vsel %vm395, %v2213, %v2209
        %2218 = vrot.lane.b32.xlu0 %v2197, 16
        %v2219 = vpop.permute.xlu0 %2218
        %2220 = vrot.lane.b32.xlu0 %v2199, 16
        %v2221 = vpop.permute.xlu0 %2220
        %2222 = vrot.lane.b32.xlu0 %v2198, 16
        %v2223 = vpop.permute.xlu0 %2222
        %2224 = vrot.lane.b32.xlu0 %v2200, 16
        %v2225 = vpop.permute.xlu0 %2224
        %v2226 = vsel %vm375, %v2219, %v2223
        %v2227 = vsel %vm375, %v2221, %v2225
        %v2228 = vsel %vm375, %v2223, %v2219
        %v2229 = vsel %vm375, %v2225, %v2221
        %v2230 = vsel %vm726, %v2214, %v2228
        %v2231 = vsel %vm727, %v2216, %v2226
        %v2232 = vsel %vm726, %v2215, %v2229
        %v2233 = vsel %vm727, %v2217, %v2227
        %v2234 = vsel %vm734, %v2228, %v2214
        %v2235 = vsel %vm735, %v2226, %v2216
        %v2236 = vsel %vm734, %v2229, %v2215
        %v2237 = vsel %vm735, %v2227, %v2217
        %2238 = vrot.lane.b32.xlu0 %v2230, 127
        %v2239 = vpop.permute.xlu0 %2238
        %2240 = vrot.lane.b32.xlu0 %v2232, 127
        %v2241 = vpop.permute.xlu0 %2240
        %2242 = vrot.lane.b32.xlu0 %v2231, 127
        %v2243 = vpop.permute.xlu0 %2242
        %2244 = vrot.lane.b32.xlu0 %v2233, 127
        %v2245 = vpop.permute.xlu0 %2244
        %v2246 = vsel %vm412, %v2239, %v2243
        %v2247 = vsel %vm412, %v2241, %v2245
        %v2248 = vsel %vm412, %v2243, %v2239
        %v2249 = vsel %vm412, %v2245, %v2241
        %2250 = vrot.lane.b32.xlu0 %v2230, 1
        %v2251 = vpop.permute.xlu0 %2250
        %2252 = vrot.lane.b32.xlu0 %v2232, 1
        %v2253 = vpop.permute.xlu0 %2252
        %2254 = vrot.lane.b32.xlu0 %v2231, 1
        %v2255 = vpop.permute.xlu0 %2254
        %2256 = vrot.lane.b32.xlu0 %v2233, 1
        %v2257 = vpop.permute.xlu0 %2256
        %v2258 = vsel %vm419, %v2251, %v2255
        %v2259 = vsel %vm419, %v2253, %v2257
        %v2260 = vsel %vm419, %v2255, %v2251
        %v2261 = vsel %vm419, %v2257, %v2253
        %v2262 = vsel %vm766, %v2246, %v2260
        %v2263 = vsel %vm767, %v2248, %v2258
        %v2264 = vsel %vm766, %v2247, %v2261
        %v2265 = vsel %vm767, %v2249, %v2259
        %v2266 = vsel %vm774, %v2260, %v2246
        %v2267 = vsel %vm775, %v2258, %v2248
        %v2268 = vsel %vm774, %v2261, %v2247
        %v2269 = vsel %vm775, %v2259, %v2249
        %2270 = vrot.lane.b32.xlu0 %v2197, 127
        %v2271 = vpop.permute.xlu0 %2270
        %2272 = vrot.lane.b32.xlu0 %v2199, 127
        %v2273 = vpop.permute.xlu0 %2272
        %2274 = vrot.lane.b32.xlu0 %v2198, 127
        %v2275 = vpop.permute.xlu0 %2274
        %2276 = vrot.lane.b32.xlu0 %v2200, 127
        %v2277 = vpop.permute.xlu0 %2276
        %v2278 = vsel %vm412, %v2271, %v2275
        %v2279 = vsel %vm412, %v2273, %v2277
        %v2280 = vsel %vm412, %v2275, %v2271
        %v2281 = vsel %vm412, %v2277, %v2273
        %2282 = vrot.lane.b32.xlu0 %v2197, 1
        %v2283 = vpop.permute.xlu0 %2282
        %2284 = vrot.lane.b32.xlu0 %v2199, 1
        %v2285 = vpop.permute.xlu0 %2284
        %2286 = vrot.lane.b32.xlu0 %v2198, 1
        %v2287 = vpop.permute.xlu0 %2286
        %2288 = vrot.lane.b32.xlu0 %v2200, 1
        %v2289 = vpop.permute.xlu0 %2288
        %v2290 = vsel %vm419, %v2283, %v2287
        %v2291 = vsel %vm419, %v2285, %v2289
        %v2292 = vsel %vm419, %v2287, %v2283
        %v2293 = vsel %vm419, %v2289, %v2285
        %v2294 = vsel %vm766, %v2278, %v2292
        %v2295 = vsel %vm767, %v2280, %v2290
        %v2296 = vsel %vm766, %v2279, %v2293
        %v2297 = vsel %vm767, %v2281, %v2291
        %v2298 = vsel %vm774, %v2292, %v2278
        %v2299 = vsel %vm775, %v2290, %v2280
        %v2300 = vsel %vm774, %v2293, %v2279
        %v2301 = vsel %vm775, %v2291, %v2281
        %2302 = vrot.lane.b32.xlu0 %v2234, 127
        %v2303 = vpop.permute.xlu0 %2302
        %2304 = vrot.lane.b32.xlu0 %v2236, 127
        %v2305 = vpop.permute.xlu0 %2304
        %2306 = vrot.lane.b32.xlu0 %v2235, 127
        %v2307 = vpop.permute.xlu0 %2306
        %2308 = vrot.lane.b32.xlu0 %v2237, 127
        %v2309 = vpop.permute.xlu0 %2308
        %v2310 = vsel %vm412, %v2303, %v2307
        %v2311 = vsel %vm412, %v2305, %v2309
        %v2312 = vsel %vm412, %v2307, %v2303
        %v2313 = vsel %vm412, %v2309, %v2305
        %2314 = vrot.lane.b32.xlu0 %v2234, 1
        %v2315 = vpop.permute.xlu0 %2314
        %2316 = vrot.lane.b32.xlu0 %v2236, 1
        %v2317 = vpop.permute.xlu0 %2316
        %2318 = vrot.lane.b32.xlu0 %v2235, 1
        %v2319 = vpop.permute.xlu0 %2318
        %2320 = vrot.lane.b32.xlu0 %v2237, 1
        %v2321 = vpop.permute.xlu0 %2320
        %v2322 = vsel %vm419, %v2315, %v2319
        %v2323 = vsel %vm419, %v2317, %v2321
        %v2324 = vsel %vm419, %v2319, %v2315
        %v2325 = vsel %vm419, %v2321, %v2317
        %v2326 = vsel %vm766, %v2310, %v2324
        %v2327 = vsel %vm767, %v2312, %v2322
        %v2328 = vsel %vm766, %v2311, %v2325
        %v2329 = vsel %vm767, %v2313, %v2323
        %v2330 = vsel %vm774, %v2324, %v2310
        %v2331 = vsel %vm775, %v2322, %v2312
        %v2332 = vsel %vm774, %v2325, %v2311
        %v2333 = vsel %vm775, %v2323, %v2313
        %v2335 = vsel %vm844, %v2203, 0
        %v2338 = vsel %vm844, %v2205, 0
        %2340 = vmatprep.subr.mxu0 %v2263
        %2341 = vmatpush1.msra.mxu0 %v2262
        %2342 = vmatprep.subr.mxu0 %v2265
        %2343 = vmatpush1.msra.mxu0 %v2264
        %2344 = vmatprep.subr.mxu0 %v2231
        %2345 = vmatpush1.msra.mxu0 %v2230
        %2346 = vmatprep.subr.mxu0 %v2233
        %2347 = vmatpush1.msra.mxu0 %v2232
        %2348 = vmatprep.subr.mxu0 %v2267
        %2349 = vmatpush1.msra.mxu0 %v2266
        %2350 = vmatprep.subr.mxu0 %v2269
        %2351 = vmatpush1.msra.mxu0 %v2268
        %2352 = vmatprep.subr.mxu0 %v2295
        %2353 = vmatpush1.msra.mxu0 %v2294
        %2354 = vmatprep.subr.mxu0 %v2297
        %2355 = vmatpush1.msra.mxu0 %v2296
        %2356 = vmatprep.subr.mxu0 %v2198
        %2357 = vmatpush1.msra.mxu0 %v2197
        %2358 = vmatprep.subr.mxu0 %v2200
        %2359 = vmatpush1.msra.mxu0 %v2199
        %2360 = vmatprep.subr.mxu0 %v2299
        %2361 = vmatpush1.msra.mxu0 %v2298
        %2362 = vmatprep.subr.mxu0 %v2301
        %2363 = vmatpush1.msra.mxu0 %v2300
        %2364 = vmatprep.subr.mxu0 %v2327
        %2365 = vmatpush1.msra.mxu0 %v2326
        %2366 = vmatprep.subr.mxu0 %v2329
        %2367 = vmatpush1.msra.mxu0 %v2328
        %2368 = vmatprep.subr.mxu0 %v2235
        %2369 = vmatpush1.msra.mxu0 %v2234
        %2370 = vmatprep.subr.mxu0 %v2237
        %2371 = vmatpush1.msra.mxu0 %v2236
        %2372 = vmatprep.subr.mxu0 %v2331
        %2373 = vmatpush1.msra.mxu0 %v2330
        %2374 = vmatprep.subr.mxu0 %v2333
        %2375 = vmatpush1.msra.mxu0 %v2332
        %2376 = vmatprep.subr.mxu0 0.0
        %2377 = vmatpush1.msra.mxu0 0.0
        %2378 = vmatprep.subr.mxu0 0.0
        %2379 = vmatpush1.msra.mxu0 0.0
        %2380 = vmatprep.subr.mxu0 0.0
        %2381 = vmatpush1.msra.mxu0 0.0
        %2382 = vmatprep.subr.mxu0 0.0
        %2383 = vmatpush1.msra.mxu0 0.0
        %2384 = vmatprep.subr.mxu0 0.0
        %2385 = vmatpush1.msra.mxu0 0.0
        %2386 = vmatprep.subr.mxu0 0.0
        %2387 = vmatpush1.msra.mxu0 0.0
        %2388 = vmatprep.subr.mxu0 0.0
        %2389 = vmatpush1.msra.mxu0 0.0
        %2390 = vmatprep.subr.mxu0 0.0
        %2391 = vmatpush1.msra.mxu0 0.0
        %2392 = vmatprep.subr.mxu0 0.0
        %2393 = vmatpush1.msra.mxu0 0.0
        %2394 = vmatprep.subr.mxu0 0.0
        %2395 = vmatpush1.msra.mxu0 0.0
        %2396 = vmatprep.subr.mxu0 0.0
        %2397 = vmatpush1.msra.mxu0 0.0
        %2398 = vmatprep.subr.mxu0 0.0
        %2399 = vmatpush1.msra.mxu0 0.0
        %2400 = vmatprep.subr.mxu0 0.0
        %2401 = vmatpush1.msra.mxu0 0.0
        %2402 = vmatprep.subr.mxu0 0.0
        %2403 = vmatpush1.msra.mxu0 0.0
        %2404 = vmatprep.mubr.f32.mxu0 %v2335
        %2405 = vmatmul.mubr.f32.gmra.mrb[0].mxu0 %v2202
        %v2406 = vpop.f32.mrb[0].mxu0
        %v2407 = vadd.f32 0.0, %v2406
        %v2408 = vpop.f32.mrb[0].mxu0
        %v2409 = vadd.f32 0.0, %v2408
        %2410 = vmatprep.mubr.f32.mxu0 %v2338
        %2411 = vmatmul.mubr.f32.gmra.mrb[0].mxu0 %v2204
        %v2412 = vpop.f32.mrb[0].mxu0
        %v2413 = vadd.f32 0.0, %v2412
        %v2414 = vpop.f32.mrb[0].mxu0
        %v2415 = vadd.f32 0.0, %v2414
        %2416 = vdwg.mxu0
        %v2417 = vadd.f32 %v2407, %v2409
        %2418 = vadd.xlane.f32.xlu0 %v2417
        %v2419 = vpop.xlane.xlu0 %2418
        %v2420 = vadd.f32 %v2413, %v2415
        %2421 = vadd.xlane.f32.xlu0 %v2420
        %v2422 = vpop.xlane.xlu0 %2421
        %v2423 = vmul.f32 %v2419, %v934
        %v2424 = vmul.f32 %v2422, %v934
        %v2425 = vmul.f32 %v2407, %v2407
        %v2426 = vmul.f32 %v2409, %v2409
        %v2427 = vmul.f32 %v2413, %v2413
        %v2428 = vmul.f32 %v2415, %v2415
        %v2429 = vadd.f32 %v2425, %v2426
        %2430 = vadd.xlane.f32.xlu0 %v2429
        %v2431 = vpop.xlane.xlu0 %2430
        %v2432 = vadd.f32 %v2427, %v2428
        %2433 = vadd.xlane.f32.xlu0 %v2432
        %v2434 = vpop.xlane.xlu0 %2433
        %v2435 = vmul.f32 %v2431, %v934
        %v2436 = vmul.f32 %v2434, %v934
        %v2437 = vmul.f32 %v2423, %v2423
        %v2438 = vmul.f32 %v2424, %v2424
        %v2439 = vsub.f32 %v2435, %v2437
        %v2440 = vsub.f32 %v2436, %v2438
        %s2441 = scalar_lea.vmem %s4, 80
        %v2442 = vld [vmem:[%s2441] sm:$0xff]
        %v2443 = vld [vmem:[%s2441 + $0x8] sm:$0xff]
        %v2444 = vadd.f32 %v2439, 1e-05
        %v2445 = vadd.f32 %v2440, 1e-05
        %v2446 = vrsqrt.pop %v2444
        %v2447 = vrsqrt.pop %v2445
        %v2448 = vmul.f32 %v2442, %v2446
        %v2449 = vmul.f32 %v2443, %v2447
        %s2450 = scalar_lea.vmem %s5, 80
        %v2451 = vld [vmem:[%s2450] sm:$0xff]
        %v2452 = vld [vmem:[%s2450 + $0x8] sm:$0xff]
        %v2453 = vmul.f32 %v2423, %v2448
        %v2454 = vmul.f32 %v2424, %v2449
        %v2455 = vsub.f32 %v2451, %v2453
        %v2456 = vsub.f32 %v2452, %v2454
        %2458 = vset.pattern.permute.xlu0 0
        %2459 = vperm.xlu0 %2458, %v2448
        %v2460 = vpop.permute.xlu0 %2459
        %2463 = vset.pattern.permute.xlu0 0
        %2464 = vperm.xlu0 %2463, %v2449
        %v2465 = vpop.permute.xlu0 %2464
        %v2467 = vmul.f32 %v2407, %v2460
        %v2468 = vmul.f32 %v2409, %v2460
        %v2469 = vmul.f32 %v2413, %v2465
        %v2470 = vmul.f32 %v2415, %v2465
        %2472 = vset.pattern.permute.xlu0 0
        %2473 = vperm.xlu0 %2472, %v2455
        %v2474 = vpop.permute.xlu0 %2473
        %2477 = vset.pattern.permute.xlu0 0
        %2478 = vperm.xlu0 %2477, %v2456
        %v2479 = vpop.permute.xlu0 %2478
        %v2481 = vadd.f32 %v2467, %v2474
        %v2482 = vadd.f32 %v2468, %v2474
        %v2483 = vadd.f32 %v2469, %v2479
        %v2484 = vadd.f32 %v2470, %v2479
        %s2485 = sld [smem:[#allocation3 + $0x6]]
        %vm2486 = vcmp.ge.f32.partialorder %v2481, 0.0
        %vm2487 = vcmp.ge.f32.partialorder %v2482, 0.0
        %vm2488 = vcmp.ge.f32.partialorder %v2483, 0.0
        %vm2489 = vcmp.ge.f32.partialorder %v2484, 0.0
        %v2490 = vstv %s2485
        %v2491 = vmul.f32 %v2490, %v2481
        %v2492 = vmul.f32 %v2490, %v2482
        %v2493 = vmul.f32 %v2490, %v2483
        %v2494 = vmul.f32 %v2490, %v2484
        %v2495 = vsel %vm2486, %v2481, %v2491
        %v2496 = vsel %vm2487, %v2482, %v2492
        %v2497 = vsel %vm2488, %v2483, %v2493
        %v2498 = vsel %vm2489, %v2484, %v2494
        %v2499 = vld [vmem:[%s6] sm:$0x3]
        %2500 = vrot.lane.b32.xlu0 %v2495, 112
        %v2501 = vpop.permute.xlu0 %2500
        %2502 = vrot.lane.b32.xlu0 %v2497, 112
        %v2503 = vpop.permute.xlu0 %2502
        %2504 = vrot.lane.b32.xlu0 %v2496, 112
        %v2505 = vpop.permute.xlu0 %2504
        %2506 = vrot.lane.b32.xlu0 %v2498, 112
        %v2507 = vpop.permute.xlu0 %2506
        %v2508 = vsel %vm395, %v2501, %v2505
        %v2509 = vsel %vm395, %v2503, %v2507
        %v2510 = vsel %vm395, %v2505, %v2501
        %v2511 = vsel %vm395, %v2507, %v2503
        %2512 = vrot.lane.b32.xlu0 %v2495, 16
        %v2513 = vpop.permute.xlu0 %2512
        %2514 = vrot.lane.b32.xlu0 %v2497, 16
        %v2515 = vpop.permute.xlu0 %2514
        %2516 = vrot.lane.b32.xlu0 %v2496, 16
        %v2517 = vpop.permute.xlu0 %2516
        %2518 = vrot.lane.b32.xlu0 %v2498, 16
        %v2519 = vpop.permute.xlu0 %2518
        %v2520 = vsel %vm375, %v2513, %v2517
        %v2521 = vsel %vm375, %v2515, %v2519
        %v2522 = vsel %vm375, %v2517, %v2513
        %v2523 = vsel %vm375, %v2519, %v2515
        %v2524 = vsel %vm726, %v2508, %v2522
        %v2525 = vsel %vm727, %v2510, %v2520
        %v2526 = vsel %vm726, %v2509, %v2523
        %v2527 = vsel %vm727, %v2511, %v2521
        %v2528 = vsel %vm734, %v2522, %v2508
        %v2529 = vsel %vm735, %v2520, %v2510
        %v2530 = vsel %vm734, %v2523, %v2509
        %v2531 = vsel %vm735, %v2521, %v2511
        %2532 = vrot.lane.b32.xlu0 %v2524, 127
        %v2533 = vpop.permute.xlu0 %2532
        %2534 = vrot.lane.b32.xlu0 %v2526, 127
        %v2535 = vpop.permute.xlu0 %2534
        %2536 = vrot.lane.b32.xlu0 %v2525, 127
        %v2537 = vpop.permute.xlu0 %2536
        %2538 = vrot.lane.b32.xlu0 %v2527, 127
        %v2539 = vpop.permute.xlu0 %2538
        %v2540 = vsel %vm412, %v2533, %v2537
        %v2541 = vsel %vm412, %v2535, %v2539
        %v2542 = vsel %vm412, %v2537, %v2533
        %v2543 = vsel %vm412, %v2539, %v2535
        %2544 = vrot.lane.b32.xlu0 %v2524, 1
        %v2545 = vpop.permute.xlu0 %2544
        %2546 = vrot.lane.b32.xlu0 %v2526, 1
        %v2547 = vpop.permute.xlu0 %2546
        %2548 = vrot.lane.b32.xlu0 %v2525, 1
        %v2549 = vpop.permute.xlu0 %2548
        %2550 = vrot.lane.b32.xlu0 %v2527, 1
        %v2551 = vpop.permute.xlu0 %2550
        %v2552 = vsel %vm419, %v2545, %v2549
        %v2553 = vsel %vm419, %v2547, %v2551
        %v2554 = vsel %vm419, %v2549, %v2545
        %v2555 = vsel %vm419, %v2551, %v2547
        %v2556 = vsel %vm766, %v2540, %v2554
        %v2557 = vsel %vm767, %v2542, %v2552
        %v2558 = vsel %vm766, %v2541, %v2555
        %v2559 = vsel %vm767, %v2543, %v2553
        %v2560 = vsel %vm774, %v2554, %v2540
        %v2561 = vsel %vm775, %v2552, %v2542
        %v2562 = vsel %vm774, %v2555, %v2541
        %v2563 = vsel %vm775, %v2553, %v2543
        %2564 = vrot.lane.b32.xlu0 %v2495, 127
        %v2565 = vpop.permute.xlu0 %2564
        %2566 = vrot.lane.b32.xlu0 %v2497, 127
        %v2567 = vpop.permute.xlu0 %2566
        %2568 = vrot.lane.b32.xlu0 %v2496, 127
        %v2569 = vpop.permute.xlu0 %2568
        %2570 = vrot.lane.b32.xlu0 %v2498, 127
        %v2571 = vpop.permute.xlu0 %2570
        %v2572 = vsel %vm412, %v2565, %v2569
        %v2573 = vsel %vm412, %v2567, %v2571
        %v2574 = vsel %vm412, %v2569, %v2565
        %v2575 = vsel %vm412, %v2571, %v2567
        %2576 = vrot.lane.b32.xlu0 %v2495, 1
        %v2577 = vpop.permute.xlu0 %2576
        %2578 = vrot.lane.b32.xlu0 %v2497, 1
        %v2579 = vpop.permute.xlu0 %2578
        %2580 = vrot.lane.b32.xlu0 %v2496, 1
        %v2581 = vpop.permute.xlu0 %2580
        %2582 = vrot.lane.b32.xlu0 %v2498, 1
        %v2583 = vpop.permute.xlu0 %2582
        %v2584 = vsel %vm419, %v2577, %v2581
        %v2585 = vsel %vm419, %v2579, %v2583
        %v2586 = vsel %vm419, %v2581, %v2577
        %v2587 = vsel %vm419, %v2583, %v2579
        %v2588 = vsel %vm766, %v2572, %v2586
        %v2589 = vsel %vm767, %v2574, %v2584
        %v2590 = vsel %vm766, %v2573, %v2587
        %v2591 = vsel %vm767, %v2575, %v2585
        %v2592 = vsel %vm774, %v2586, %v2572
        %v2593 = vsel %vm775, %v2584, %v2574
        %v2594 = vsel %vm774, %v2587, %v2573
        %v2595 = vsel %vm775, %v2585, %v2575
        %2596 = vrot.lane.b32.xlu0 %v2528, 127
        %v2597 = vpop.permute.xlu0 %2596
        %2598 = vrot.lane.b32.xlu0 %v2530, 127
        %v2599 = vpop.permute.xlu0 %2598
        %2600 = vrot.lane.b32.xlu0 %v2529, 127
        %v2601 = vpop.permute.xlu0 %2600
        %2602 = vrot.lane.b32.xlu0 %v2531, 127
        %v2603 = vpop.permute.xlu0 %2602
        %v2604 = vsel %vm412, %v2597, %v2601
        %v2605 = vsel %vm412, %v2599, %v2603
        %v2606 = vsel %vm412, %v2601, %v2597
        %v2607 = vsel %vm412, %v2603, %v2599
        %2608 = vrot.lane.b32.xlu0 %v2528, 1
        %v2609 = vpop.permute.xlu0 %2608
        %2610 = vrot.lane.b32.xlu0 %v2530, 1
        %v2611 = vpop.permute.xlu0 %2610
        %2612 = vrot.lane.b32.xlu0 %v2529, 1
        %v2613 = vpop.permute.xlu0 %2612
        %2614 = vrot.lane.b32.xlu0 %v2531, 1
        %v2615 = vpop.permute.xlu0 %2614
        %v2616 = vsel %vm419, %v2609, %v2613
        %v2617 = vsel %vm419, %v2611, %v2615
        %v2618 = vsel %vm419, %v2613, %v2609
        %v2619 = vsel %vm419, %v2615, %v2611
        %v2620 = vsel %vm766, %v2604, %v2618
        %v2621 = vsel %vm767, %v2606, %v2616
        %v2622 = vsel %vm766, %v2605, %v2619
        %v2623 = vsel %vm767, %v2607, %v2617
        %v2624 = vsel %vm774, %v2618, %v2604
        %v2625 = vsel %vm775, %v2616, %v2606
        %v2626 = vsel %vm774, %v2619, %v2605
        %v2627 = vsel %vm775, %v2617, %v2607
        %v2628 = vld [vmem:[#allocation2] sm:$0x1]
        %2630 = vset.pattern.permute.xlu0 0
        %2631 = vperm.xlu0 %2630, %v2628
        %v2632 = vpop.permute.xlu0 %2631
        %v2634 = vlaneseq
        %v2635 = vshrl.u32 %v2634, 7
        %v2636 = vsub.s32 0, %v2635
        %v2637 = vrot.slane %v2632, %v2636
        %v2639 = vlaneseq
        %v2640 = vshrl.u32 %v2639, 7
        %v2641 = vsub.s32 0, %v2640
        %v2642 = vrot.slane %v2499, %v2641
        %v2643 = vlaneseq
        %v2644 = vshrl.u32 %v2643, 7
        %v2645 = vsub.s32 1, %v2644
        %v2646 = vrot.slane %v2499, %v2645
        %v2648 = vsel %vm844, %v2646, 0
        %2650 = vmatprep.subr.mxu0 %v2557
        %2651 = vmatpush1.msra.mxu0 %v2556
        %2652 = vmatprep.subr.mxu0 %v2559
        %2653 = vmatpush1.msra.mxu0 %v2558
        %2654 = vmatprep.subr.mxu0 %v2525
        %2655 = vmatpush1.msra.mxu0 %v2524
        %2656 = vmatprep.subr.mxu0 %v2527
        %2657 = vmatpush1.msra.mxu0 %v2526
        %2658 = vmatprep.subr.mxu0 %v2561
        %2659 = vmatpush1.msra.mxu0 %v2560
        %2660 = vmatprep.subr.mxu0 %v2563
        %2661 = vmatpush1.msra.mxu0 %v2562
        %2662 = vmatprep.subr.mxu0 %v2589
        %2663 = vmatpush1.msra.mxu0 %v2588
        %2664 = vmatprep.subr.mxu0 %v2591
        %2665 = vmatpush1.msra.mxu0 %v2590
        %2666 = vmatprep.subr.mxu0 %v2496
        %2667 = vmatpush1.msra.mxu0 %v2495
        %2668 = vmatprep.subr.mxu0 %v2498
        %2669 = vmatpush1.msra.mxu0 %v2497
        %2670 = vmatprep.subr.mxu0 %v2593
        %2671 = vmatpush1.msra.mxu0 %v2592
        %2672 = vmatprep.subr.mxu0 %v2595
        %2673 = vmatpush1.msra.mxu0 %v2594
        %2674 = vmatprep.subr.mxu0 %v2621
        %2675 = vmatpush1.msra.mxu0 %v2620
        %2676 = vmatprep.subr.mxu0 %v2623
        %2677 = vmatpush1.msra.mxu0 %v2622
        %2678 = vmatprep.subr.mxu0 %v2529
        %2679 = vmatpush1.msra.mxu0 %v2528
        %2680 = vmatprep.subr.mxu0 %v2531
        %2681 = vmatpush1.msra.mxu0 %v2530
        %2682 = vmatprep.subr.mxu0 %v2625
        %2683 = vmatpush1.msra.mxu0 %v2624
        %2684 = vmatprep.subr.mxu0 %v2627
        %2685 = vmatpush1.msra.mxu0 %v2626
        %2686 = vmatprep.subr.mxu0 0.0
        %2687 = vmatpush1.msra.mxu0 0.0
        %2688 = vmatprep.subr.mxu0 0.0
        %2689 = vmatpush1.msra.mxu0 0.0
        %2690 = vmatprep.subr.mxu0 0.0
        %2691 = vmatpush1.msra.mxu0 0.0
        %2692 = vmatprep.subr.mxu0 0.0
        %2693 = vmatpush1.msra.mxu0 0.0
        %2694 = vmatprep.subr.mxu0 0.0
        %2695 = vmatpush1.msra.mxu0 0.0
        %2696 = vmatprep.subr.mxu0 0.0
        %2697 = vmatpush1.msra.mxu0 0.0
        %2698 = vmatprep.subr.mxu0 0.0
        %2699 = vmatpush1.msra.mxu0 0.0
        %2700 = vmatprep.subr.mxu0 0.0
        %2701 = vmatpush1.msra.mxu0 0.0
        %2702 = vmatprep.subr.mxu0 0.0
        %2703 = vmatpush1.msra.mxu0 0.0
        %2704 = vmatprep.subr.mxu0 0.0
        %2705 = vmatpush1.msra.mxu0 0.0
        %2706 = vmatprep.subr.mxu0 0.0
        %2707 = vmatpush1.msra.mxu0 0.0
        %2708 = vmatprep.subr.mxu0 0.0
        %2709 = vmatpush1.msra.mxu0 0.0
        %2710 = vmatprep.subr.mxu0 0.0
        %2711 = vmatpush1.msra.mxu0 0.0
        %2712 = vmatprep.subr.mxu0 0.0
        %2713 = vmatpush1.msra.mxu0 0.0
        %2714 = vmatprep.mubr.f32.mxu0 %v2648
        %2715 = vmatmul.mubr.f32.gmra.mrb[0].mxu0 %v2642
        %v2716 = vpop.f32.mrb[0].mxu0
        %v2717 = vadd.f32 %v2637, %v2716
        %v2718 = vpop.f32.mrb[0].mxu0
        %v2719 = vadd.f32 %v2637, %v2718
        %2720 = vdwg.mxu0
        %v2721 = vadd.f32 %v2717, %v384
        %v2722 = vadd.f32 %v2719, %v388
        %v2723 = vtanh.pop %v2721
        %v2724 = vtanh.pop %v2722
        %v2727 = vcombine.low %v2723, %v2724
        %v2729 = vunpack.c.l.s4 1966171168
        %v2730 = vunpack.c.0.s8 %v2729
        %v2731 = vlaneseq
        %v2732 = vshrl.u32 %v2731, 7
        %v2733 = vsub.s32 %v2730, %v2732
        %v2734 = vrot.slane %v2727, %v2733
        %v2736 = vunpack.c.l.s4 1966171168
        %v2737 = vunpack.c.0.s8 %v2736
        %v2738 = vlaneseq
        %v2739 = vshrl.u32 %v2738, 7
        %v2740 = vsub.s32 %v2737, %v2739
        %v2741 = vrot.slane %v2734, %v2740
        %v2743 = vlaneseq
        %vm2744 = vcmp.ge.s32.totalorder %v2743, 0
        %vm2745 = vcmp.lt.s32.totalorder %v2743, 256
        %vm2746 = vmand %vm2744, %vm2745
        %2747 = vst.msk [vmem:[%s339] sm:$0x3] %vm2746, %v2741
        %s2748 = sand.u32 %s228, 1
        %s2749 = scalar_lea.sflag [#allocation4], %s2748
        %s2750 = sand.u32 %s228, 1
        %s2751 = smul.addr %s2750, 2
        %s2752 = scalar_lea.vmem [#allocation6], %s2751
        // Predicated region
        $region61: #{tpu_custom_call.1} parent=55 // pred_check
          %p2753 = pneg %p238
        $region62: #{tpu_custom_call.1} parent=55 // pred_check_branch
          %2755 = sbr.rel (%p2753) target = $region64
        $region63: #{tpu_custom_call.1} parent=55 // pred_region
          %s2757 = ssub.s32 32, 32
          %2758 = vsyncadd %s2749, %s2757
          %s2759 = smul.addr %s26, 2
          %s2760 = smul.addr %s2759, 16
          %s2761 = scalar_lea.hbm %s9, %s2760
          %s2763 = sshll.u32 %s2752, 4
          %s2764 = int_to_ptr.vmem [resolvable:$true] %s2763
          %2766 = dma.vmem_to_hbm [thread:$0]  %s2764, 32, %s2761, %s2749
        $region64: #{tpu_custom_call.1} parent=55 // pred_fallthru
          _
      $region56: #{tpu_custom_call.1} parent=5 // pred_fallthru
        _
      %p2767 = scmp.le.s32.totalorder 2, %s21
      // Predicated region
      $region65: #{tpu_custom_call.1} parent=5 // pred_check
        %p2768 = pneg %p2767
      $region66: #{tpu_custom_call.1} parent=5 // pred_check_branch
        %2770 = sbr.rel (%p2768) target = $region68
      $region67: #{tpu_custom_call.1} parent=5 // pred_region
        %s2771 = ssub.s32 %s21, 2
        // Predicated region
        $region69: #{tpu_custom_call.1} parent=67 // pred_check
          %p2772 = pneg %p244
        $region70: #{tpu_custom_call.1} parent=67 // pred_check_branch
          %2774 = sbr.rel (%p2772) target = $region72
        $region71: #{tpu_custom_call.1} parent=67 // pred_region
          %s2775 = sand.u32 %s229, 1
          %s2776 = scalar_lea.sflag [#allocation4], %s2775
          %s2777 = sand.u32 %s229, 1
          %s2778 = smul.addr %s2777, 2
          %s2779 = scalar_lea.vmem [#allocation6], %s2778
          %2780 = dma.done %s2776, 32
        $region72: #{tpu_custom_call.1} parent=67 // pred_fallthru
          _
      $region68: #{tpu_custom_call.1} parent=5 // pred_fallthru
        _
    $region6: #{tpu_custom_call.1} parent=1 // loop_footer
      %s25 = sadd.s32 1, %s21
    $region7: #{tpu_custom_call.1} parent=1 // loop_footer_branch
      %20 = sbr.rel target = $region3
    $region8: #{tpu_custom_call.1} parent=1 // loop_exit
      _
    %2781 = vsyncpa [#allocation4], 1
    %s2782 = scalar_lea.sflag [#allocation4], 1
    %2783 = vsyncpa %s2782, 1
    %2784 = vsyncpa [#allocation5], 1
    %s2785 = scalar_lea.sflag [#allocation5], 1
    %2786 = vsyncpa %s2785, 1

</llo_original>
